<compile_context>
chip_gen: v7x
topology: tpu7x:2x2x1
jax: 0.10.0
libtpu: 0.0.40
codegen_flags: <defaults>
</compile_context>

<pallas_src>
import jax
import jax.numpy as jnp
from jax.experimental import pallas as pl
from jax.experimental.pallas import tpu as pltpu

KS = 7            # spatial-attention conv kernel size
PAD = KS // 2     # = 3, "same" padding


# ----------------------------------------------------------------------------
# Kernel
# ----------------------------------------------------------------------------
def _cbam_kernel(x_ref, w1_ref, w2_ref, colmat_ref, o_ref, feat_ref):
    # x_ref     : (Bt, H, W, C)        VMEM  input block (native dtype, NHWC)
    # w1_ref    : (C, Cr)              VMEM  channel-attention fc1 (1x1 conv)
    # w2_ref    : (Cr, C)              VMEM  channel-attention fc2 (1x1 conv)
    # colmat_ref: (KS*2*W, W)          VMEM  fused banded 7x7-conv matrix
    # o_ref     : (Bt, H, W, C)        VMEM  output block (native dtype)
    # feat_ref  : (Bt, H+2*PAD, 2*W)   VMEM  scratch: H-padded (avg|max) map
    Bt, H, W, C = x_ref.shape
    HW = H * W
    mm_dt = w1_ref.dtype                      # bf16 when I/O is bf16, else f32

    x = x_ref[...].astype(jnp.float32)        # (Bt, H, W, C)
    x3 = x.reshape(Bt, HW, C)

    # ---------------- Channel attention ----------------
    avg_c = jnp.mean(x3, axis=1)              # (Bt, C)  sublane reduce (XLU)
    max_c = jnp.max(x3, axis=1)               # (Bt, C)

    # Shared MLP as two MXU matmuls over the stacked (avg, max) statistics.
    stats = jnp.concatenate([avg_c, max_c], axis=0).astype(mm_dt)     # (2Bt, C)
    h = jnp.maximum(
        jnp.dot(stats, w1_ref[...], preferred_element_type=jnp.float32), 0.0)
    f = jnp.dot(h.astype(mm_dt), w2_ref[...],
                preferred_element_type=jnp.float32)                   # (2Bt, C)
    ca = jax.nn.sigmoid(f[:Bt] + f[Bt:])                              # (Bt, C)

    x1 = x * ca[:, None, None, :]                                     # (Bt, H, W, C)

    # ---------------- Spatial attention ----------------
    avg_s = jnp.mean(x1, axis=-1)                                     # (Bt, H, W)
    max_s = jnp.max(x1, axis=-1)                                      # (Bt, H, W)

    # Stage the 2-channel feature map into VMEM scratch, zero-padded along H
    # only ('same' W padding is baked into colmat).  Row-tap windows are read
    # back with static ref slices, avoiding value-slice relayout copies.
    feat_ref[...] = jnp.zeros_like(feat_ref)
    feat_ref[:, pl.ds(PAD, H), :] = jnp.concatenate([avg_s, max_s], axis=-1)

    windows = [
        feat_ref[:, pl.ds(ki, H), :].reshape(Bt * H, 2 * W) for ki in range(KS)
    ]
    # Single fused conv matmul: K = KS*2*W (all 7 row taps, 2 channels and the
    # 7 column taps are folded into the precomputed banded matrix).
    big = jnp.concatenate(windows, axis=-1).astype(mm_dt)             # (Bt*H, KS*2W)
    conv = jnp.dot(big, colmat_ref[...],
                   preferred_element_type=jnp.float32)                # (Bt*H, W)

    sa = jax.nn.sigmoid(conv).reshape(Bt, H, W)
    o_ref[...] = (x1 * sa[:, :, :, None]).astype(o_ref.dtype)


# ----------------------------------------------------------------------------
# Wrapper helpers
# ----------------------------------------------------------------------------
def _tpu_vmem_and_cores():
    """(per-core VMEM bytes, #TensorCores) with safe fallbacks."""
    vmem = 128 << 20
    try:
        vmem = int(getattr(pltpu.get_tpu_info(), "vmem_capacity_bytes", vmem))
    except Exception:
        pass
    # v5e/v6e: 128 MiB VMEM, 1 TC per chip; v7x: 64 MiB per TC, 2 TCs.
    cores = 2 if vmem <= (64 << 20) else 1
    return vmem, cores


def _pick_block_batch(B, H, W, C, target_bytes, num_cores):
    """Largest divisor of B whose (Bt, H, W, C) f32 block stays under
    target_bytes.  The >= num_cores grid-step constraint only applies on
    multi-TensorCore parts (v7x); on single-TC parts the grid is a serial
    loop and extra steps are pure overhead."""
    per_img = H * W * C * 4
    bt = 1
    for d in range(1, B + 1):
        if B % d:
            continue
        if d > 1 and d * per_img > target_bytes:
            continue
        if num_cores > 1 and B >= num_cores and (B // d) < num_cores:
            continue
        bt = d
    return bt


def _build_colmat(wsp, W):
    """wsp: (2, KS, KS) conv weights -> (KS*2*W, W) fused banded matrix with
    the 'same' W padding baked in, so the 2-channel 7x7 conv becomes a single
    matmul:  out = concat_ki(row_window_ki) @ colmat,  where
    row_window_ki[.., ch*W + w_in] = feat_ch[row + ki - PAD, w_in]."""
    w_in = jnp.arange(W)[:, None]
    w_out = jnp.arange(W)[None, :]
    kj = w_in - w_out + PAD                                   # (W, W)
    valid = jnp.logical_and(kj >= 0, kj < KS)
    kj_c = jnp.clip(kj, 0, KS - 1)
    taps = wsp.astype(jnp.float32)[:, :, kj_c]                # (2, KS, W, W)
    taps = jnp.where(valid[None, None], taps, 0.0)
    taps = jnp.transpose(taps, (1, 0, 2, 3))                  # (KS, 2, W, W)
    return taps.reshape(KS * 2 * W, W)


# ----------------------------------------------------------------------------
# Public entry points
# ----------------------------------------------------------------------------
def cbam_pallas_nhwc(x_nhwc, w1, w2, wsp):
    """CBAM forward on NHWC input (preferred entry point — no transposes,
    native-dtype I/O).  x_nhwc: (B, H, W, C); w1: (C, Cr); w2: (Cr, C);
    wsp: (2, KS, KS)."""
    B, H, W, C = x_nhwc.shape
    Cr = w1.shape[1]

    vmem_cap, num_tc = _tpu_vmem_and_cores()
    small_vmem = vmem_cap <= (64 << 20)
    target_bytes = (3 << 19) if small_vmem else (3 << 20)     # 1.5 MiB / 3 MiB
    Bt = _pick_block_batch(B, H, W, C, target_bytes, num_tc)

    # bf16 activations stay bf16 end-to-end; matmul operands follow the I/O
    # dtype (f32 retained for exact parity with the f32 PyTorch module).
    mm_dt = jnp.bfloat16 if x_nhwc.dtype == jnp.bfloat16 else jnp.float32
    colmat = _build_colmat(wsp, W).astype(mm_dt)              # (KS*2*W, W)
    w1c = w1.astype(mm_dt)
    w2c = w2.astype(mm_dt)

    blk_f32 = Bt * H * W * C * 4
    blk_io = Bt * H * W * C * x_nhwc.dtype.itemsize
    # In-kernel f32 temporaries (x, x1, result, fused window) + double-buffered
    # in/out blocks in the I/O dtype, with margin; cap per generation.
    need = 5 * blk_f32 + 4 * blk_io + (4 << 20)
    cap = (32 << 20) if small_vmem else (64 << 20)
    vmem_bytes = int(min(max(need, 16 << 20), cap))

    # TODO(synk): add an H-tile grid axis (3-row halo for the 7x7 conv, 2-pass
    # channel attention) so very large H*W*C images fit v7x's 64 MiB VMEM.
    # TODO(synk): for C < 128, fold (W, C) into one lane dimension on the
    # load / ca-scale / sa-scale / store path to avoid lane-sparse masked vst.

    return pl.pallas_call(
        _cbam_kernel,
        out_shape=jax.ShapeDtypeStruct((B, H, W, C), x_nhwc.dtype),
        grid_spec=pltpu.PrefetchScalarGridSpec(
            num_scalar_prefetch=0,
            grid=(B // Bt,),
            in_specs=[
                pl.BlockSpec((Bt, H, W, C), lambda b: (b, 0, 0, 0)),
                pl.BlockSpec((C, Cr), lambda b: (0, 0)),
                pl.BlockSpec((Cr, C), lambda b: (0, 0)),
                pl.BlockSpec((KS * 2 * W, W), lambda b: (0, 0)),
            ],
            out_specs=pl.BlockSpec((Bt, H, W, C), lambda b: (b, 0, 0, 0)),
            scratch_shapes=[pltpu.VMEM((Bt, H + 2 * PAD, 2 * W), jnp.float32)],
        ),
        compiler_params=pltpu.CompilerParams(
            dimension_semantics=("parallel",),
            vmem_limit_bytes=vmem_bytes,
        ),
    )(x_nhwc, w1c, w2c, colmat)


def cbam_pallas(x_nchw, w1, w2, wsp):
    """NCHW compatibility wrapper (matches the PyTorch module convention).
    Prefer cbam_pallas_nhwc in channels-last pipelines to avoid two extra HBM
    transposes around a memory-bound op."""
    x = jnp.transpose(x_nchw, (0, 2, 3, 1))
    y = cbam_pallas_nhwc(x, w1, w2, wsp)
    return jnp.transpose(y, (0, 3, 1, 2))


# ----------------------------------------------------------------------------
# Pure-JAX reference (mirrors the PyTorch module, NCHW)
# ----------------------------------------------------------------------------
def cbam_reference(x_nchw, w1, w2, wsp):
    hp = jax.lax.Precision.HIGHEST
    avg = jnp.mean(x_nchw, axis=(2, 3))            # (B, C)
    mx = jnp.max(x_nchw, axis=(2, 3))              # (B, C)

    def fc(v):
        h = jnp.maximum(jnp.dot(v, w1, precision=hp), 0.0)
        return jnp.dot(h, w2, precision=hp)

    ca = jax.nn.sigmoid(fc(avg) + fc(mx))          # (B, C)
    x1 = x_nchw * ca[:, :, None, None]

    avg_s = jnp.mean(x1, axis=1, keepdims=True)
    max_s = jnp.max(x1, axis=1, keepdims=True)
    feat = jnp.concatenate([avg_s, max_s], axis=1)            # (B, 2, H, W)
    conv = jax.lax.conv_general_dilated(
        feat, wsp.reshape(1, 2, KS, KS), window_strides=(1, 1), padding="SAME",
        dimension_numbers=("NCHW", "OIHW", "NCHW"), precision=hp)
    sa = jax.nn.sigmoid(conv)                                  # (B, 1, H, W)
    return x1 * sa


if __name__ == "__main__":
    # Small shapes consistent with the module: reduction=16 -> C=32, Cr=2.
    B, C, H, W = 4, 32, 16, 16
    reduction = 16
    Cr = C // reduction

    key = jax.random.PRNGKey(0)
    kx, k1, k2, k3 = jax.random.split(key, 4)

    x = jax.random.normal(kx, (B, C, H, W), dtype=jnp.float32)
    w1 = jax.random.normal(k1, (C, Cr), dtype=jnp.float32) * 0.2       # fc1
    w2 = jax.random.normal(k2, (Cr, C), dtype=jnp.float32) * 0.2       # fc2
    wsp = jax.random.normal(k3, (2, KS, KS), dtype=jnp.float32) * 0.1  # 7x7 conv

    # f32 path: exact parity with the PyTorch module semantics.
    out = jax.block_until_ready(jax.jit(cbam_pallas)(x, w1, w2, wsp))
    ref = cbam_reference(x, w1, w2, wsp)
    assert out.shape == (B, C, H, W)
    err = float(jnp.max(jnp.abs(out - ref)))
    # Tolerance covers MXU accumulation-order differences vs. the XLA conv.
    assert err < 2e-3, err

    # bf16 path: native bf16 I/O + bf16 MXU operands (memory-bound fast path).
    x_bf = jnp.transpose(x, (0, 2, 3, 1)).astype(jnp.bfloat16)
    out_bf = jax.block_until_ready(jax.jit(cbam_pallas_nhwc)(x_bf, w1, w2, wsp))
    assert out_bf.shape == (B, H, W, C)
    assert out_bf.dtype == jnp.bfloat16
    err_bf = float(jnp.max(jnp.abs(out_bf.astype(jnp.float32)
                                   - jnp.transpose(ref, (0, 2, 3, 1)))))
    assert err_bf < 2.5e-1, err_bf   # loose: bf16 input/operand rounding

    print("KERNEL_OK")
</pallas_src>

<mosaic_0001>
module attributes {stable_mosaic.version = 11 : i64} {
  func.func @_cbam_kernel(%arg0: i32, %arg1: memref<4x16x16x32xf32, #tpu.memory_space<vmem>>, %arg2: memref<32x2xf32, #tpu.memory_space<vmem>>, %arg3: memref<2x32xf32, #tpu.memory_space<vmem>>, %arg4: memref<224x16xf32, #tpu.memory_space<vmem>>, %arg5: memref<4x16x16x32xf32, #tpu.memory_space<vmem>>, %arg6: memref<4x22x32xf32, #tpu.memory_space<vmem>>) attributes {dimension_semantics = [#tpu.dimension_semantics<parallel>], iteration_bounds = array<i64: 1>, scalar_prefetch = 0 : i64, scratch_operands = 1 : i64, tpu.core_type = #tpu.core_type<tc>, window_params = [{transform_indices = @transform_0, window_bounds = array<i64: 4, 16, 16, 32>}, {pipeline_mode = #tpu.pipeline_mode<synchronous>, transform_indices = @transform_1, window_bounds = array<i64: 32, 2>}, {pipeline_mode = #tpu.pipeline_mode<synchronous>, transform_indices = @transform_2, window_bounds = array<i64: 2, 32>}, {pipeline_mode = #tpu.pipeline_mode<synchronous>, transform_indices = @transform_3, window_bounds = array<i64: 224, 16>}, {transform_indices = @transform_4, window_bounds = array<i64: 4, 16, 16, 32>}]} {
    %c0 = arith.constant 0 : index
    %c0_0 = arith.constant 0 : index
    %c0_1 = arith.constant 0 : index
    %c0_2 = arith.constant 0 : index
    %0 = vector.load %arg1[%c0, %c0_0, %c0_1, %c0_2] : memref<4x16x16x32xf32, #tpu.memory_space<vmem>>, vector<4x16x16x32xf32>
    %1 = vector.shape_cast %0 : vector<4x16x16x32xf32> to vector<4x256x32xf32>
    %cst = arith.constant dense<0.000000e+00> : vector<4x32xf32>
    %2 = vector.multi_reduction <add>, %1, %cst [1] : vector<4x256x32xf32> to vector<4x32xf32>
    %cst_3 = arith.constant 2.560000e+02 : f32
    %3 = vector.broadcast %cst_3 : f32 to vector<4x32xf32>
    %4 = arith.divf %2, %3 : vector<4x32xf32>
    %cst_4 = arith.constant dense<0xFF800000> : vector<4x32xf32>
    %5 = vector.multi_reduction <maximumf>, %1, %cst_4 [1] : vector<4x256x32xf32> to vector<4x32xf32>
    %6 = tpu.concatenate %4, %5 in 0 : vector<4x32xf32>, vector<4x32xf32> -> vector<8x32xf32>
    %c0_5 = arith.constant 0 : index
    %c0_6 = arith.constant 0 : index
    %7 = vector.load %arg2[%c0_5, %c0_6] : memref<32x2xf32, #tpu.memory_space<vmem>>, vector<32x2xf32>
    %cst_7 = arith.constant dense<0.000000e+00> : vector<8x2xf32>
    %8 = tpu.matmul %6, %7, %cst_7 {dimension_numbers = #tpu.dot_dimension_numbers<[1], [0], [0], [1], [0, 0, 1, 1], [], []>} : vector<8x32xf32>, vector<32x2xf32>, vector<8x2xf32> -> vector<8x2xf32>
    %cst_8 = arith.constant 0.000000e+00 : f32
    %9 = vector.broadcast %cst_8 : f32 to vector<8x2xf32>
    %10 = arith.maximumf %8, %9 : vector<8x2xf32>
    %c0_9 = arith.constant 0 : index
    %c0_10 = arith.constant 0 : index
    %11 = vector.load %arg3[%c0_9, %c0_10] : memref<2x32xf32, #tpu.memory_space<vmem>>, vector<2x32xf32>
    %cst_11 = arith.constant dense<0.000000e+00> : vector<8x32xf32>
    %12 = tpu.matmul %10, %11, %cst_11 {dimension_numbers = #tpu.dot_dimension_numbers<[1], [0], [0], [1], [0, 0, 1, 1], [], []>} : vector<8x2xf32>, vector<2x32xf32>, vector<8x32xf32> -> vector<8x32xf32>
    %13 = vector.extract_strided_slice %12 {offsets = [0, 0], sizes = [4, 32], strides = [1, 1]} : vector<8x32xf32> to vector<4x32xf32>
    %14 = vector.extract_strided_slice %12 {offsets = [4, 0], sizes = [4, 32], strides = [1, 1]} : vector<8x32xf32> to vector<4x32xf32>
    %15 = arith.addf %13, %14 : vector<4x32xf32>
    %16 = arith.negf %15 : vector<4x32xf32>
    %17 = math.exp %16 : vector<4x32xf32>
    %cst_12 = arith.constant 1.000000e+00 : f32
    %18 = vector.broadcast %cst_12 : f32 to vector<4x32xf32>
    %19 = arith.addf %18, %17 : vector<4x32xf32>
    %20 = arith.divf %18, %19 : vector<4x32xf32>
    %21 = vector.shape_cast %20 : vector<4x32xf32> to vector<4x1x1x32xf32>
    %22 = vector.broadcast %21 : vector<4x1x1x32xf32> to vector<4x16x16x32xf32>
    %23 = arith.mulf %0, %22 : vector<4x16x16x32xf32>
    %cst_13 = arith.constant dense<0.000000e+00> : vector<4x16x16xf32>
    %24 = vector.multi_reduction <add>, %23, %cst_13 [3] : vector<4x16x16x32xf32> to vector<4x16x16xf32>
    %cst_14 = arith.constant 3.200000e+01 : f32
    %25 = vector.broadcast %cst_14 : f32 to vector<4x16x16xf32>
    %26 = arith.divf %24, %25 : vector<4x16x16xf32>
    %cst_15 = arith.constant dense<0xFF800000> : vector<4x16x16xf32>
    %27 = vector.multi_reduction <maximumf>, %23, %cst_15 [3] : vector<4x16x16x32xf32> to vector<4x16x16xf32>
    %cst_16 = arith.constant 0.000000e+00 : f32
    %28 = vector.broadcast %cst_16 : f32 to vector<4x22x32xf32>
    %c0_17 = arith.constant 0 : index
    %c0_18 = arith.constant 0 : index
    %c0_19 = arith.constant 0 : index
    %29 = vector.load %arg6[%c0_17, %c0_18, %c0_19] : memref<4x22x32xf32, #tpu.memory_space<vmem>>, vector<4x22x32xf32>
    tpu.vector_store %arg6[%c0_17, %c0_18, %c0_19], %28 {strides = array<i32>} : memref<4x22x32xf32, #tpu.memory_space<vmem>>, vector<4x22x32xf32>,
    %30 = tpu.concatenate %26, %27 in 2 : vector<4x16x16xf32>, vector<4x16x16xf32> -> vector<4x16x32xf32>
    %c0_20 = arith.constant 0 : index
    %c3 = arith.constant 3 : index
    %c0_21 = arith.constant 0 : index
    %31 = vector.load %arg6[%c0_20, %c3, %c0_21] : memref<4x22x32xf32, #tpu.memory_space<vmem>>, vector<4x16x32xf32>
    tpu.vector_store %arg6[%c0_20, %c3, %c0_21], %30 {strides = array<i32>} : memref<4x22x32xf32, #tpu.memory_space<vmem>>, vector<4x16x32xf32>,
    %c0_22 = arith.constant 0 : index
    %c0_23 = arith.constant 0 : index
    %c0_24 = arith.constant 0 : index
    %32 = vector.load %arg6[%c0_22, %c0_23, %c0_24] : memref<4x22x32xf32, #tpu.memory_space<vmem>>, vector<4x16x32xf32>
    %33 = vector.shape_cast %32 : vector<4x16x32xf32> to vector<64x32xf32>
    %c0_25 = arith.constant 0 : index
    %c1 = arith.constant 1 : index
    %c0_26 = arith.constant 0 : index
    %34 = vector.load %arg6[%c0_25, %c1, %c0_26] : memref<4x22x32xf32, #tpu.memory_space<vmem>>, vector<4x16x32xf32>
    %35 = vector.shape_cast %34 : vector<4x16x32xf32> to vector<64x32xf32>
    %c0_27 = arith.constant 0 : index
    %c2 = arith.constant 2 : index
    %c0_28 = arith.constant 0 : index
    %36 = vector.load %arg6[%c0_27, %c2, %c0_28] : memref<4x22x32xf32, #tpu.memory_space<vmem>>, vector<4x16x32xf32>
    %37 = vector.shape_cast %36 : vector<4x16x32xf32> to vector<64x32xf32>
    %c0_29 = arith.constant 0 : index
    %c3_30 = arith.constant 3 : index
    %c0_31 = arith.constant 0 : index
    %38 = vector.load %arg6[%c0_29, %c3_30, %c0_31] : memref<4x22x32xf32, #tpu.memory_space<vmem>>, vector<4x16x32xf32>
    %39 = vector.shape_cast %38 : vector<4x16x32xf32> to vector<64x32xf32>
    %c0_32 = arith.constant 0 : index
    %c4 = arith.constant 4 : index
    %c0_33 = arith.constant 0 : index
    %40 = vector.load %arg6[%c0_32, %c4, %c0_33] : memref<4x22x32xf32, #tpu.memory_space<vmem>>, vector<4x16x32xf32>
    %41 = vector.shape_cast %40 : vector<4x16x32xf32> to vector<64x32xf32>
    %c0_34 = arith.constant 0 : index
    %c5 = arith.constant 5 : index
    %c0_35 = arith.constant 0 : index
    %42 = vector.load %arg6[%c0_34, %c5, %c0_35] : memref<4x22x32xf32, #tpu.memory_space<vmem>>, vector<4x16x32xf32>
    %43 = vector.shape_cast %42 : vector<4x16x32xf32> to vector<64x32xf32>
    %c0_36 = arith.constant 0 : index
    %c6 = arith.constant 6 : index
    %c0_37 = arith.constant 0 : index
    %44 = vector.load %arg6[%c0_36, %c6, %c0_37] : memref<4x22x32xf32, #tpu.memory_space<vmem>>, vector<4x16x32xf32>
    %45 = vector.shape_cast %44 : vector<4x16x32xf32> to vector<64x32xf32>
    %46 = tpu.concatenate %33, %35, %37, %39, %41, %43, %45 in 1 : vector<64x32xf32>, vector<64x32xf32>, vector<64x32xf32>, vector<64x32xf32>, vector<64x32xf32>, vector<64x32xf32>, vector<64x32xf32> -> vector<64x224xf32>
    %c0_38 = arith.constant 0 : index
    %c0_39 = arith.constant 0 : index
    %47 = vector.load %arg4[%c0_38, %c0_39] : memref<224x16xf32, #tpu.memory_space<vmem>>, vector<224x16xf32>
    %cst_40 = arith.constant dense<0.000000e+00> : vector<64x16xf32>
    %48 = tpu.matmul %46, %47, %cst_40 {dimension_numbers = #tpu.dot_dimension_numbers<[1], [0], [0], [1], [0, 0, 1, 1], [], []>} : vector<64x224xf32>, vector<224x16xf32>, vector<64x16xf32> -> vector<64x16xf32>
    %49 = arith.negf %48 : vector<64x16xf32>
    %50 = math.exp %49 : vector<64x16xf32>
    %cst_41 = arith.constant 1.000000e+00 : f32
    %51 = vector.broadcast %cst_41 : f32 to vector<64x16xf32>
    %52 = arith.addf %51, %50 : vector<64x16xf32>
    %53 = arith.divf %51, %52 : vector<64x16xf32>
    %54 = vector.shape_cast %53 : vector<64x16xf32> to vector<4x16x16xf32>
    %55 = vector.shape_cast %54 : vector<4x16x16xf32> to vector<4x16x16x1xf32>
    %56 = vector.broadcast %55 : vector<4x16x16x1xf32> to vector<4x16x16x32xf32>
    %57 = arith.mulf %23, %56 : vector<4x16x16x32xf32>
    %c0_42 = arith.constant 0 : index
    %c0_43 = arith.constant 0 : index
    %c0_44 = arith.constant 0 : index
    %c0_45 = arith.constant 0 : index
    %58 = vector.load %arg5[%c0_42, %c0_43, %c0_44, %c0_45] : memref<4x16x16x32xf32, #tpu.memory_space<vmem>>, vector<4x16x16x32xf32>
    tpu.vector_store %arg5[%c0_42, %c0_43, %c0_44, %c0_45], %57 {strides = array<i32>} : memref<4x16x16x32xf32, #tpu.memory_space<vmem>>, vector<4x16x16x32xf32>,
    return
  }
  func.func @transform_0(%arg0: i32) -> (i32, i32, i32, i32) {
    %c0_i32 = arith.constant 0 : i32
    %c0_i32_0 = arith.constant 0 : i32
    %c0_i32_1 = arith.constant 0 : i32
    %c0_i32_2 = arith.constant 0 : i32
    return %arg0, %c0_i32, %c0_i32_0, %c0_i32_1 : i32, i32, i32, i32
  }
  func.func @transform_1(%arg0: i32) -> (i32, i32) {
    %c0_i32 = arith.constant 0 : i32
    %c0_i32_0 = arith.constant 0 : i32
    %c0_i32_1 = arith.constant 0 : i32
    return %c0_i32, %c0_i32_0 : i32, i32
  }
  func.func @transform_2(%arg0: i32) -> (i32, i32) {
    %c0_i32 = arith.constant 0 : i32
    %c0_i32_0 = arith.constant 0 : i32
    %c0_i32_1 = arith.constant 0 : i32
    return %c0_i32, %c0_i32_0 : i32, i32
  }
  func.func @transform_3(%arg0: i32) -> (i32, i32) {
    %c0_i32 = arith.constant 0 : i32
    %c0_i32_0 = arith.constant 0 : i32
    %c0_i32_1 = arith.constant 0 : i32
    return %c0_i32, %c0_i32_0 : i32, i32
  }
  func.func @transform_4(%arg0: i32) -> (i32, i32, i32, i32) {
    %c0_i32 = arith.constant 0 : i32
    %c0_i32_0 = arith.constant 0 : i32
    %c0_i32_1 = arith.constant 0 : i32
    %c0_i32_2 = arith.constant 0 : i32
    return %arg0, %c0_i32, %c0_i32_0, %c0_i32_1 : i32, i32, i32, i32
  }
}

</mosaic_0001>

<llo_original>
// kernel: cbam_pallas.1
$region0: #{cbam_pallas.1}
  #allocation0 [shape = 'u32[]', space=smem, size = 0x4, offset = 0x4, fixed_abs, tag = 'smem constant byte address 0x4 - core index']
  #allocation1 [shape = 'u32[144,128]{1,0:T(1,128)}', space=vmem, size = 0x12000, scoped, tag = 'internal scratch']
  #allocation2 [shape = 'f32[4,22,32]{2,1,0:T(8,128)}', space=vmem, size = 0xc000, scoped, tag = 'scratch operand']
  %s0 = inlined_call_operand.vmem [shape: f32[4,16,16,32], index: 0, kind: input, shape index: {}]
  %s1 = inlined_call_operand.vmem [shape: f32[32,2], index: 1, kind: input, shape index: {}]
  %s2 = inlined_call_operand.vmem [shape: f32[2,32], index: 2, kind: input, shape index: {}]
  %s3 = inlined_call_operand.vmem [shape: f32[224,16], index: 3, kind: input, shape index: {}]
  %s4 = inlined_call_operand.hbm [shape: f32[4,16,16,32], index: 4, kind: output, shape index: {}]
  %s5 = sld [smem:[#allocation0]]
  $region26: #{cbam_pallas.1} parent=0
    _
  %s7 = ssub.s32 1, %s5
  %s8 = scalar_select 0, %s7, %s5
  $region1: #{cbam_pallas.1} parent=0
    #allocation3 [shape = 'u8[524288]{0}', space=vmem, size = 0x80000, scoped, tag = 'output window, operand 0, single buffered']
    #allocation4 [shape = 's32[1]{0}', space=sflag, size = 0x4, scoped, tag = 'scoped memory for cbam_pallas.1']
    %9 = vsyncpa [#allocation4], 0
    // Predicated region
    $region2: #{cbam_pallas.1} parent=1 // pred_check
      _
    $region3: #{cbam_pallas.1} parent=1 // pred_check_branch
      %11 = sbr.rel (0) target = $region5
    $region4: #{cbam_pallas.1} parent=1 // pred_region
      _
    $region5: #{cbam_pallas.1} parent=1 // pred_fallthru
      _
    // Predicated region
    $region6: #{cbam_pallas.1} parent=1 // pred_check
      _
    $region7: #{cbam_pallas.1} parent=1 // pred_check_branch
      %13 = sbr.rel (0) target = $region9
    $region8: #{cbam_pallas.1} parent=1 // pred_region
      _
    $region9: #{cbam_pallas.1} parent=1 // pred_fallthru
      _
    // Predicated region
    $region10: #{cbam_pallas.1} parent=1 // pred_check
      _
    $region11: #{cbam_pallas.1} parent=1 // pred_check_branch
      %15 = sbr.rel (0) target = $region13
    $region12: #{cbam_pallas.1} parent=1 // pred_region
      _
    $region13: #{cbam_pallas.1} parent=1 // pred_fallthru
      _
    // Predicated region
    $region14: #{cbam_pallas.1} parent=1 // pred_check
      _
    $region15: #{cbam_pallas.1} parent=1 // pred_check_branch
      %17 = sbr.rel (0) target = $region17
    $region16: #{cbam_pallas.1} parent=1 // pred_region
      _
    $region17: #{cbam_pallas.1} parent=1 // pred_fallthru
      _
    %v18 = vld [vmem:[%s0] sm:$0xff]
    %v19 = vld [vmem:[%s0 + $0x8] sm:$0xff]
    %v20 = vld [vmem:[%s0 + $0x10] sm:$0xff]
    %v21 = vld [vmem:[%s0 + $0x18] sm:$0xff]
    %v22 = vld [vmem:[%s0 + $0x20] sm:$0xff]
    %v23 = vld [vmem:[%s0 + $0x28] sm:$0xff]
    %v24 = vld [vmem:[%s0 + $0x30] sm:$0xff]
    %v25 = vld [vmem:[%s0 + $0x38] sm:$0xff]
    %v26 = vld [vmem:[%s0 + $0x40] sm:$0xff]
    %v27 = vld [vmem:[%s0 + $0x48] sm:$0xff]
    %v28 = vld [vmem:[%s0 + $0x50] sm:$0xff]
    %v29 = vld [vmem:[%s0 + $0x58] sm:$0xff]
    %v30 = vld [vmem:[%s0 + $0x60] sm:$0xff]
    %v31 = vld [vmem:[%s0 + $0x68] sm:$0xff]
    %v32 = vld [vmem:[%s0 + $0x70] sm:$0xff]
    %v33 = vld [vmem:[%s0 + $0x78] sm:$0xff]
    %v34 = vld [vmem:[%s0 + $0x80] sm:$0xff]
    %v35 = vld [vmem:[%s0 + $0x88] sm:$0xff]
    %v36 = vld [vmem:[%s0 + $0x90] sm:$0xff]
    %v37 = vld [vmem:[%s0 + $0x98] sm:$0xff]
    %v38 = vld [vmem:[%s0 + $0xa0] sm:$0xff]
    %v39 = vld [vmem:[%s0 + $0xa8] sm:$0xff]
    %v40 = vld [vmem:[%s0 + $0xb0] sm:$0xff]
    %v41 = vld [vmem:[%s0 + $0xb8] sm:$0xff]
    %v42 = vld [vmem:[%s0 + $0xc0] sm:$0xff]
    %v43 = vld [vmem:[%s0 + $0xc8] sm:$0xff]
    %v44 = vld [vmem:[%s0 + $0xd0] sm:$0xff]
    %v45 = vld [vmem:[%s0 + $0xd8] sm:$0xff]
    %v46 = vld [vmem:[%s0 + $0xe0] sm:$0xff]
    %v47 = vld [vmem:[%s0 + $0xe8] sm:$0xff]
    %v48 = vld [vmem:[%s0 + $0xf0] sm:$0xff]
    %v49 = vld [vmem:[%s0 + $0xf8] sm:$0xff]
    %v50 = vld [vmem:[%s0 + $0x100] sm:$0xff]
    %v51 = vld [vmem:[%s0 + $0x108] sm:$0xff]
    %v52 = vld [vmem:[%s0 + $0x110] sm:$0xff]
    %v53 = vld [vmem:[%s0 + $0x118] sm:$0xff]
    %v54 = vld [vmem:[%s0 + $0x120] sm:$0xff]
    %v55 = vld [vmem:[%s0 + $0x128] sm:$0xff]
    %v56 = vld [vmem:[%s0 + $0x130] sm:$0xff]
    %v57 = vld [vmem:[%s0 + $0x138] sm:$0xff]
    %v58 = vld [vmem:[%s0 + $0x140] sm:$0xff]
    %v59 = vld [vmem:[%s0 + $0x148] sm:$0xff]
    %v60 = vld [vmem:[%s0 + $0x150] sm:$0xff]
    %v61 = vld [vmem:[%s0 + $0x158] sm:$0xff]
    %v62 = vld [vmem:[%s0 + $0x160] sm:$0xff]
    %v63 = vld [vmem:[%s0 + $0x168] sm:$0xff]
    %v64 = vld [vmem:[%s0 + $0x170] sm:$0xff]
    %v65 = vld [vmem:[%s0 + $0x178] sm:$0xff]
    %v66 = vld [vmem:[%s0 + $0x180] sm:$0xff]
    %v67 = vld [vmem:[%s0 + $0x188] sm:$0xff]
    %v68 = vld [vmem:[%s0 + $0x190] sm:$0xff]
    %v69 = vld [vmem:[%s0 + $0x198] sm:$0xff]
    %v70 = vld [vmem:[%s0 + $0x1a0] sm:$0xff]
    %v71 = vld [vmem:[%s0 + $0x1a8] sm:$0xff]
    %v72 = vld [vmem:[%s0 + $0x1b0] sm:$0xff]
    %v73 = vld [vmem:[%s0 + $0x1b8] sm:$0xff]
    %v74 = vld [vmem:[%s0 + $0x1c0] sm:$0xff]
    %v75 = vld [vmem:[%s0 + $0x1c8] sm:$0xff]
    %v76 = vld [vmem:[%s0 + $0x1d0] sm:$0xff]
    %v77 = vld [vmem:[%s0 + $0x1d8] sm:$0xff]
    %v78 = vld [vmem:[%s0 + $0x1e0] sm:$0xff]
    %v79 = vld [vmem:[%s0 + $0x1e8] sm:$0xff]
    %v80 = vld [vmem:[%s0 + $0x1f0] sm:$0xff]
    %v81 = vld [vmem:[%s0 + $0x1f8] sm:$0xff]
    %v82 = vld [vmem:[%s0 + $0x200] sm:$0xff]
    %v83 = vld [vmem:[%s0 + $0x208] sm:$0xff]
    %v84 = vld [vmem:[%s0 + $0x210] sm:$0xff]
    %v85 = vld [vmem:[%s0 + $0x218] sm:$0xff]
    %v86 = vld [vmem:[%s0 + $0x220] sm:$0xff]
    %v87 = vld [vmem:[%s0 + $0x228] sm:$0xff]
    %v88 = vld [vmem:[%s0 + $0x230] sm:$0xff]
    %v89 = vld [vmem:[%s0 + $0x238] sm:$0xff]
    %v90 = vld [vmem:[%s0 + $0x240] sm:$0xff]
    %v91 = vld [vmem:[%s0 + $0x248] sm:$0xff]
    %v92 = vld [vmem:[%s0 + $0x250] sm:$0xff]
    %v93 = vld [vmem:[%s0 + $0x258] sm:$0xff]
    %v94 = vld [vmem:[%s0 + $0x260] sm:$0xff]
    %v95 = vld [vmem:[%s0 + $0x268] sm:$0xff]
    %v96 = vld [vmem:[%s0 + $0x270] sm:$0xff]
    %v97 = vld [vmem:[%s0 + $0x278] sm:$0xff]
    %v98 = vld [vmem:[%s0 + $0x280] sm:$0xff]
    %v99 = vld [vmem:[%s0 + $0x288] sm:$0xff]
    %v100 = vld [vmem:[%s0 + $0x290] sm:$0xff]
    %v101 = vld [vmem:[%s0 + $0x298] sm:$0xff]
    %v102 = vld [vmem:[%s0 + $0x2a0] sm:$0xff]
    %v103 = vld [vmem:[%s0 + $0x2a8] sm:$0xff]
    %v104 = vld [vmem:[%s0 + $0x2b0] sm:$0xff]
    %v105 = vld [vmem:[%s0 + $0x2b8] sm:$0xff]
    %v106 = vld [vmem:[%s0 + $0x2c0] sm:$0xff]
    %v107 = vld [vmem:[%s0 + $0x2c8] sm:$0xff]
    %v108 = vld [vmem:[%s0 + $0x2d0] sm:$0xff]
    %v109 = vld [vmem:[%s0 + $0x2d8] sm:$0xff]
    %v110 = vld [vmem:[%s0 + $0x2e0] sm:$0xff]
    %v111 = vld [vmem:[%s0 + $0x2e8] sm:$0xff]
    %v112 = vld [vmem:[%s0 + $0x2f0] sm:$0xff]
    %v113 = vld [vmem:[%s0 + $0x2f8] sm:$0xff]
    %v114 = vld [vmem:[%s0 + $0x300] sm:$0xff]
    %v115 = vld [vmem:[%s0 + $0x308] sm:$0xff]
    %v116 = vld [vmem:[%s0 + $0x310] sm:$0xff]
    %v117 = vld [vmem:[%s0 + $0x318] sm:$0xff]
    %v118 = vld [vmem:[%s0 + $0x320] sm:$0xff]
    %v119 = vld [vmem:[%s0 + $0x328] sm:$0xff]
    %v120 = vld [vmem:[%s0 + $0x330] sm:$0xff]
    %v121 = vld [vmem:[%s0 + $0x338] sm:$0xff]
    %v122 = vld [vmem:[%s0 + $0x340] sm:$0xff]
    %v123 = vld [vmem:[%s0 + $0x348] sm:$0xff]
    %v124 = vld [vmem:[%s0 + $0x350] sm:$0xff]
    %v125 = vld [vmem:[%s0 + $0x358] sm:$0xff]
    %v126 = vld [vmem:[%s0 + $0x360] sm:$0xff]
    %v127 = vld [vmem:[%s0 + $0x368] sm:$0xff]
    %v128 = vld [vmem:[%s0 + $0x370] sm:$0xff]
    %v129 = vld [vmem:[%s0 + $0x378] sm:$0xff]
    %v130 = vld [vmem:[%s0 + $0x380] sm:$0xff]
    %v131 = vld [vmem:[%s0 + $0x388] sm:$0xff]
    %v132 = vld [vmem:[%s0 + $0x390] sm:$0xff]
    %v133 = vld [vmem:[%s0 + $0x398] sm:$0xff]
    %v134 = vld [vmem:[%s0 + $0x3a0] sm:$0xff]
    %v135 = vld [vmem:[%s0 + $0x3a8] sm:$0xff]
    %v136 = vld [vmem:[%s0 + $0x3b0] sm:$0xff]
    %v137 = vld [vmem:[%s0 + $0x3b8] sm:$0xff]
    %v138 = vld [vmem:[%s0 + $0x3c0] sm:$0xff]
    %v139 = vld [vmem:[%s0 + $0x3c8] sm:$0xff]
    %v140 = vld [vmem:[%s0 + $0x3d0] sm:$0xff]
    %v141 = vld [vmem:[%s0 + $0x3d8] sm:$0xff]
    %v142 = vld [vmem:[%s0 + $0x3e0] sm:$0xff]
    %v143 = vld [vmem:[%s0 + $0x3e8] sm:$0xff]
    %v144 = vld [vmem:[%s0 + $0x3f0] sm:$0xff]
    %v145 = vld [vmem:[%s0 + $0x3f8] sm:$0xff]
    %vm146 = vcmask 261120
    %v147 = vsel %vm146, %v18, 0.0
    %v148 = vsel %vm146, %v19, 0.0
    %v149 = vadd.f32 %v147, %v148
    %v150 = vsel %vm146, %v20, 0.0
    %v151 = vadd.f32 %v149, %v150
    %v152 = vsel %vm146, %v21, 0.0
    %v153 = vadd.f32 %v151, %v152
    %v154 = vsel %vm146, %v22, 0.0
    %v155 = vadd.f32 %v153, %v154
    %v156 = vsel %vm146, %v23, 0.0
    %v157 = vadd.f32 %v155, %v156
    %v158 = vsel %vm146, %v24, 0.0
    %v159 = vadd.f32 %v157, %v158
    %v160 = vsel %vm146, %v25, 0.0
    %v161 = vadd.f32 %v159, %v160
    %v162 = vsel %vm146, %v26, 0.0
    %v163 = vadd.f32 %v161, %v162
    %v164 = vsel %vm146, %v27, 0.0
    %v165 = vadd.f32 %v163, %v164
    %v166 = vsel %vm146, %v28, 0.0
    %v167 = vadd.f32 %v165, %v166
    %v168 = vsel %vm146, %v29, 0.0
    %v169 = vadd.f32 %v167, %v168
    %v170 = vsel %vm146, %v30, 0.0
    %v171 = vadd.f32 %v169, %v170
    %v172 = vsel %vm146, %v31, 0.0
    %v173 = vadd.f32 %v171, %v172
    %v174 = vsel %vm146, %v32, 0.0
    %v175 = vadd.f32 %v173, %v174
    %v176 = vsel %vm146, %v33, 0.0
    %v177 = vadd.f32 %v175, %v176
    %v178 = vsel %vm146, %v34, 0.0
    %v179 = vadd.f32 %v177, %v178
    %v180 = vsel %vm146, %v35, 0.0
    %v181 = vadd.f32 %v179, %v180
    %v182 = vsel %vm146, %v36, 0.0
    %v183 = vadd.f32 %v181, %v182
    %v184 = vsel %vm146, %v37, 0.0
    %v185 = vadd.f32 %v183, %v184
    %v186 = vsel %vm146, %v38, 0.0
    %v187 = vadd.f32 %v185, %v186
    %v188 = vsel %vm146, %v39, 0.0
    %v189 = vadd.f32 %v187, %v188
    %v190 = vsel %vm146, %v40, 0.0
    %v191 = vadd.f32 %v189, %v190
    %v192 = vsel %vm146, %v41, 0.0
    %v193 = vadd.f32 %v191, %v192
    %v194 = vsel %vm146, %v42, 0.0
    %v195 = vadd.f32 %v193, %v194
    %v196 = vsel %vm146, %v43, 0.0
    %v197 = vadd.f32 %v195, %v196
    %v198 = vsel %vm146, %v44, 0.0
    %v199 = vadd.f32 %v197, %v198
    %v200 = vsel %vm146, %v45, 0.0
    %v201 = vadd.f32 %v199, %v200
    %v202 = vsel %vm146, %v46, 0.0
    %v203 = vadd.f32 %v201, %v202
    %v204 = vsel %vm146, %v47, 0.0
    %v205 = vadd.f32 %v203, %v204
    %v206 = vsel %vm146, %v48, 0.0
    %v207 = vadd.f32 %v205, %v206
    %v208 = vsel %vm146, %v49, 0.0
    %v209 = vadd.f32 %v207, %v208
    %v210 = vrot.slane %v209, 4
    %v211 = vadd.f32 %v209, %v210
    %v212 = vrot.slane %v211, 2
    %v213 = vadd.f32 %v211, %v212
    %v214 = vrot.slane %v213, 1
    %v215 = vadd.f32 %v213, %v214
    %v216 = vsel %vm146, %v50, 0.0
    %v217 = vsel %vm146, %v51, 0.0
    %v218 = vadd.f32 %v216, %v217
    %v219 = vsel %vm146, %v52, 0.0
    %v220 = vadd.f32 %v218, %v219
    %v221 = vsel %vm146, %v53, 0.0
    %v222 = vadd.f32 %v220, %v221
    %v223 = vsel %vm146, %v54, 0.0
    %v224 = vadd.f32 %v222, %v223
    %v225 = vsel %vm146, %v55, 0.0
    %v226 = vadd.f32 %v224, %v225
    %v227 = vsel %vm146, %v56, 0.0
    %v228 = vadd.f32 %v226, %v227
    %v229 = vsel %vm146, %v57, 0.0
    %v230 = vadd.f32 %v228, %v229
    %v231 = vsel %vm146, %v58, 0.0
    %v232 = vadd.f32 %v230, %v231
    %v233 = vsel %vm146, %v59, 0.0
    %v234 = vadd.f32 %v232, %v233
    %v235 = vsel %vm146, %v60, 0.0
    %v236 = vadd.f32 %v234, %v235
    %v237 = vsel %vm146, %v61, 0.0
    %v238 = vadd.f32 %v236, %v237
    %v239 = vsel %vm146, %v62, 0.0
    %v240 = vadd.f32 %v238, %v239
    %v241 = vsel %vm146, %v63, 0.0
    %v242 = vadd.f32 %v240, %v241
    %v243 = vsel %vm146, %v64, 0.0
    %v244 = vadd.f32 %v242, %v243
    %v245 = vsel %vm146, %v65, 0.0
    %v246 = vadd.f32 %v244, %v245
    %v247 = vsel %vm146, %v66, 0.0
    %v248 = vadd.f32 %v246, %v247
    %v249 = vsel %vm146, %v67, 0.0
    %v250 = vadd.f32 %v248, %v249
    %v251 = vsel %vm146, %v68, 0.0
    %v252 = vadd.f32 %v250, %v251
    %v253 = vsel %vm146, %v69, 0.0
    %v254 = vadd.f32 %v252, %v253
    %v255 = vsel %vm146, %v70, 0.0
    %v256 = vadd.f32 %v254, %v255
    %v257 = vsel %vm146, %v71, 0.0
    %v258 = vadd.f32 %v256, %v257
    %v259 = vsel %vm146, %v72, 0.0
    %v260 = vadd.f32 %v258, %v259
    %v261 = vsel %vm146, %v73, 0.0
    %v262 = vadd.f32 %v260, %v261
    %v263 = vsel %vm146, %v74, 0.0
    %v264 = vadd.f32 %v262, %v263
    %v265 = vsel %vm146, %v75, 0.0
    %v266 = vadd.f32 %v264, %v265
    %v267 = vsel %vm146, %v76, 0.0
    %v268 = vadd.f32 %v266, %v267
    %v269 = vsel %vm146, %v77, 0.0
    %v270 = vadd.f32 %v268, %v269
    %v271 = vsel %vm146, %v78, 0.0
    %v272 = vadd.f32 %v270, %v271
    %v273 = vsel %vm146, %v79, 0.0
    %v274 = vadd.f32 %v272, %v273
    %v275 = vsel %vm146, %v80, 0.0
    %v276 = vadd.f32 %v274, %v275
    %v277 = vsel %vm146, %v81, 0.0
    %v278 = vadd.f32 %v276, %v277
    %v279 = vrot.slane %v278, 4
    %v280 = vadd.f32 %v278, %v279
    %v281 = vrot.slane %v280, 2
    %v282 = vadd.f32 %v280, %v281
    %v283 = vrot.slane %v282, 1
    %v284 = vadd.f32 %v282, %v283
    %v285 = vsel %vm146, %v82, 0.0
    %v286 = vsel %vm146, %v83, 0.0
    %v287 = vadd.f32 %v285, %v286
    %v288 = vsel %vm146, %v84, 0.0
    %v289 = vadd.f32 %v287, %v288
    %v290 = vsel %vm146, %v85, 0.0
    %v291 = vadd.f32 %v289, %v290
    %v292 = vsel %vm146, %v86, 0.0
    %v293 = vadd.f32 %v291, %v292
    %v294 = vsel %vm146, %v87, 0.0
    %v295 = vadd.f32 %v293, %v294
    %v296 = vsel %vm146, %v88, 0.0
    %v297 = vadd.f32 %v295, %v296
    %v298 = vsel %vm146, %v89, 0.0
    %v299 = vadd.f32 %v297, %v298
    %v300 = vsel %vm146, %v90, 0.0
    %v301 = vadd.f32 %v299, %v300
    %v302 = vsel %vm146, %v91, 0.0
    %v303 = vadd.f32 %v301, %v302
    %v304 = vsel %vm146, %v92, 0.0
    %v305 = vadd.f32 %v303, %v304
    %v306 = vsel %vm146, %v93, 0.0
    %v307 = vadd.f32 %v305, %v306
    %v308 = vsel %vm146, %v94, 0.0
    %v309 = vadd.f32 %v307, %v308
    %v310 = vsel %vm146, %v95, 0.0
    %v311 = vadd.f32 %v309, %v310
    %v312 = vsel %vm146, %v96, 0.0
    %v313 = vadd.f32 %v311, %v312
    %v314 = vsel %vm146, %v97, 0.0
    %v315 = vadd.f32 %v313, %v314
    %v316 = vsel %vm146, %v98, 0.0
    %v317 = vadd.f32 %v315, %v316
    %v318 = vsel %vm146, %v99, 0.0
    %v319 = vadd.f32 %v317, %v318
    %v320 = vsel %vm146, %v100, 0.0
    %v321 = vadd.f32 %v319, %v320
    %v322 = vsel %vm146, %v101, 0.0
    %v323 = vadd.f32 %v321, %v322
    %v324 = vsel %vm146, %v102, 0.0
    %v325 = vadd.f32 %v323, %v324
    %v326 = vsel %vm146, %v103, 0.0
    %v327 = vadd.f32 %v325, %v326
    %v328 = vsel %vm146, %v104, 0.0
    %v329 = vadd.f32 %v327, %v328
    %v330 = vsel %vm146, %v105, 0.0
    %v331 = vadd.f32 %v329, %v330
    %v332 = vsel %vm146, %v106, 0.0
    %v333 = vadd.f32 %v331, %v332
    %v334 = vsel %vm146, %v107, 0.0
    %v335 = vadd.f32 %v333, %v334
    %v336 = vsel %vm146, %v108, 0.0
    %v337 = vadd.f32 %v335, %v336
    %v338 = vsel %vm146, %v109, 0.0
    %v339 = vadd.f32 %v337, %v338
    %v340 = vsel %vm146, %v110, 0.0
    %v341 = vadd.f32 %v339, %v340
    %v342 = vsel %vm146, %v111, 0.0
    %v343 = vadd.f32 %v341, %v342
    %v344 = vsel %vm146, %v112, 0.0
    %v345 = vadd.f32 %v343, %v344
    %v346 = vsel %vm146, %v113, 0.0
    %v347 = vadd.f32 %v345, %v346
    %v348 = vrot.slane %v347, 4
    %v349 = vadd.f32 %v347, %v348
    %v350 = vrot.slane %v349, 2
    %v351 = vadd.f32 %v349, %v350
    %v352 = vrot.slane %v351, 1
    %v353 = vadd.f32 %v351, %v352
    %v354 = vsel %vm146, %v114, 0.0
    %v355 = vsel %vm146, %v115, 0.0
    %v356 = vadd.f32 %v354, %v355
    %v357 = vsel %vm146, %v116, 0.0
    %v358 = vadd.f32 %v356, %v357
    %v359 = vsel %vm146, %v117, 0.0
    %v360 = vadd.f32 %v358, %v359
    %v361 = vsel %vm146, %v118, 0.0
    %v362 = vadd.f32 %v360, %v361
    %v363 = vsel %vm146, %v119, 0.0
    %v364 = vadd.f32 %v362, %v363
    %v365 = vsel %vm146, %v120, 0.0
    %v366 = vadd.f32 %v364, %v365
    %v367 = vsel %vm146, %v121, 0.0
    %v368 = vadd.f32 %v366, %v367
    %v369 = vsel %vm146, %v122, 0.0
    %v370 = vadd.f32 %v368, %v369
    %v371 = vsel %vm146, %v123, 0.0
    %v372 = vadd.f32 %v370, %v371
    %v373 = vsel %vm146, %v124, 0.0
    %v374 = vadd.f32 %v372, %v373
    %v375 = vsel %vm146, %v125, 0.0
    %v376 = vadd.f32 %v374, %v375
    %v377 = vsel %vm146, %v126, 0.0
    %v378 = vadd.f32 %v376, %v377
    %v379 = vsel %vm146, %v127, 0.0
    %v380 = vadd.f32 %v378, %v379
    %v381 = vsel %vm146, %v128, 0.0
    %v382 = vadd.f32 %v380, %v381
    %v383 = vsel %vm146, %v129, 0.0
    %v384 = vadd.f32 %v382, %v383
    %v385 = vsel %vm146, %v130, 0.0
    %v386 = vadd.f32 %v384, %v385
    %v387 = vsel %vm146, %v131, 0.0
    %v388 = vadd.f32 %v386, %v387
    %v389 = vsel %vm146, %v132, 0.0
    %v390 = vadd.f32 %v388, %v389
    %v391 = vsel %vm146, %v133, 0.0
    %v392 = vadd.f32 %v390, %v391
    %v393 = vsel %vm146, %v134, 0.0
    %v394 = vadd.f32 %v392, %v393
    %v395 = vsel %vm146, %v135, 0.0
    %v396 = vadd.f32 %v394, %v395
    %v397 = vsel %vm146, %v136, 0.0
    %v398 = vadd.f32 %v396, %v397
    %v399 = vsel %vm146, %v137, 0.0
    %v400 = vadd.f32 %v398, %v399
    %v401 = vsel %vm146, %v138, 0.0
    %v402 = vadd.f32 %v400, %v401
    %v403 = vsel %vm146, %v139, 0.0
    %v404 = vadd.f32 %v402, %v403
    %v405 = vsel %vm146, %v140, 0.0
    %v406 = vadd.f32 %v404, %v405
    %v407 = vsel %vm146, %v141, 0.0
    %v408 = vadd.f32 %v406, %v407
    %v409 = vsel %vm146, %v142, 0.0
    %v410 = vadd.f32 %v408, %v409
    %v411 = vsel %vm146, %v143, 0.0
    %v412 = vadd.f32 %v410, %v411
    %v413 = vsel %vm146, %v144, 0.0
    %v414 = vadd.f32 %v412, %v413
    %v415 = vsel %vm146, %v145, 0.0
    %v416 = vadd.f32 %v414, %v415
    %v417 = vrot.slane %v416, 4
    %v418 = vadd.f32 %v416, %v417
    %v419 = vrot.slane %v418, 2
    %v420 = vadd.f32 %v418, %v419
    %v421 = vrot.slane %v420, 1
    %v422 = vadd.f32 %v420, %v421
    %v423 = vrcp.pop 256.0
    %v424 = vmul.f32 %v215, %v423
    %v425 = vmul.f32 %v284, %v423
    %v426 = vmul.f32 %v353, %v423
    %v427 = vmul.f32 %v422, %v423
    %v428 = vsel %vm146, %v18, -inf
    %v429 = vsel %vm146, %v19, -inf
    %v430 = vmax.f32 %v428, %v429
    %v431 = vsel %vm146, %v20, -inf
    %v432 = vmax.f32 %v430, %v431
    %v433 = vsel %vm146, %v21, -inf
    %v434 = vmax.f32 %v432, %v433
    %v435 = vsel %vm146, %v22, -inf
    %v436 = vmax.f32 %v434, %v435
    %v437 = vsel %vm146, %v23, -inf
    %v438 = vmax.f32 %v436, %v437
    %v439 = vsel %vm146, %v24, -inf
    %v440 = vmax.f32 %v438, %v439
    %v441 = vsel %vm146, %v25, -inf
    %v442 = vmax.f32 %v440, %v441
    %v443 = vsel %vm146, %v26, -inf
    %v444 = vmax.f32 %v442, %v443
    %v445 = vsel %vm146, %v27, -inf
    %v446 = vmax.f32 %v444, %v445
    %v447 = vsel %vm146, %v28, -inf
    %v448 = vmax.f32 %v446, %v447
    %v449 = vsel %vm146, %v29, -inf
    %v450 = vmax.f32 %v448, %v449
    %v451 = vsel %vm146, %v30, -inf
    %v452 = vmax.f32 %v450, %v451
    %v453 = vsel %vm146, %v31, -inf
    %v454 = vmax.f32 %v452, %v453
    %v455 = vsel %vm146, %v32, -inf
    %v456 = vmax.f32 %v454, %v455
    %v457 = vsel %vm146, %v33, -inf
    %v458 = vmax.f32 %v456, %v457
    %v459 = vsel %vm146, %v34, -inf
    %v460 = vmax.f32 %v458, %v459
    %v461 = vsel %vm146, %v35, -inf
    %v462 = vmax.f32 %v460, %v461
    %v463 = vsel %vm146, %v36, -inf
    %v464 = vmax.f32 %v462, %v463
    %v465 = vsel %vm146, %v37, -inf
    %v466 = vmax.f32 %v464, %v465
    %v467 = vsel %vm146, %v38, -inf
    %v468 = vmax.f32 %v466, %v467
    %v469 = vsel %vm146, %v39, -inf
    %v470 = vmax.f32 %v468, %v469
    %v471 = vsel %vm146, %v40, -inf
    %v472 = vmax.f32 %v470, %v471
    %v473 = vsel %vm146, %v41, -inf
    %v474 = vmax.f32 %v472, %v473
    %v475 = vsel %vm146, %v42, -inf
    %v476 = vmax.f32 %v474, %v475
    %v477 = vsel %vm146, %v43, -inf
    %v478 = vmax.f32 %v476, %v477
    %v479 = vsel %vm146, %v44, -inf
    %v480 = vmax.f32 %v478, %v479
    %v481 = vsel %vm146, %v45, -inf
    %v482 = vmax.f32 %v480, %v481
    %v483 = vsel %vm146, %v46, -inf
    %v484 = vmax.f32 %v482, %v483
    %v485 = vsel %vm146, %v47, -inf
    %v486 = vmax.f32 %v484, %v485
    %v487 = vsel %vm146, %v48, -inf
    %v488 = vmax.f32 %v486, %v487
    %v489 = vsel %vm146, %v49, -inf
    %v490 = vmax.f32 %v488, %v489
    %v491 = vrot.slane %v490, 4
    %v492 = vmax.f32 %v490, %v491
    %v493 = vrot.slane %v492, 2
    %v494 = vmax.f32 %v492, %v493
    %v495 = vrot.slane %v494, 1
    %v496 = vmax.f32 %v494, %v495
    %v497 = vsel %vm146, %v50, -inf
    %v498 = vsel %vm146, %v51, -inf
    %v499 = vmax.f32 %v497, %v498
    %v500 = vsel %vm146, %v52, -inf
    %v501 = vmax.f32 %v499, %v500
    %v502 = vsel %vm146, %v53, -inf
    %v503 = vmax.f32 %v501, %v502
    %v504 = vsel %vm146, %v54, -inf
    %v505 = vmax.f32 %v503, %v504
    %v506 = vsel %vm146, %v55, -inf
    %v507 = vmax.f32 %v505, %v506
    %v508 = vsel %vm146, %v56, -inf
    %v509 = vmax.f32 %v507, %v508
    %v510 = vsel %vm146, %v57, -inf
    %v511 = vmax.f32 %v509, %v510
    %v512 = vsel %vm146, %v58, -inf
    %v513 = vmax.f32 %v511, %v512
    %v514 = vsel %vm146, %v59, -inf
    %v515 = vmax.f32 %v513, %v514
    %v516 = vsel %vm146, %v60, -inf
    %v517 = vmax.f32 %v515, %v516
    %v518 = vsel %vm146, %v61, -inf
    %v519 = vmax.f32 %v517, %v518
    %v520 = vsel %vm146, %v62, -inf
    %v521 = vmax.f32 %v519, %v520
    %v522 = vsel %vm146, %v63, -inf
    %v523 = vmax.f32 %v521, %v522
    %v524 = vsel %vm146, %v64, -inf
    %v525 = vmax.f32 %v523, %v524
    %v526 = vsel %vm146, %v65, -inf
    %v527 = vmax.f32 %v525, %v526
    %v528 = vsel %vm146, %v66, -inf
    %v529 = vmax.f32 %v527, %v528
    %v530 = vsel %vm146, %v67, -inf
    %v531 = vmax.f32 %v529, %v530
    %v532 = vsel %vm146, %v68, -inf
    %v533 = vmax.f32 %v531, %v532
    %v534 = vsel %vm146, %v69, -inf
    %v535 = vmax.f32 %v533, %v534
    %v536 = vsel %vm146, %v70, -inf
    %v537 = vmax.f32 %v535, %v536
    %v538 = vsel %vm146, %v71, -inf
    %v539 = vmax.f32 %v537, %v538
    %v540 = vsel %vm146, %v72, -inf
    %v541 = vmax.f32 %v539, %v540
    %v542 = vsel %vm146, %v73, -inf
    %v543 = vmax.f32 %v541, %v542
    %v544 = vsel %vm146, %v74, -inf
    %v545 = vmax.f32 %v543, %v544
    %v546 = vsel %vm146, %v75, -inf
    %v547 = vmax.f32 %v545, %v546
    %v548 = vsel %vm146, %v76, -inf
    %v549 = vmax.f32 %v547, %v548
    %v550 = vsel %vm146, %v77, -inf
    %v551 = vmax.f32 %v549, %v550
    %v552 = vsel %vm146, %v78, -inf
    %v553 = vmax.f32 %v551, %v552
    %v554 = vsel %vm146, %v79, -inf
    %v555 = vmax.f32 %v553, %v554
    %v556 = vsel %vm146, %v80, -inf
    %v557 = vmax.f32 %v555, %v556
    %v558 = vsel %vm146, %v81, -inf
    %v559 = vmax.f32 %v557, %v558
    %v560 = vrot.slane %v559, 4
    %v561 = vmax.f32 %v559, %v560
    %v562 = vrot.slane %v561, 2
    %v563 = vmax.f32 %v561, %v562
    %v564 = vrot.slane %v563, 1
    %v565 = vmax.f32 %v563, %v564
    %v566 = vsel %vm146, %v82, -inf
    %v567 = vsel %vm146, %v83, -inf
    %v568 = vmax.f32 %v566, %v567
    %v569 = vsel %vm146, %v84, -inf
    %v570 = vmax.f32 %v568, %v569
    %v571 = vsel %vm146, %v85, -inf
    %v572 = vmax.f32 %v570, %v571
    %v573 = vsel %vm146, %v86, -inf
    %v574 = vmax.f32 %v572, %v573
    %v575 = vsel %vm146, %v87, -inf
    %v576 = vmax.f32 %v574, %v575
    %v577 = vsel %vm146, %v88, -inf
    %v578 = vmax.f32 %v576, %v577
    %v579 = vsel %vm146, %v89, -inf
    %v580 = vmax.f32 %v578, %v579
    %v581 = vsel %vm146, %v90, -inf
    %v582 = vmax.f32 %v580, %v581
    %v583 = vsel %vm146, %v91, -inf
    %v584 = vmax.f32 %v582, %v583
    %v585 = vsel %vm146, %v92, -inf
    %v586 = vmax.f32 %v584, %v585
    %v587 = vsel %vm146, %v93, -inf
    %v588 = vmax.f32 %v586, %v587
    %v589 = vsel %vm146, %v94, -inf
    %v590 = vmax.f32 %v588, %v589
    %v591 = vsel %vm146, %v95, -inf
    %v592 = vmax.f32 %v590, %v591
    %v593 = vsel %vm146, %v96, -inf
    %v594 = vmax.f32 %v592, %v593
    %v595 = vsel %vm146, %v97, -inf
    %v596 = vmax.f32 %v594, %v595
    %v597 = vsel %vm146, %v98, -inf
    %v598 = vmax.f32 %v596, %v597
    %v599 = vsel %vm146, %v99, -inf
    %v600 = vmax.f32 %v598, %v599
    %v601 = vsel %vm146, %v100, -inf
    %v602 = vmax.f32 %v600, %v601
    %v603 = vsel %vm146, %v101, -inf
    %v604 = vmax.f32 %v602, %v603
    %v605 = vsel %vm146, %v102, -inf
    %v606 = vmax.f32 %v604, %v605
    %v607 = vsel %vm146, %v103, -inf
    %v608 = vmax.f32 %v606, %v607
    %v609 = vsel %vm146, %v104, -inf
    %v610 = vmax.f32 %v608, %v609
    %v611 = vsel %vm146, %v105, -inf
    %v612 = vmax.f32 %v610, %v611
    %v613 = vsel %vm146, %v106, -inf
    %v614 = vmax.f32 %v612, %v613
    %v615 = vsel %vm146, %v107, -inf
    %v616 = vmax.f32 %v614, %v615
    %v617 = vsel %vm146, %v108, -inf
    %v618 = vmax.f32 %v616, %v617
    %v619 = vsel %vm146, %v109, -inf
    %v620 = vmax.f32 %v618, %v619
    %v621 = vsel %vm146, %v110, -inf
    %v622 = vmax.f32 %v620, %v621
    %v623 = vsel %vm146, %v111, -inf
    %v624 = vmax.f32 %v622, %v623
    %v625 = vsel %vm146, %v112, -inf
    %v626 = vmax.f32 %v624, %v625
    %v627 = vsel %vm146, %v113, -inf
    %v628 = vmax.f32 %v626, %v627
    %v629 = vrot.slane %v628, 4
    %v630 = vmax.f32 %v628, %v629
    %v631 = vrot.slane %v630, 2
    %v632 = vmax.f32 %v630, %v631
    %v633 = vrot.slane %v632, 1
    %v634 = vmax.f32 %v632, %v633
    %v635 = vsel %vm146, %v114, -inf
    %v636 = vsel %vm146, %v115, -inf
    %v637 = vmax.f32 %v635, %v636
    %v638 = vsel %vm146, %v116, -inf
    %v639 = vmax.f32 %v637, %v638
    %v640 = vsel %vm146, %v117, -inf
    %v641 = vmax.f32 %v639, %v640
    %v642 = vsel %vm146, %v118, -inf
    %v643 = vmax.f32 %v641, %v642
    %v644 = vsel %vm146, %v119, -inf
    %v645 = vmax.f32 %v643, %v644
    %v646 = vsel %vm146, %v120, -inf
    %v647 = vmax.f32 %v645, %v646
    %v648 = vsel %vm146, %v121, -inf
    %v649 = vmax.f32 %v647, %v648
    %v650 = vsel %vm146, %v122, -inf
    %v651 = vmax.f32 %v649, %v650
    %v652 = vsel %vm146, %v123, -inf
    %v653 = vmax.f32 %v651, %v652
    %v654 = vsel %vm146, %v124, -inf
    %v655 = vmax.f32 %v653, %v654
    %v656 = vsel %vm146, %v125, -inf
    %v657 = vmax.f32 %v655, %v656
    %v658 = vsel %vm146, %v126, -inf
    %v659 = vmax.f32 %v657, %v658
    %v660 = vsel %vm146, %v127, -inf
    %v661 = vmax.f32 %v659, %v660
    %v662 = vsel %vm146, %v128, -inf
    %v663 = vmax.f32 %v661, %v662
    %v664 = vsel %vm146, %v129, -inf
    %v665 = vmax.f32 %v663, %v664
    %v666 = vsel %vm146, %v130, -inf
    %v667 = vmax.f32 %v665, %v666
    %v668 = vsel %vm146, %v131, -inf
    %v669 = vmax.f32 %v667, %v668
    %v670 = vsel %vm146, %v132, -inf
    %v671 = vmax.f32 %v669, %v670
    %v672 = vsel %vm146, %v133, -inf
    %v673 = vmax.f32 %v671, %v672
    %v674 = vsel %vm146, %v134, -inf
    %v675 = vmax.f32 %v673, %v674
    %v676 = vsel %vm146, %v135, -inf
    %v677 = vmax.f32 %v675, %v676
    %v678 = vsel %vm146, %v136, -inf
    %v679 = vmax.f32 %v677, %v678
    %v680 = vsel %vm146, %v137, -inf
    %v681 = vmax.f32 %v679, %v680
    %v682 = vsel %vm146, %v138, -inf
    %v683 = vmax.f32 %v681, %v682
    %v684 = vsel %vm146, %v139, -inf
    %v685 = vmax.f32 %v683, %v684
    %v686 = vsel %vm146, %v140, -inf
    %v687 = vmax.f32 %v685, %v686
    %v688 = vsel %vm146, %v141, -inf
    %v689 = vmax.f32 %v687, %v688
    %v690 = vsel %vm146, %v142, -inf
    %v691 = vmax.f32 %v689, %v690
    %v692 = vsel %vm146, %v143, -inf
    %v693 = vmax.f32 %v691, %v692
    %v694 = vsel %vm146, %v144, -inf
    %v695 = vmax.f32 %v693, %v694
    %v696 = vsel %vm146, %v145, -inf
    %v697 = vmax.f32 %v695, %v696
    %v698 = vrot.slane %v697, 4
    %v699 = vmax.f32 %v697, %v698
    %v700 = vrot.slane %v699, 2
    %v701 = vmax.f32 %v699, %v700
    %v702 = vrot.slane %v701, 1
    %v703 = vmax.f32 %v701, %v702
    %vm708 = vcmask 1041409
    %v709 = vsel %vm708, %v425, %v424
    %vm710 = vcmask 1042434
    %v711 = vsel %vm710, %v426, %v709
    %vm712 = vcmask 1043459
    %v713 = vsel %vm712, %v427, %v711
    %vm719 = vcmask 1045509
    %v720 = vsel %vm719, %v565, %v496
    %vm721 = vcmask 1046534
    %v722 = vsel %vm721, %v634, %v720
    %vm723 = vcmask 1047559
    %v724 = vsel %vm723, %v703, %v722
    %vm726 = vcmask 1043456
    %v727 = vsel %vm726, %v713, %v724
    %v728 = vld [vmem:[%s1] sm:$0xff]
    %v729 = vld [vmem:[%s1 + $0x8] sm:$0xff]
    %v730 = vld [vmem:[%s1 + $0x10] sm:$0xff]
    %v731 = vld [vmem:[%s1 + $0x18] sm:$0xff]
    %v733 = vsel %vm146, %v727, 0
    %735 = vmatprep.subr.mxu0 0.0
    %736 = vmatpush1.msra.mxu0 %v728
    %737 = vmatprep.subr.mxu0 0.0
    %738 = vmatpush1.msra.mxu0 %v729
    %739 = vmatprep.subr.mxu0 0.0
    %740 = vmatpush1.msra.mxu0 %v730
    %741 = vmatprep.subr.mxu0 0.0
    %742 = vmatpush1.msra.mxu0 %v731
    %743 = vmatprep.subr.mxu0 0.0
    %744 = vmatpush1.msra.mxu0 0.0
    %745 = vmatprep.subr.mxu0 0.0
    %746 = vmatpush1.msra.mxu0 0.0
    %747 = vmatprep.subr.mxu0 0.0
    %748 = vmatpush1.msra.mxu0 0.0
    %749 = vmatprep.subr.mxu0 0.0
    %750 = vmatpush1.msra.mxu0 0.0
    %751 = vmatprep.subr.mxu0 0.0
    %752 = vmatpush1.msra.mxu0 0.0
    %753 = vmatprep.subr.mxu0 0.0
    %754 = vmatpush1.msra.mxu0 0.0
    %755 = vmatprep.subr.mxu0 0.0
    %756 = vmatpush1.msra.mxu0 0.0
    %757 = vmatprep.subr.mxu0 0.0
    %758 = vmatpush1.msra.mxu0 0.0
    %759 = vmatprep.subr.mxu0 0.0
    %760 = vmatpush1.msra.mxu0 0.0
    %761 = vmatprep.subr.mxu0 0.0
    %762 = vmatpush1.msra.mxu0 0.0
    %763 = vmatprep.subr.mxu0 0.0
    %764 = vmatpush1.msra.mxu0 0.0
    %765 = vmatprep.subr.mxu0 0.0
    %766 = vmatpush1.msra.mxu0 0.0
    %767 = vmatprep.subr.mxu0 0.0
    %768 = vmatpush1.msra.mxu0 0.0
    %769 = vmatprep.subr.mxu0 0.0
    %770 = vmatpush1.msra.mxu0 0.0
    %771 = vmatprep.subr.mxu0 0.0
    %772 = vmatpush1.msra.mxu0 0.0
    %773 = vmatprep.subr.mxu0 0.0
    %774 = vmatpush1.msra.mxu0 0.0
    %775 = vmatprep.subr.mxu0 0.0
    %776 = vmatpush1.msra.mxu0 0.0
    %777 = vmatprep.subr.mxu0 0.0
    %778 = vmatpush1.msra.mxu0 0.0
    %779 = vmatprep.subr.mxu0 0.0
    %780 = vmatpush1.msra.mxu0 0.0
    %781 = vmatprep.subr.mxu0 0.0
    %782 = vmatpush1.msra.mxu0 0.0
    %783 = vmatprep.subr.mxu0 0.0
    %784 = vmatpush1.msra.mxu0 0.0
    %785 = vmatprep.subr.mxu0 0.0
    %786 = vmatpush1.msra.mxu0 0.0
    %787 = vmatprep.subr.mxu0 0.0
    %788 = vmatpush1.msra.mxu0 0.0
    %789 = vmatprep.subr.mxu0 0.0
    %790 = vmatpush1.msra.mxu0 0.0
    %791 = vmatprep.subr.mxu0 0.0
    %792 = vmatpush1.msra.mxu0 0.0
    %793 = vmatprep.subr.mxu0 0.0
    %794 = vmatpush1.msra.mxu0 0.0
    %795 = vmatprep.subr.mxu0 0.0
    %796 = vmatpush1.msra.mxu0 0.0
    %797 = vmatprep.subr.mxu0 0.0
    %798 = vmatpush1.msra.mxu0 0.0
    %799 = vmatprep.mubr.f32.mxu0 0.0
    %800 = vmatmul.mubr.f32.gmra.mrb[0].mxu0 %v733
    %v801 = vpop.f32.mrb[0].mxu0
    %v802 = vadd.f32 0.0, %v801
    %v803 = vpop.f32.mrb[0].mxu0
    %804 = vdwg.mxu0
    %v805 = vmax.f32 %v802, 0.0
    %v806 = vld [vmem:[%s2] sm:$0x3]
    %vm807 = vcmask 15360
    %v809 = vsel %vm807, %v805, 0
    %vm811 = vcmask 1041408
    %v813 = vsel %vm811, %v806, 0
    %815 = vmatprep.subr.mxu0 0.0
    %816 = vmatpush1.msra.mxu0 %v813
    %817 = vmatprep.subr.mxu0 0.0
    %818 = vmatpush1.msra.mxu0 0.0
    %819 = vmatprep.subr.mxu0 0.0
    %820 = vmatpush1.msra.mxu0 0.0
    %821 = vmatprep.subr.mxu0 0.0
    %822 = vmatpush1.msra.mxu0 0.0
    %823 = vmatprep.subr.mxu0 0.0
    %824 = vmatpush1.msra.mxu0 0.0
    %825 = vmatprep.subr.mxu0 0.0
    %826 = vmatpush1.msra.mxu0 0.0
    %827 = vmatprep.subr.mxu0 0.0
    %828 = vmatpush1.msra.mxu0 0.0
    %829 = vmatprep.subr.mxu0 0.0
    %830 = vmatpush1.msra.mxu0 0.0
    %831 = vmatprep.subr.mxu0 0.0
    %832 = vmatpush1.msra.mxu0 0.0
    %833 = vmatprep.subr.mxu0 0.0
    %834 = vmatpush1.msra.mxu0 0.0
    %835 = vmatprep.subr.mxu0 0.0
    %836 = vmatpush1.msra.mxu0 0.0
    %837 = vmatprep.subr.mxu0 0.0
    %838 = vmatpush1.msra.mxu0 0.0
    %839 = vmatprep.subr.mxu0 0.0
    %840 = vmatpush1.msra.mxu0 0.0
    %841 = vmatprep.subr.mxu0 0.0
    %842 = vmatpush1.msra.mxu0 0.0
    %843 = vmatprep.subr.mxu0 0.0
    %844 = vmatpush1.msra.mxu0 0.0
    %845 = vmatprep.subr.mxu0 0.0
    %846 = vmatpush1.msra.mxu0 0.0
    %847 = vmatprep.subr.mxu0 0.0
    %848 = vmatpush1.msra.mxu0 0.0
    %849 = vmatprep.subr.mxu0 0.0
    %850 = vmatpush1.msra.mxu0 0.0
    %851 = vmatprep.subr.mxu0 0.0
    %852 = vmatpush1.msra.mxu0 0.0
    %853 = vmatprep.subr.mxu0 0.0
    %854 = vmatpush1.msra.mxu0 0.0
    %855 = vmatprep.subr.mxu0 0.0
    %856 = vmatpush1.msra.mxu0 0.0
    %857 = vmatprep.subr.mxu0 0.0
    %858 = vmatpush1.msra.mxu0 0.0
    %859 = vmatprep.subr.mxu0 0.0
    %860 = vmatpush1.msra.mxu0 0.0
    %861 = vmatprep.subr.mxu0 0.0
    %862 = vmatpush1.msra.mxu0 0.0
    %863 = vmatprep.subr.mxu0 0.0
    %864 = vmatpush1.msra.mxu0 0.0
    %865 = vmatprep.subr.mxu0 0.0
    %866 = vmatpush1.msra.mxu0 0.0
    %867 = vmatprep.subr.mxu0 0.0
    %868 = vmatpush1.msra.mxu0 0.0
    %869 = vmatprep.subr.mxu0 0.0
    %870 = vmatpush1.msra.mxu0 0.0
    %871 = vmatprep.subr.mxu0 0.0
    %872 = vmatpush1.msra.mxu0 0.0
    %873 = vmatprep.subr.mxu0 0.0
    %874 = vmatpush1.msra.mxu0 0.0
    %875 = vmatprep.subr.mxu0 0.0
    %876 = vmatpush1.msra.mxu0 0.0
    %877 = vmatprep.subr.mxu0 0.0
    %878 = vmatpush1.msra.mxu0 0.0
    %879 = vmatprep.mubr.f32.mxu0 0.0
    %880 = vmatmul.mubr.f32.gmra.mrb[0].mxu0 %v809
    %v881 = vpop.f32.mrb[0].mxu0
    %v882 = vadd.f32 0.0, %v881
    %v883 = vpop.f32.mrb[0].mxu0
    %884 = vdwg.mxu0
    %v886 = vrot.slane %v882, 4
    %v888 = vadd.f32 %v882, %v886
    %v889 = vxor.u32 %v888, 2147483648
    %v890 = vmul.f32 %v889, 1.442695
    %v891 = vpow.pop %v890
    %v892 = vadd.f32 %v891, 1.0
    %v893 = vrcp.pop %v892
    %v894 = vmul.f32 1.0, %v893
    %v897 = vunpack.c.l.s4 1966171168
    %v898 = vunpack.c.0.s8 %v897
    %v899 = vlaneseq
    %v900 = vshrl.u32 %v899, 7
    %v901 = vsub.s32 %v898, %v900
    %v902 = vrot.slane %v894, %v901
    %v903 = vcombine.high %v902, %v902
    %v905 = vunpack.c.l.s4 1966171168
    %v906 = vunpack.c.0.s8 %v905
    %v907 = vlaneseq
    %v908 = vshrl.u32 %v907, 7
    %v909 = vsub.s32 %v906, %v908
    %v910 = vrot.slane %v902, %v909
    %v912 = vunpack.c.l.s4 1966171168
    %v913 = vunpack.c.0.s8 %v912
    %v914 = vlaneseq
    %v915 = vshrl.u32 %v914, 7
    %v916 = vsub.s32 %v913, %v915
    %v917 = vrot.slane %v903, %v916
    %v918 = vcombine.high %v910, %v910
    %v919 = vcombine.high %v917, %v917
    %v920 = vlaneseq
    %v921 = vshrl.u32 %v920, 7
    %v922 = vsub.s32 0, %v921
    %v923 = vrot.slane %v910, %v922
    %v924 = vlaneseq
    %v925 = vshrl.u32 %v924, 7
    %v926 = vsub.s32 0, %v925
    %v927 = vrot.slane %v917, %v926
    %v928 = vlaneseq
    %v929 = vshrl.u32 %v928, 7
    %v930 = vsub.s32 0, %v929
    %v931 = vrot.slane %v918, %v930
    %v932 = vlaneseq
    %v933 = vshrl.u32 %v932, 7
    %v934 = vsub.s32 0, %v933
    %v935 = vrot.slane %v919, %v934
    %v940 = vmul.f32 %v18, %v923
    %v941 = vmul.f32 %v19, %v923
    %v942 = vmul.f32 %v20, %v923
    %v943 = vmul.f32 %v21, %v923
    %v944 = vmul.f32 %v22, %v923
    %v945 = vmul.f32 %v23, %v923
    %v946 = vmul.f32 %v24, %v923
    %v947 = vmul.f32 %v25, %v923
    %v948 = vmul.f32 %v26, %v923
    %v949 = vmul.f32 %v27, %v923
    %v950 = vmul.f32 %v28, %v923
    %v951 = vmul.f32 %v29, %v923
    %v952 = vmul.f32 %v30, %v923
    %v953 = vmul.f32 %v31, %v923
    %v954 = vmul.f32 %v32, %v923
    %v955 = vmul.f32 %v33, %v923
    %v956 = vmul.f32 %v34, %v923
    %v957 = vmul.f32 %v35, %v923
    %v958 = vmul.f32 %v36, %v923
    %v959 = vmul.f32 %v37, %v923
    %v960 = vmul.f32 %v38, %v923
    %v961 = vmul.f32 %v39, %v923
    %v962 = vmul.f32 %v40, %v923
    %v963 = vmul.f32 %v41, %v923
    %v964 = vmul.f32 %v42, %v923
    %v965 = vmul.f32 %v43, %v923
    %v966 = vmul.f32 %v44, %v923
    %v967 = vmul.f32 %v45, %v923
    %v968 = vmul.f32 %v46, %v923
    %v969 = vmul.f32 %v47, %v923
    %v970 = vmul.f32 %v48, %v923
    %v971 = vmul.f32 %v49, %v923
    %v972 = vmul.f32 %v50, %v927
    %v973 = vmul.f32 %v51, %v927
    %v974 = vmul.f32 %v52, %v927
    %v975 = vmul.f32 %v53, %v927
    %v976 = vmul.f32 %v54, %v927
    %v977 = vmul.f32 %v55, %v927
    %v978 = vmul.f32 %v56, %v927
    %v979 = vmul.f32 %v57, %v927
    %v980 = vmul.f32 %v58, %v927
    %v981 = vmul.f32 %v59, %v927
    %v982 = vmul.f32 %v60, %v927
    %v983 = vmul.f32 %v61, %v927
    %v984 = vmul.f32 %v62, %v927
    %v985 = vmul.f32 %v63, %v927
    %v986 = vmul.f32 %v64, %v927
    %v987 = vmul.f32 %v65, %v927
    %v988 = vmul.f32 %v66, %v927
    %v989 = vmul.f32 %v67, %v927
    %v990 = vmul.f32 %v68, %v927
    %v991 = vmul.f32 %v69, %v927
    %v992 = vmul.f32 %v70, %v927
    %v993 = vmul.f32 %v71, %v927
    %v994 = vmul.f32 %v72, %v927
    %v995 = vmul.f32 %v73, %v927
    %v996 = vmul.f32 %v74, %v927
    %v997 = vmul.f32 %v75, %v927
    %v998 = vmul.f32 %v76, %v927
    %v999 = vmul.f32 %v77, %v927
    %v1000 = vmul.f32 %v78, %v927
    %v1001 = vmul.f32 %v79, %v927
    %v1002 = vmul.f32 %v80, %v927
    %v1003 = vmul.f32 %v81, %v927
    %v1004 = vmul.f32 %v82, %v931
    %v1005 = vmul.f32 %v83, %v931
    %v1006 = vmul.f32 %v84, %v931
    %v1007 = vmul.f32 %v85, %v931
    %v1008 = vmul.f32 %v86, %v931
    %v1009 = vmul.f32 %v87, %v931
    %v1010 = vmul.f32 %v88, %v931
    %v1011 = vmul.f32 %v89, %v931
    %v1012 = vmul.f32 %v90, %v931
    %v1013 = vmul.f32 %v91, %v931
    %v1014 = vmul.f32 %v92, %v931
    %v1015 = vmul.f32 %v93, %v931
    %v1016 = vmul.f32 %v94, %v931
    %v1017 = vmul.f32 %v95, %v931
    %v1018 = vmul.f32 %v96, %v931
    %v1019 = vmul.f32 %v97, %v931
    %v1020 = vmul.f32 %v98, %v931
    %v1021 = vmul.f32 %v99, %v931
    %v1022 = vmul.f32 %v100, %v931
    %v1023 = vmul.f32 %v101, %v931
    %v1024 = vmul.f32 %v102, %v931
    %v1025 = vmul.f32 %v103, %v931
    %v1026 = vmul.f32 %v104, %v931
    %v1027 = vmul.f32 %v105, %v931
    %v1028 = vmul.f32 %v106, %v931
    %v1029 = vmul.f32 %v107, %v931
    %v1030 = vmul.f32 %v108, %v931
    %v1031 = vmul.f32 %v109, %v931
    %v1032 = vmul.f32 %v110, %v931
    %v1033 = vmul.f32 %v111, %v931
    %v1034 = vmul.f32 %v112, %v931
    %v1035 = vmul.f32 %v113, %v931
    %v1036 = vmul.f32 %v114, %v935
    %v1037 = vmul.f32 %v115, %v935
    %v1038 = vmul.f32 %v116, %v935
    %v1039 = vmul.f32 %v117, %v935
    %v1040 = vmul.f32 %v118, %v935
    %v1041 = vmul.f32 %v119, %v935
    %v1042 = vmul.f32 %v120, %v935
    %v1043 = vmul.f32 %v121, %v935
    %v1044 = vmul.f32 %v122, %v935
    %v1045 = vmul.f32 %v123, %v935
    %v1046 = vmul.f32 %v124, %v935
    %v1047 = vmul.f32 %v125, %v935
    %v1048 = vmul.f32 %v126, %v935
    %v1049 = vmul.f32 %v127, %v935
    %v1050 = vmul.f32 %v128, %v935
    %v1051 = vmul.f32 %v129, %v935
    %v1052 = vmul.f32 %v130, %v935
    %v1053 = vmul.f32 %v131, %v935
    %v1054 = vmul.f32 %v132, %v935
    %v1055 = vmul.f32 %v133, %v935
    %v1056 = vmul.f32 %v134, %v935
    %v1057 = vmul.f32 %v135, %v935
    %v1058 = vmul.f32 %v136, %v935
    %v1059 = vmul.f32 %v137, %v935
    %v1060 = vmul.f32 %v138, %v935
    %v1061 = vmul.f32 %v139, %v935
    %v1062 = vmul.f32 %v140, %v935
    %v1063 = vmul.f32 %v141, %v935
    %v1064 = vmul.f32 %v142, %v935
    %v1065 = vmul.f32 %v143, %v935
    %v1066 = vmul.f32 %v144, %v935
    %v1067 = vmul.f32 %v145, %v935
    %v1068 = vsel %vm146, %v940, 0.0
    %1069 = vadd.xlane.f32.xlu0 %v1068
    %v1070 = vpop.xlane.xlu0 %1069
    %v1071 = vsel %vm146, %v941, 0.0
    %1072 = vadd.xlane.f32.xlu0 %v1071
    %v1073 = vpop.xlane.xlu0 %1072
    %v1074 = vsel %vm146, %v942, 0.0
    %1075 = vadd.xlane.f32.xlu0 %v1074
    %v1076 = vpop.xlane.xlu0 %1075
    %v1077 = vsel %vm146, %v943, 0.0
    %1078 = vadd.xlane.f32.xlu0 %v1077
    %v1079 = vpop.xlane.xlu0 %1078
    %v1080 = vsel %vm146, %v944, 0.0
    %1081 = vadd.xlane.f32.xlu0 %v1080
    %v1082 = vpop.xlane.xlu0 %1081
    %v1083 = vsel %vm146, %v945, 0.0
    %1084 = vadd.xlane.f32.xlu0 %v1083
    %v1085 = vpop.xlane.xlu0 %1084
    %v1086 = vsel %vm146, %v946, 0.0
    %1087 = vadd.xlane.f32.xlu0 %v1086
    %v1088 = vpop.xlane.xlu0 %1087
    %v1089 = vsel %vm146, %v947, 0.0
    %1090 = vadd.xlane.f32.xlu0 %v1089
    %v1091 = vpop.xlane.xlu0 %1090
    %v1092 = vsel %vm146, %v948, 0.0
    %1093 = vadd.xlane.f32.xlu0 %v1092
    %v1094 = vpop.xlane.xlu0 %1093
    %v1095 = vsel %vm146, %v949, 0.0
    %1096 = vadd.xlane.f32.xlu0 %v1095
    %v1097 = vpop.xlane.xlu0 %1096
    %v1098 = vsel %vm146, %v950, 0.0
    %1099 = vadd.xlane.f32.xlu0 %v1098
    %v1100 = vpop.xlane.xlu0 %1099
    %v1101 = vsel %vm146, %v951, 0.0
    %1102 = vadd.xlane.f32.xlu0 %v1101
    %v1103 = vpop.xlane.xlu0 %1102
    %v1104 = vsel %vm146, %v952, 0.0
    %1105 = vadd.xlane.f32.xlu0 %v1104
    %v1106 = vpop.xlane.xlu0 %1105
    %v1107 = vsel %vm146, %v953, 0.0
    %1108 = vadd.xlane.f32.xlu0 %v1107
    %v1109 = vpop.xlane.xlu0 %1108
    %v1110 = vsel %vm146, %v954, 0.0
    %1111 = vadd.xlane.f32.xlu0 %v1110
    %v1112 = vpop.xlane.xlu0 %1111
    %v1113 = vsel %vm146, %v955, 0.0
    %1114 = vadd.xlane.f32.xlu0 %v1113
    %v1115 = vpop.xlane.xlu0 %1114
    %v1116 = vsel %vm146, %v956, 0.0
    %1117 = vadd.xlane.f32.xlu0 %v1116
    %v1118 = vpop.xlane.xlu0 %1117
    %v1119 = vsel %vm146, %v957, 0.0
    %1120 = vadd.xlane.f32.xlu0 %v1119
    %v1121 = vpop.xlane.xlu0 %1120
    %v1122 = vsel %vm146, %v958, 0.0
    %1123 = vadd.xlane.f32.xlu0 %v1122
    %v1124 = vpop.xlane.xlu0 %1123
    %v1125 = vsel %vm146, %v959, 0.0
    %1126 = vadd.xlane.f32.xlu0 %v1125
    %v1127 = vpop.xlane.xlu0 %1126
    %v1128 = vsel %vm146, %v960, 0.0
    %1129 = vadd.xlane.f32.xlu0 %v1128
    %v1130 = vpop.xlane.xlu0 %1129
    %v1131 = vsel %vm146, %v961, 0.0
    %1132 = vadd.xlane.f32.xlu0 %v1131
    %v1133 = vpop.xlane.xlu0 %1132
    %v1134 = vsel %vm146, %v962, 0.0
    %1135 = vadd.xlane.f32.xlu0 %v1134
    %v1136 = vpop.xlane.xlu0 %1135
    %v1137 = vsel %vm146, %v963, 0.0
    %1138 = vadd.xlane.f32.xlu0 %v1137
    %v1139 = vpop.xlane.xlu0 %1138
    %v1140 = vsel %vm146, %v964, 0.0
    %1141 = vadd.xlane.f32.xlu0 %v1140
    %v1142 = vpop.xlane.xlu0 %1141
    %v1143 = vsel %vm146, %v965, 0.0
    %1144 = vadd.xlane.f32.xlu0 %v1143
    %v1145 = vpop.xlane.xlu0 %1144
    %v1146 = vsel %vm146, %v966, 0.0
    %1147 = vadd.xlane.f32.xlu0 %v1146
    %v1148 = vpop.xlane.xlu0 %1147
    %v1149 = vsel %vm146, %v967, 0.0
    %1150 = vadd.xlane.f32.xlu0 %v1149
    %v1151 = vpop.xlane.xlu0 %1150
    %v1152 = vsel %vm146, %v968, 0.0
    %1153 = vadd.xlane.f32.xlu0 %v1152
    %v1154 = vpop.xlane.xlu0 %1153
    %v1155 = vsel %vm146, %v969, 0.0
    %1156 = vadd.xlane.f32.xlu0 %v1155
    %v1157 = vpop.xlane.xlu0 %1156
    %v1158 = vsel %vm146, %v970, 0.0
    %1159 = vadd.xlane.f32.xlu0 %v1158
    %v1160 = vpop.xlane.xlu0 %1159
    %v1161 = vsel %vm146, %v971, 0.0
    %1162 = vadd.xlane.f32.xlu0 %v1161
    %v1163 = vpop.xlane.xlu0 %1162
    %v1164 = vsel %vm146, %v972, 0.0
    %1165 = vadd.xlane.f32.xlu0 %v1164
    %v1166 = vpop.xlane.xlu0 %1165
    %v1167 = vsel %vm146, %v973, 0.0
    %1168 = vadd.xlane.f32.xlu0 %v1167
    %v1169 = vpop.xlane.xlu0 %1168
    %v1170 = vsel %vm146, %v974, 0.0
    %1171 = vadd.xlane.f32.xlu0 %v1170
    %v1172 = vpop.xlane.xlu0 %1171
    %v1173 = vsel %vm146, %v975, 0.0
    %1174 = vadd.xlane.f32.xlu0 %v1173
    %v1175 = vpop.xlane.xlu0 %1174
    %v1176 = vsel %vm146, %v976, 0.0
    %1177 = vadd.xlane.f32.xlu0 %v1176
    %v1178 = vpop.xlane.xlu0 %1177
    %v1179 = vsel %vm146, %v977, 0.0
    %1180 = vadd.xlane.f32.xlu0 %v1179
    %v1181 = vpop.xlane.xlu0 %1180
    %v1182 = vsel %vm146, %v978, 0.0
    %1183 = vadd.xlane.f32.xlu0 %v1182
    %v1184 = vpop.xlane.xlu0 %1183
    %v1185 = vsel %vm146, %v979, 0.0
    %1186 = vadd.xlane.f32.xlu0 %v1185
    %v1187 = vpop.xlane.xlu0 %1186
    %v1188 = vsel %vm146, %v980, 0.0
    %1189 = vadd.xlane.f32.xlu0 %v1188
    %v1190 = vpop.xlane.xlu0 %1189
    %v1191 = vsel %vm146, %v981, 0.0
    %1192 = vadd.xlane.f32.xlu0 %v1191
    %v1193 = vpop.xlane.xlu0 %1192
    %v1194 = vsel %vm146, %v982, 0.0
    %1195 = vadd.xlane.f32.xlu0 %v1194
    %v1196 = vpop.xlane.xlu0 %1195
    %v1197 = vsel %vm146, %v983, 0.0
    %1198 = vadd.xlane.f32.xlu0 %v1197
    %v1199 = vpop.xlane.xlu0 %1198
    %v1200 = vsel %vm146, %v984, 0.0
    %1201 = vadd.xlane.f32.xlu0 %v1200
    %v1202 = vpop.xlane.xlu0 %1201
    %v1203 = vsel %vm146, %v985, 0.0
    %1204 = vadd.xlane.f32.xlu0 %v1203
    %v1205 = vpop.xlane.xlu0 %1204
    %v1206 = vsel %vm146, %v986, 0.0
    %1207 = vadd.xlane.f32.xlu0 %v1206
    %v1208 = vpop.xlane.xlu0 %1207
    %v1209 = vsel %vm146, %v987, 0.0
    %1210 = vadd.xlane.f32.xlu0 %v1209
    %v1211 = vpop.xlane.xlu0 %1210
    %v1212 = vsel %vm146, %v988, 0.0
    %1213 = vadd.xlane.f32.xlu0 %v1212
    %v1214 = vpop.xlane.xlu0 %1213
    %v1215 = vsel %vm146, %v989, 0.0
    %1216 = vadd.xlane.f32.xlu0 %v1215
    %v1217 = vpop.xlane.xlu0 %1216
    %v1218 = vsel %vm146, %v990, 0.0
    %1219 = vadd.xlane.f32.xlu0 %v1218
    %v1220 = vpop.xlane.xlu0 %1219
    %v1221 = vsel %vm146, %v991, 0.0
    %1222 = vadd.xlane.f32.xlu0 %v1221
    %v1223 = vpop.xlane.xlu0 %1222
    %v1224 = vsel %vm146, %v992, 0.0
    %1225 = vadd.xlane.f32.xlu0 %v1224
    %v1226 = vpop.xlane.xlu0 %1225
    %v1227 = vsel %vm146, %v993, 0.0
    %1228 = vadd.xlane.f32.xlu0 %v1227
    %v1229 = vpop.xlane.xlu0 %1228
    %v1230 = vsel %vm146, %v994, 0.0
    %1231 = vadd.xlane.f32.xlu0 %v1230
    %v1232 = vpop.xlane.xlu0 %1231
    %v1233 = vsel %vm146, %v995, 0.0
    %1234 = vadd.xlane.f32.xlu0 %v1233
    %v1235 = vpop.xlane.xlu0 %1234
    %v1236 = vsel %vm146, %v996, 0.0
    %1237 = vadd.xlane.f32.xlu0 %v1236
    %v1238 = vpop.xlane.xlu0 %1237
    %v1239 = vsel %vm146, %v997, 0.0
    %1240 = vadd.xlane.f32.xlu0 %v1239
    %v1241 = vpop.xlane.xlu0 %1240
    %v1242 = vsel %vm146, %v998, 0.0
    %1243 = vadd.xlane.f32.xlu0 %v1242
    %v1244 = vpop.xlane.xlu0 %1243
    %v1245 = vsel %vm146, %v999, 0.0
    %1246 = vadd.xlane.f32.xlu0 %v1245
    %v1247 = vpop.xlane.xlu0 %1246
    %v1248 = vsel %vm146, %v1000, 0.0
    %1249 = vadd.xlane.f32.xlu0 %v1248
    %v1250 = vpop.xlane.xlu0 %1249
    %v1251 = vsel %vm146, %v1001, 0.0
    %1252 = vadd.xlane.f32.xlu0 %v1251
    %v1253 = vpop.xlane.xlu0 %1252
    %v1254 = vsel %vm146, %v1002, 0.0
    %1255 = vadd.xlane.f32.xlu0 %v1254
    %v1256 = vpop.xlane.xlu0 %1255
    %v1257 = vsel %vm146, %v1003, 0.0
    %1258 = vadd.xlane.f32.xlu0 %v1257
    %v1259 = vpop.xlane.xlu0 %1258
    %v1260 = vsel %vm146, %v1004, 0.0
    %1261 = vadd.xlane.f32.xlu0 %v1260
    %v1262 = vpop.xlane.xlu0 %1261
    %v1263 = vsel %vm146, %v1005, 0.0
    %1264 = vadd.xlane.f32.xlu0 %v1263
    %v1265 = vpop.xlane.xlu0 %1264
    %v1266 = vsel %vm146, %v1006, 0.0
    %1267 = vadd.xlane.f32.xlu0 %v1266
    %v1268 = vpop.xlane.xlu0 %1267
    %v1269 = vsel %vm146, %v1007, 0.0
    %1270 = vadd.xlane.f32.xlu0 %v1269
    %v1271 = vpop.xlane.xlu0 %1270
    %v1272 = vsel %vm146, %v1008, 0.0
    %1273 = vadd.xlane.f32.xlu0 %v1272
    %v1274 = vpop.xlane.xlu0 %1273
    %v1275 = vsel %vm146, %v1009, 0.0
    %1276 = vadd.xlane.f32.xlu0 %v1275
    %v1277 = vpop.xlane.xlu0 %1276
    %v1278 = vsel %vm146, %v1010, 0.0
    %1279 = vadd.xlane.f32.xlu0 %v1278
    %v1280 = vpop.xlane.xlu0 %1279
    %v1281 = vsel %vm146, %v1011, 0.0
    %1282 = vadd.xlane.f32.xlu0 %v1281
    %v1283 = vpop.xlane.xlu0 %1282
    %v1284 = vsel %vm146, %v1012, 0.0
    %1285 = vadd.xlane.f32.xlu0 %v1284
    %v1286 = vpop.xlane.xlu0 %1285
    %v1287 = vsel %vm146, %v1013, 0.0
    %1288 = vadd.xlane.f32.xlu0 %v1287
    %v1289 = vpop.xlane.xlu0 %1288
    %v1290 = vsel %vm146, %v1014, 0.0
    %1291 = vadd.xlane.f32.xlu0 %v1290
    %v1292 = vpop.xlane.xlu0 %1291
    %v1293 = vsel %vm146, %v1015, 0.0
    %1294 = vadd.xlane.f32.xlu0 %v1293
    %v1295 = vpop.xlane.xlu0 %1294
    %v1296 = vsel %vm146, %v1016, 0.0
    %1297 = vadd.xlane.f32.xlu0 %v1296
    %v1298 = vpop.xlane.xlu0 %1297
    %v1299 = vsel %vm146, %v1017, 0.0
    %1300 = vadd.xlane.f32.xlu0 %v1299
    %v1301 = vpop.xlane.xlu0 %1300
    %v1302 = vsel %vm146, %v1018, 0.0
    %1303 = vadd.xlane.f32.xlu0 %v1302
    %v1304 = vpop.xlane.xlu0 %1303
    %v1305 = vsel %vm146, %v1019, 0.0
    %1306 = vadd.xlane.f32.xlu0 %v1305
    %v1307 = vpop.xlane.xlu0 %1306
    %v1308 = vsel %vm146, %v1020, 0.0
    %1309 = vadd.xlane.f32.xlu0 %v1308
    %v1310 = vpop.xlane.xlu0 %1309
    %v1311 = vsel %vm146, %v1021, 0.0
    %1312 = vadd.xlane.f32.xlu0 %v1311
    %v1313 = vpop.xlane.xlu0 %1312
    %v1314 = vsel %vm146, %v1022, 0.0
    %1315 = vadd.xlane.f32.xlu0 %v1314
    %v1316 = vpop.xlane.xlu0 %1315
    %v1317 = vsel %vm146, %v1023, 0.0
    %1318 = vadd.xlane.f32.xlu0 %v1317
    %v1319 = vpop.xlane.xlu0 %1318
    %v1320 = vsel %vm146, %v1024, 0.0
    %1321 = vadd.xlane.f32.xlu0 %v1320
    %v1322 = vpop.xlane.xlu0 %1321
    %v1323 = vsel %vm146, %v1025, 0.0
    %1324 = vadd.xlane.f32.xlu0 %v1323
    %v1325 = vpop.xlane.xlu0 %1324
    %v1326 = vsel %vm146, %v1026, 0.0
    %1327 = vadd.xlane.f32.xlu0 %v1326
    %v1328 = vpop.xlane.xlu0 %1327
    %v1329 = vsel %vm146, %v1027, 0.0
    %1330 = vadd.xlane.f32.xlu0 %v1329
    %v1331 = vpop.xlane.xlu0 %1330
    %v1332 = vsel %vm146, %v1028, 0.0
    %1333 = vadd.xlane.f32.xlu0 %v1332
    %v1334 = vpop.xlane.xlu0 %1333
    %v1335 = vsel %vm146, %v1029, 0.0
    %1336 = vadd.xlane.f32.xlu0 %v1335
    %v1337 = vpop.xlane.xlu0 %1336
    %v1338 = vsel %vm146, %v1030, 0.0
    %1339 = vadd.xlane.f32.xlu0 %v1338
    %v1340 = vpop.xlane.xlu0 %1339
    %v1341 = vsel %vm146, %v1031, 0.0
    %1342 = vadd.xlane.f32.xlu0 %v1341
    %v1343 = vpop.xlane.xlu0 %1342
    %v1344 = vsel %vm146, %v1032, 0.0
    %1345 = vadd.xlane.f32.xlu0 %v1344
    %v1346 = vpop.xlane.xlu0 %1345
    %v1347 = vsel %vm146, %v1033, 0.0
    %1348 = vadd.xlane.f32.xlu0 %v1347
    %v1349 = vpop.xlane.xlu0 %1348
    %v1350 = vsel %vm146, %v1034, 0.0
    %1351 = vadd.xlane.f32.xlu0 %v1350
    %v1352 = vpop.xlane.xlu0 %1351
    %v1353 = vsel %vm146, %v1035, 0.0
    %1354 = vadd.xlane.f32.xlu0 %v1353
    %v1355 = vpop.xlane.xlu0 %1354
    %v1356 = vsel %vm146, %v1036, 0.0
    %1357 = vadd.xlane.f32.xlu0 %v1356
    %v1358 = vpop.xlane.xlu0 %1357
    %v1359 = vsel %vm146, %v1037, 0.0
    %1360 = vadd.xlane.f32.xlu0 %v1359
    %v1361 = vpop.xlane.xlu0 %1360
    %v1362 = vsel %vm146, %v1038, 0.0
    %1363 = vadd.xlane.f32.xlu0 %v1362
    %v1364 = vpop.xlane.xlu0 %1363
    %v1365 = vsel %vm146, %v1039, 0.0
    %1366 = vadd.xlane.f32.xlu0 %v1365
    %v1367 = vpop.xlane.xlu0 %1366
    %v1368 = vsel %vm146, %v1040, 0.0
    %1369 = vadd.xlane.f32.xlu0 %v1368
    %v1370 = vpop.xlane.xlu0 %1369
    %v1371 = vsel %vm146, %v1041, 0.0
    %1372 = vadd.xlane.f32.xlu0 %v1371
    %v1373 = vpop.xlane.xlu0 %1372
    %v1374 = vsel %vm146, %v1042, 0.0
    %1375 = vadd.xlane.f32.xlu0 %v1374
    %v1376 = vpop.xlane.xlu0 %1375
    %v1377 = vsel %vm146, %v1043, 0.0
    %1378 = vadd.xlane.f32.xlu0 %v1377
    %v1379 = vpop.xlane.xlu0 %1378
    %v1380 = vsel %vm146, %v1044, 0.0
    %1381 = vadd.xlane.f32.xlu0 %v1380
    %v1382 = vpop.xlane.xlu0 %1381
    %v1383 = vsel %vm146, %v1045, 0.0
    %1384 = vadd.xlane.f32.xlu0 %v1383
    %v1385 = vpop.xlane.xlu0 %1384
    %v1386 = vsel %vm146, %v1046, 0.0
    %1387 = vadd.xlane.f32.xlu0 %v1386
    %v1388 = vpop.xlane.xlu0 %1387
    %v1389 = vsel %vm146, %v1047, 0.0
    %1390 = vadd.xlane.f32.xlu0 %v1389
    %v1391 = vpop.xlane.xlu0 %1390
    %v1392 = vsel %vm146, %v1048, 0.0
    %1393 = vadd.xlane.f32.xlu0 %v1392
    %v1394 = vpop.xlane.xlu0 %1393
    %v1395 = vsel %vm146, %v1049, 0.0
    %1396 = vadd.xlane.f32.xlu0 %v1395
    %v1397 = vpop.xlane.xlu0 %1396
    %v1398 = vsel %vm146, %v1050, 0.0
    %1399 = vadd.xlane.f32.xlu0 %v1398
    %v1400 = vpop.xlane.xlu0 %1399
    %v1401 = vsel %vm146, %v1051, 0.0
    %1402 = vadd.xlane.f32.xlu0 %v1401
    %v1403 = vpop.xlane.xlu0 %1402
    %v1404 = vsel %vm146, %v1052, 0.0
    %1405 = vadd.xlane.f32.xlu0 %v1404
    %v1406 = vpop.xlane.xlu0 %1405
    %v1407 = vsel %vm146, %v1053, 0.0
    %1408 = vadd.xlane.f32.xlu0 %v1407
    %v1409 = vpop.xlane.xlu0 %1408
    %v1410 = vsel %vm146, %v1054, 0.0
    %1411 = vadd.xlane.f32.xlu0 %v1410
    %v1412 = vpop.xlane.xlu0 %1411
    %v1413 = vsel %vm146, %v1055, 0.0
    %1414 = vadd.xlane.f32.xlu0 %v1413
    %v1415 = vpop.xlane.xlu0 %1414
    %v1416 = vsel %vm146, %v1056, 0.0
    %1417 = vadd.xlane.f32.xlu0 %v1416
    %v1418 = vpop.xlane.xlu0 %1417
    %v1419 = vsel %vm146, %v1057, 0.0
    %1420 = vadd.xlane.f32.xlu0 %v1419
    %v1421 = vpop.xlane.xlu0 %1420
    %v1422 = vsel %vm146, %v1058, 0.0
    %1423 = vadd.xlane.f32.xlu0 %v1422
    %v1424 = vpop.xlane.xlu0 %1423
    %v1425 = vsel %vm146, %v1059, 0.0
    %1426 = vadd.xlane.f32.xlu0 %v1425
    %v1427 = vpop.xlane.xlu0 %1426
    %v1428 = vsel %vm146, %v1060, 0.0
    %1429 = vadd.xlane.f32.xlu0 %v1428
    %v1430 = vpop.xlane.xlu0 %1429
    %v1431 = vsel %vm146, %v1061, 0.0
    %1432 = vadd.xlane.f32.xlu0 %v1431
    %v1433 = vpop.xlane.xlu0 %1432
    %v1434 = vsel %vm146, %v1062, 0.0
    %1435 = vadd.xlane.f32.xlu0 %v1434
    %v1436 = vpop.xlane.xlu0 %1435
    %v1437 = vsel %vm146, %v1063, 0.0
    %1438 = vadd.xlane.f32.xlu0 %v1437
    %v1439 = vpop.xlane.xlu0 %1438
    %v1440 = vsel %vm146, %v1064, 0.0
    %1441 = vadd.xlane.f32.xlu0 %v1440
    %v1442 = vpop.xlane.xlu0 %1441
    %v1443 = vsel %vm146, %v1065, 0.0
    %1444 = vadd.xlane.f32.xlu0 %v1443
    %v1445 = vpop.xlane.xlu0 %1444
    %v1446 = vsel %vm146, %v1066, 0.0
    %1447 = vadd.xlane.f32.xlu0 %v1446
    %v1448 = vpop.xlane.xlu0 %1447
    %v1449 = vsel %vm146, %v1067, 0.0
    %1450 = vadd.xlane.f32.xlu0 %v1449
    %v1451 = vpop.xlane.xlu0 %1450
    %v1452 = vrcp.pop 32.0
    %v1453 = vmul.f32 %v1070, %v1452
    %v1454 = vmul.f32 %v1073, %v1452
    %v1455 = vmul.f32 %v1076, %v1452
    %v1456 = vmul.f32 %v1079, %v1452
    %v1457 = vmul.f32 %v1082, %v1452
    %v1458 = vmul.f32 %v1085, %v1452
    %v1459 = vmul.f32 %v1088, %v1452
    %v1460 = vmul.f32 %v1091, %v1452
    %v1461 = vmul.f32 %v1094, %v1452
    %v1462 = vmul.f32 %v1097, %v1452
    %v1463 = vmul.f32 %v1100, %v1452
    %v1464 = vmul.f32 %v1103, %v1452
    %v1465 = vmul.f32 %v1106, %v1452
    %v1466 = vmul.f32 %v1109, %v1452
    %v1467 = vmul.f32 %v1112, %v1452
    %v1468 = vmul.f32 %v1115, %v1452
    %v1469 = vmul.f32 %v1118, %v1452
    %v1470 = vmul.f32 %v1121, %v1452
    %v1471 = vmul.f32 %v1124, %v1452
    %v1472 = vmul.f32 %v1127, %v1452
    %v1473 = vmul.f32 %v1130, %v1452
    %v1474 = vmul.f32 %v1133, %v1452
    %v1475 = vmul.f32 %v1136, %v1452
    %v1476 = vmul.f32 %v1139, %v1452
    %v1477 = vmul.f32 %v1142, %v1452
    %v1478 = vmul.f32 %v1145, %v1452
    %v1479 = vmul.f32 %v1148, %v1452
    %v1480 = vmul.f32 %v1151, %v1452
    %v1481 = vmul.f32 %v1154, %v1452
    %v1482 = vmul.f32 %v1157, %v1452
    %v1483 = vmul.f32 %v1160, %v1452
    %v1484 = vmul.f32 %v1163, %v1452
    %v1485 = vmul.f32 %v1166, %v1452
    %v1486 = vmul.f32 %v1169, %v1452
    %v1487 = vmul.f32 %v1172, %v1452
    %v1488 = vmul.f32 %v1175, %v1452
    %v1489 = vmul.f32 %v1178, %v1452
    %v1490 = vmul.f32 %v1181, %v1452
    %v1491 = vmul.f32 %v1184, %v1452
    %v1492 = vmul.f32 %v1187, %v1452
    %v1493 = vmul.f32 %v1190, %v1452
    %v1494 = vmul.f32 %v1193, %v1452
    %v1495 = vmul.f32 %v1196, %v1452
    %v1496 = vmul.f32 %v1199, %v1452
    %v1497 = vmul.f32 %v1202, %v1452
    %v1498 = vmul.f32 %v1205, %v1452
    %v1499 = vmul.f32 %v1208, %v1452
    %v1500 = vmul.f32 %v1211, %v1452
    %v1501 = vmul.f32 %v1214, %v1452
    %v1502 = vmul.f32 %v1217, %v1452
    %v1503 = vmul.f32 %v1220, %v1452
    %v1504 = vmul.f32 %v1223, %v1452
    %v1505 = vmul.f32 %v1226, %v1452
    %v1506 = vmul.f32 %v1229, %v1452
    %v1507 = vmul.f32 %v1232, %v1452
    %v1508 = vmul.f32 %v1235, %v1452
    %v1509 = vmul.f32 %v1238, %v1452
    %v1510 = vmul.f32 %v1241, %v1452
    %v1511 = vmul.f32 %v1244, %v1452
    %v1512 = vmul.f32 %v1247, %v1452
    %v1513 = vmul.f32 %v1250, %v1452
    %v1514 = vmul.f32 %v1253, %v1452
    %v1515 = vmul.f32 %v1256, %v1452
    %v1516 = vmul.f32 %v1259, %v1452
    %v1517 = vmul.f32 %v1262, %v1452
    %v1518 = vmul.f32 %v1265, %v1452
    %v1519 = vmul.f32 %v1268, %v1452
    %v1520 = vmul.f32 %v1271, %v1452
    %v1521 = vmul.f32 %v1274, %v1452
    %v1522 = vmul.f32 %v1277, %v1452
    %v1523 = vmul.f32 %v1280, %v1452
    %v1524 = vmul.f32 %v1283, %v1452
    %v1525 = vmul.f32 %v1286, %v1452
    %v1526 = vmul.f32 %v1289, %v1452
    %v1527 = vmul.f32 %v1292, %v1452
    %v1528 = vmul.f32 %v1295, %v1452
    %v1529 = vmul.f32 %v1298, %v1452
    %v1530 = vmul.f32 %v1301, %v1452
    %v1531 = vmul.f32 %v1304, %v1452
    %v1532 = vmul.f32 %v1307, %v1452
    %v1533 = vmul.f32 %v1310, %v1452
    %v1534 = vmul.f32 %v1313, %v1452
    %v1535 = vmul.f32 %v1316, %v1452
    %v1536 = vmul.f32 %v1319, %v1452
    %v1537 = vmul.f32 %v1322, %v1452
    %v1538 = vmul.f32 %v1325, %v1452
    %v1539 = vmul.f32 %v1328, %v1452
    %v1540 = vmul.f32 %v1331, %v1452
    %v1541 = vmul.f32 %v1334, %v1452
    %v1542 = vmul.f32 %v1337, %v1452
    %v1543 = vmul.f32 %v1340, %v1452
    %v1544 = vmul.f32 %v1343, %v1452
    %v1545 = vmul.f32 %v1346, %v1452
    %v1546 = vmul.f32 %v1349, %v1452
    %v1547 = vmul.f32 %v1352, %v1452
    %v1548 = vmul.f32 %v1355, %v1452
    %v1549 = vmul.f32 %v1358, %v1452
    %v1550 = vmul.f32 %v1361, %v1452
    %v1551 = vmul.f32 %v1364, %v1452
    %v1552 = vmul.f32 %v1367, %v1452
    %v1553 = vmul.f32 %v1370, %v1452
    %v1554 = vmul.f32 %v1373, %v1452
    %v1555 = vmul.f32 %v1376, %v1452
    %v1556 = vmul.f32 %v1379, %v1452
    %v1557 = vmul.f32 %v1382, %v1452
    %v1558 = vmul.f32 %v1385, %v1452
    %v1559 = vmul.f32 %v1388, %v1452
    %v1560 = vmul.f32 %v1391, %v1452
    %v1561 = vmul.f32 %v1394, %v1452
    %v1562 = vmul.f32 %v1397, %v1452
    %v1563 = vmul.f32 %v1400, %v1452
    %v1564 = vmul.f32 %v1403, %v1452
    %v1565 = vmul.f32 %v1406, %v1452
    %v1566 = vmul.f32 %v1409, %v1452
    %v1567 = vmul.f32 %v1412, %v1452
    %v1568 = vmul.f32 %v1415, %v1452
    %v1569 = vmul.f32 %v1418, %v1452
    %v1570 = vmul.f32 %v1421, %v1452
    %v1571 = vmul.f32 %v1424, %v1452
    %v1572 = vmul.f32 %v1427, %v1452
    %v1573 = vmul.f32 %v1430, %v1452
    %v1574 = vmul.f32 %v1433, %v1452
    %v1575 = vmul.f32 %v1436, %v1452
    %v1576 = vmul.f32 %v1439, %v1452
    %v1577 = vmul.f32 %v1442, %v1452
    %v1578 = vmul.f32 %v1445, %v1452
    %v1579 = vmul.f32 %v1448, %v1452
    %v1580 = vmul.f32 %v1451, %v1452
    %v1581 = vsel %vm146, %v940, -inf
    %1582 = vmax.xlane.f32.xlu0 %v1581
    %v1583 = vpop.xlane.xlu0 %1582
    %v1584 = vsel %vm146, %v941, -inf
    %1585 = vmax.xlane.f32.xlu0 %v1584
    %v1586 = vpop.xlane.xlu0 %1585
    %v1587 = vsel %vm146, %v942, -inf
    %1588 = vmax.xlane.f32.xlu0 %v1587
    %v1589 = vpop.xlane.xlu0 %1588
    %v1590 = vsel %vm146, %v943, -inf
    %1591 = vmax.xlane.f32.xlu0 %v1590
    %v1592 = vpop.xlane.xlu0 %1591
    %v1593 = vsel %vm146, %v944, -inf
    %1594 = vmax.xlane.f32.xlu0 %v1593
    %v1595 = vpop.xlane.xlu0 %1594
    %v1596 = vsel %vm146, %v945, -inf
    %1597 = vmax.xlane.f32.xlu0 %v1596
    %v1598 = vpop.xlane.xlu0 %1597
    %v1599 = vsel %vm146, %v946, -inf
    %1600 = vmax.xlane.f32.xlu0 %v1599
    %v1601 = vpop.xlane.xlu0 %1600
    %v1602 = vsel %vm146, %v947, -inf
    %1603 = vmax.xlane.f32.xlu0 %v1602
    %v1604 = vpop.xlane.xlu0 %1603
    %v1605 = vsel %vm146, %v948, -inf
    %1606 = vmax.xlane.f32.xlu0 %v1605
    %v1607 = vpop.xlane.xlu0 %1606
    %v1608 = vsel %vm146, %v949, -inf
    %1609 = vmax.xlane.f32.xlu0 %v1608
    %v1610 = vpop.xlane.xlu0 %1609
    %v1611 = vsel %vm146, %v950, -inf
    %1612 = vmax.xlane.f32.xlu0 %v1611
    %v1613 = vpop.xlane.xlu0 %1612
    %v1614 = vsel %vm146, %v951, -inf
    %1615 = vmax.xlane.f32.xlu0 %v1614
    %v1616 = vpop.xlane.xlu0 %1615
    %v1617 = vsel %vm146, %v952, -inf
    %1618 = vmax.xlane.f32.xlu0 %v1617
    %v1619 = vpop.xlane.xlu0 %1618
    %v1620 = vsel %vm146, %v953, -inf
    %1621 = vmax.xlane.f32.xlu0 %v1620
    %v1622 = vpop.xlane.xlu0 %1621
    %v1623 = vsel %vm146, %v954, -inf
    %1624 = vmax.xlane.f32.xlu0 %v1623
    %v1625 = vpop.xlane.xlu0 %1624
    %v1626 = vsel %vm146, %v955, -inf
    %1627 = vmax.xlane.f32.xlu0 %v1626
    %v1628 = vpop.xlane.xlu0 %1627
    %v1629 = vsel %vm146, %v956, -inf
    %1630 = vmax.xlane.f32.xlu0 %v1629
    %v1631 = vpop.xlane.xlu0 %1630
    %v1632 = vsel %vm146, %v957, -inf
    %1633 = vmax.xlane.f32.xlu0 %v1632
    %v1634 = vpop.xlane.xlu0 %1633
    %v1635 = vsel %vm146, %v958, -inf
    %1636 = vmax.xlane.f32.xlu0 %v1635
    %v1637 = vpop.xlane.xlu0 %1636
    %v1638 = vsel %vm146, %v959, -inf
    %1639 = vmax.xlane.f32.xlu0 %v1638
    %v1640 = vpop.xlane.xlu0 %1639
    %v1641 = vsel %vm146, %v960, -inf
    %1642 = vmax.xlane.f32.xlu0 %v1641
    %v1643 = vpop.xlane.xlu0 %1642
    %v1644 = vsel %vm146, %v961, -inf
    %1645 = vmax.xlane.f32.xlu0 %v1644
    %v1646 = vpop.xlane.xlu0 %1645
    %v1647 = vsel %vm146, %v962, -inf
    %1648 = vmax.xlane.f32.xlu0 %v1647
    %v1649 = vpop.xlane.xlu0 %1648
    %v1650 = vsel %vm146, %v963, -inf
    %1651 = vmax.xlane.f32.xlu0 %v1650
    %v1652 = vpop.xlane.xlu0 %1651
    %v1653 = vsel %vm146, %v964, -inf
    %1654 = vmax.xlane.f32.xlu0 %v1653
    %v1655 = vpop.xlane.xlu0 %1654
    %v1656 = vsel %vm146, %v965, -inf
    %1657 = vmax.xlane.f32.xlu0 %v1656
    %v1658 = vpop.xlane.xlu0 %1657
    %v1659 = vsel %vm146, %v966, -inf
    %1660 = vmax.xlane.f32.xlu0 %v1659
    %v1661 = vpop.xlane.xlu0 %1660
    %v1662 = vsel %vm146, %v967, -inf
    %1663 = vmax.xlane.f32.xlu0 %v1662
    %v1664 = vpop.xlane.xlu0 %1663
    %v1665 = vsel %vm146, %v968, -inf
    %1666 = vmax.xlane.f32.xlu0 %v1665
    %v1667 = vpop.xlane.xlu0 %1666
    %v1668 = vsel %vm146, %v969, -inf
    %1669 = vmax.xlane.f32.xlu0 %v1668
    %v1670 = vpop.xlane.xlu0 %1669
    %v1671 = vsel %vm146, %v970, -inf
    %1672 = vmax.xlane.f32.xlu0 %v1671
    %v1673 = vpop.xlane.xlu0 %1672
    %v1674 = vsel %vm146, %v971, -inf
    %1675 = vmax.xlane.f32.xlu0 %v1674
    %v1676 = vpop.xlane.xlu0 %1675
    %v1677 = vsel %vm146, %v972, -inf
    %1678 = vmax.xlane.f32.xlu0 %v1677
    %v1679 = vpop.xlane.xlu0 %1678
    %v1680 = vsel %vm146, %v973, -inf
    %1681 = vmax.xlane.f32.xlu0 %v1680
    %v1682 = vpop.xlane.xlu0 %1681
    %v1683 = vsel %vm146, %v974, -inf
    %1684 = vmax.xlane.f32.xlu0 %v1683
    %v1685 = vpop.xlane.xlu0 %1684
    %v1686 = vsel %vm146, %v975, -inf
    %1687 = vmax.xlane.f32.xlu0 %v1686
    %v1688 = vpop.xlane.xlu0 %1687
    %v1689 = vsel %vm146, %v976, -inf
    %1690 = vmax.xlane.f32.xlu0 %v1689
    %v1691 = vpop.xlane.xlu0 %1690
    %v1692 = vsel %vm146, %v977, -inf
    %1693 = vmax.xlane.f32.xlu0 %v1692
    %v1694 = vpop.xlane.xlu0 %1693
    %v1695 = vsel %vm146, %v978, -inf
    %1696 = vmax.xlane.f32.xlu0 %v1695
    %v1697 = vpop.xlane.xlu0 %1696
    %v1698 = vsel %vm146, %v979, -inf
    %1699 = vmax.xlane.f32.xlu0 %v1698
    %v1700 = vpop.xlane.xlu0 %1699
    %v1701 = vsel %vm146, %v980, -inf
    %1702 = vmax.xlane.f32.xlu0 %v1701
    %v1703 = vpop.xlane.xlu0 %1702
    %v1704 = vsel %vm146, %v981, -inf
    %1705 = vmax.xlane.f32.xlu0 %v1704
    %v1706 = vpop.xlane.xlu0 %1705
    %v1707 = vsel %vm146, %v982, -inf
    %1708 = vmax.xlane.f32.xlu0 %v1707
    %v1709 = vpop.xlane.xlu0 %1708
    %v1710 = vsel %vm146, %v983, -inf
    %1711 = vmax.xlane.f32.xlu0 %v1710
    %v1712 = vpop.xlane.xlu0 %1711
    %v1713 = vsel %vm146, %v984, -inf
    %1714 = vmax.xlane.f32.xlu0 %v1713
    %v1715 = vpop.xlane.xlu0 %1714
    %v1716 = vsel %vm146, %v985, -inf
    %1717 = vmax.xlane.f32.xlu0 %v1716
    %v1718 = vpop.xlane.xlu0 %1717
    %v1719 = vsel %vm146, %v986, -inf
    %1720 = vmax.xlane.f32.xlu0 %v1719
    %v1721 = vpop.xlane.xlu0 %1720
    %v1722 = vsel %vm146, %v987, -inf
    %1723 = vmax.xlane.f32.xlu0 %v1722
    %v1724 = vpop.xlane.xlu0 %1723
    %v1725 = vsel %vm146, %v988, -inf
    %1726 = vmax.xlane.f32.xlu0 %v1725
    %v1727 = vpop.xlane.xlu0 %1726
    %v1728 = vsel %vm146, %v989, -inf
    %1729 = vmax.xlane.f32.xlu0 %v1728
    %v1730 = vpop.xlane.xlu0 %1729
    %v1731 = vsel %vm146, %v990, -inf
    %1732 = vmax.xlane.f32.xlu0 %v1731
    %v1733 = vpop.xlane.xlu0 %1732
    %v1734 = vsel %vm146, %v991, -inf
    %1735 = vmax.xlane.f32.xlu0 %v1734
    %v1736 = vpop.xlane.xlu0 %1735
    %v1737 = vsel %vm146, %v992, -inf
    %1738 = vmax.xlane.f32.xlu0 %v1737
    %v1739 = vpop.xlane.xlu0 %1738
    %v1740 = vsel %vm146, %v993, -inf
    %1741 = vmax.xlane.f32.xlu0 %v1740
    %v1742 = vpop.xlane.xlu0 %1741
    %v1743 = vsel %vm146, %v994, -inf
    %1744 = vmax.xlane.f32.xlu0 %v1743
    %v1745 = vpop.xlane.xlu0 %1744
    %v1746 = vsel %vm146, %v995, -inf
    %1747 = vmax.xlane.f32.xlu0 %v1746
    %v1748 = vpop.xlane.xlu0 %1747
    %v1749 = vsel %vm146, %v996, -inf
    %1750 = vmax.xlane.f32.xlu0 %v1749
    %v1751 = vpop.xlane.xlu0 %1750
    %v1752 = vsel %vm146, %v997, -inf
    %1753 = vmax.xlane.f32.xlu0 %v1752
    %v1754 = vpop.xlane.xlu0 %1753
    %v1755 = vsel %vm146, %v998, -inf
    %1756 = vmax.xlane.f32.xlu0 %v1755
    %v1757 = vpop.xlane.xlu0 %1756
    %v1758 = vsel %vm146, %v999, -inf
    %1759 = vmax.xlane.f32.xlu0 %v1758
    %v1760 = vpop.xlane.xlu0 %1759
    %v1761 = vsel %vm146, %v1000, -inf
    %1762 = vmax.xlane.f32.xlu0 %v1761
    %v1763 = vpop.xlane.xlu0 %1762
    %v1764 = vsel %vm146, %v1001, -inf
    %1765 = vmax.xlane.f32.xlu0 %v1764
    %v1766 = vpop.xlane.xlu0 %1765
    %v1767 = vsel %vm146, %v1002, -inf
    %1768 = vmax.xlane.f32.xlu0 %v1767
    %v1769 = vpop.xlane.xlu0 %1768
    %v1770 = vsel %vm146, %v1003, -inf
    %1771 = vmax.xlane.f32.xlu0 %v1770
    %v1772 = vpop.xlane.xlu0 %1771
    %v1773 = vsel %vm146, %v1004, -inf
    %1774 = vmax.xlane.f32.xlu0 %v1773
    %v1775 = vpop.xlane.xlu0 %1774
    %v1776 = vsel %vm146, %v1005, -inf
    %1777 = vmax.xlane.f32.xlu0 %v1776
    %v1778 = vpop.xlane.xlu0 %1777
    %v1779 = vsel %vm146, %v1006, -inf
    %1780 = vmax.xlane.f32.xlu0 %v1779
    %v1781 = vpop.xlane.xlu0 %1780
    %v1782 = vsel %vm146, %v1007, -inf
    %1783 = vmax.xlane.f32.xlu0 %v1782
    %v1784 = vpop.xlane.xlu0 %1783
    %v1785 = vsel %vm146, %v1008, -inf
    %1786 = vmax.xlane.f32.xlu0 %v1785
    %v1787 = vpop.xlane.xlu0 %1786
    %v1788 = vsel %vm146, %v1009, -inf
    %1789 = vmax.xlane.f32.xlu0 %v1788
    %v1790 = vpop.xlane.xlu0 %1789
    %v1791 = vsel %vm146, %v1010, -inf
    %1792 = vmax.xlane.f32.xlu0 %v1791
    %v1793 = vpop.xlane.xlu0 %1792
    %v1794 = vsel %vm146, %v1011, -inf
    %1795 = vmax.xlane.f32.xlu0 %v1794
    %v1796 = vpop.xlane.xlu0 %1795
    %v1797 = vsel %vm146, %v1012, -inf
    %1798 = vmax.xlane.f32.xlu0 %v1797
    %v1799 = vpop.xlane.xlu0 %1798
    %v1800 = vsel %vm146, %v1013, -inf
    %1801 = vmax.xlane.f32.xlu0 %v1800
    %v1802 = vpop.xlane.xlu0 %1801
    %v1803 = vsel %vm146, %v1014, -inf
    %1804 = vmax.xlane.f32.xlu0 %v1803
    %v1805 = vpop.xlane.xlu0 %1804
    %v1806 = vsel %vm146, %v1015, -inf
    %1807 = vmax.xlane.f32.xlu0 %v1806
    %v1808 = vpop.xlane.xlu0 %1807
    %v1809 = vsel %vm146, %v1016, -inf
    %1810 = vmax.xlane.f32.xlu0 %v1809
    %v1811 = vpop.xlane.xlu0 %1810
    %v1812 = vsel %vm146, %v1017, -inf
    %1813 = vmax.xlane.f32.xlu0 %v1812
    %v1814 = vpop.xlane.xlu0 %1813
    %v1815 = vsel %vm146, %v1018, -inf
    %1816 = vmax.xlane.f32.xlu0 %v1815
    %v1817 = vpop.xlane.xlu0 %1816
    %v1818 = vsel %vm146, %v1019, -inf
    %1819 = vmax.xlane.f32.xlu0 %v1818
    %v1820 = vpop.xlane.xlu0 %1819
    %v1821 = vsel %vm146, %v1020, -inf
    %1822 = vmax.xlane.f32.xlu0 %v1821
    %v1823 = vpop.xlane.xlu0 %1822
    %v1824 = vsel %vm146, %v1021, -inf
    %1825 = vmax.xlane.f32.xlu0 %v1824
    %v1826 = vpop.xlane.xlu0 %1825
    %v1827 = vsel %vm146, %v1022, -inf
    %1828 = vmax.xlane.f32.xlu0 %v1827
    %v1829 = vpop.xlane.xlu0 %1828
    %v1830 = vsel %vm146, %v1023, -inf
    %1831 = vmax.xlane.f32.xlu0 %v1830
    %v1832 = vpop.xlane.xlu0 %1831
    %v1833 = vsel %vm146, %v1024, -inf
    %1834 = vmax.xlane.f32.xlu0 %v1833
    %v1835 = vpop.xlane.xlu0 %1834
    %v1836 = vsel %vm146, %v1025, -inf
    %1837 = vmax.xlane.f32.xlu0 %v1836
    %v1838 = vpop.xlane.xlu0 %1837
    %v1839 = vsel %vm146, %v1026, -inf
    %1840 = vmax.xlane.f32.xlu0 %v1839
    %v1841 = vpop.xlane.xlu0 %1840
    %v1842 = vsel %vm146, %v1027, -inf
    %1843 = vmax.xlane.f32.xlu0 %v1842
    %v1844 = vpop.xlane.xlu0 %1843
    %v1845 = vsel %vm146, %v1028, -inf
    %1846 = vmax.xlane.f32.xlu0 %v1845
    %v1847 = vpop.xlane.xlu0 %1846
    %v1848 = vsel %vm146, %v1029, -inf
    %1849 = vmax.xlane.f32.xlu0 %v1848
    %v1850 = vpop.xlane.xlu0 %1849
    %v1851 = vsel %vm146, %v1030, -inf
    %1852 = vmax.xlane.f32.xlu0 %v1851
    %v1853 = vpop.xlane.xlu0 %1852
    %v1854 = vsel %vm146, %v1031, -inf
    %1855 = vmax.xlane.f32.xlu0 %v1854
    %v1856 = vpop.xlane.xlu0 %1855
    %v1857 = vsel %vm146, %v1032, -inf
    %1858 = vmax.xlane.f32.xlu0 %v1857
    %v1859 = vpop.xlane.xlu0 %1858
    %v1860 = vsel %vm146, %v1033, -inf
    %1861 = vmax.xlane.f32.xlu0 %v1860
    %v1862 = vpop.xlane.xlu0 %1861
    %v1863 = vsel %vm146, %v1034, -inf
    %1864 = vmax.xlane.f32.xlu0 %v1863
    %v1865 = vpop.xlane.xlu0 %1864
    %v1866 = vsel %vm146, %v1035, -inf
    %1867 = vmax.xlane.f32.xlu0 %v1866
    %v1868 = vpop.xlane.xlu0 %1867
    %v1869 = vsel %vm146, %v1036, -inf
    %1870 = vmax.xlane.f32.xlu0 %v1869
    %v1871 = vpop.xlane.xlu0 %1870
    %v1872 = vsel %vm146, %v1037, -inf
    %1873 = vmax.xlane.f32.xlu0 %v1872
    %v1874 = vpop.xlane.xlu0 %1873
    %v1875 = vsel %vm146, %v1038, -inf
    %1876 = vmax.xlane.f32.xlu0 %v1875
    %v1877 = vpop.xlane.xlu0 %1876
    %v1878 = vsel %vm146, %v1039, -inf
    %1879 = vmax.xlane.f32.xlu0 %v1878
    %v1880 = vpop.xlane.xlu0 %1879
    %v1881 = vsel %vm146, %v1040, -inf
    %1882 = vmax.xlane.f32.xlu0 %v1881
    %v1883 = vpop.xlane.xlu0 %1882
    %v1884 = vsel %vm146, %v1041, -inf
    %1885 = vmax.xlane.f32.xlu0 %v1884
    %v1886 = vpop.xlane.xlu0 %1885
    %v1887 = vsel %vm146, %v1042, -inf
    %1888 = vmax.xlane.f32.xlu0 %v1887
    %v1889 = vpop.xlane.xlu0 %1888
    %v1890 = vsel %vm146, %v1043, -inf
    %1891 = vmax.xlane.f32.xlu0 %v1890
    %v1892 = vpop.xlane.xlu0 %1891
    %v1893 = vsel %vm146, %v1044, -inf
    %1894 = vmax.xlane.f32.xlu0 %v1893
    %v1895 = vpop.xlane.xlu0 %1894
    %v1896 = vsel %vm146, %v1045, -inf
    %1897 = vmax.xlane.f32.xlu0 %v1896
    %v1898 = vpop.xlane.xlu0 %1897
    %v1899 = vsel %vm146, %v1046, -inf
    %1900 = vmax.xlane.f32.xlu0 %v1899
    %v1901 = vpop.xlane.xlu0 %1900
    %v1902 = vsel %vm146, %v1047, -inf
    %1903 = vmax.xlane.f32.xlu0 %v1902
    %v1904 = vpop.xlane.xlu0 %1903
    %v1905 = vsel %vm146, %v1048, -inf
    %1906 = vmax.xlane.f32.xlu0 %v1905
    %v1907 = vpop.xlane.xlu0 %1906
    %v1908 = vsel %vm146, %v1049, -inf
    %1909 = vmax.xlane.f32.xlu0 %v1908
    %v1910 = vpop.xlane.xlu0 %1909
    %v1911 = vsel %vm146, %v1050, -inf
    %1912 = vmax.xlane.f32.xlu0 %v1911
    %v1913 = vpop.xlane.xlu0 %1912
    %v1914 = vsel %vm146, %v1051, -inf
    %1915 = vmax.xlane.f32.xlu0 %v1914
    %v1916 = vpop.xlane.xlu0 %1915
    %v1917 = vsel %vm146, %v1052, -inf
    %1918 = vmax.xlane.f32.xlu0 %v1917
    %v1919 = vpop.xlane.xlu0 %1918
    %v1920 = vsel %vm146, %v1053, -inf
    %1921 = vmax.xlane.f32.xlu0 %v1920
    %v1922 = vpop.xlane.xlu0 %1921
    %v1923 = vsel %vm146, %v1054, -inf
    %1924 = vmax.xlane.f32.xlu0 %v1923
    %v1925 = vpop.xlane.xlu0 %1924
    %v1926 = vsel %vm146, %v1055, -inf
    %1927 = vmax.xlane.f32.xlu0 %v1926
    %v1928 = vpop.xlane.xlu0 %1927
    %v1929 = vsel %vm146, %v1056, -inf
    %1930 = vmax.xlane.f32.xlu0 %v1929
    %v1931 = vpop.xlane.xlu0 %1930
    %v1932 = vsel %vm146, %v1057, -inf
    %1933 = vmax.xlane.f32.xlu0 %v1932
    %v1934 = vpop.xlane.xlu0 %1933
    %v1935 = vsel %vm146, %v1058, -inf
    %1936 = vmax.xlane.f32.xlu0 %v1935
    %v1937 = vpop.xlane.xlu0 %1936
    %v1938 = vsel %vm146, %v1059, -inf
    %1939 = vmax.xlane.f32.xlu0 %v1938
    %v1940 = vpop.xlane.xlu0 %1939
    %v1941 = vsel %vm146, %v1060, -inf
    %1942 = vmax.xlane.f32.xlu0 %v1941
    %v1943 = vpop.xlane.xlu0 %1942
    %v1944 = vsel %vm146, %v1061, -inf
    %1945 = vmax.xlane.f32.xlu0 %v1944
    %v1946 = vpop.xlane.xlu0 %1945
    %v1947 = vsel %vm146, %v1062, -inf
    %1948 = vmax.xlane.f32.xlu0 %v1947
    %v1949 = vpop.xlane.xlu0 %1948
    %v1950 = vsel %vm146, %v1063, -inf
    %1951 = vmax.xlane.f32.xlu0 %v1950
    %v1952 = vpop.xlane.xlu0 %1951
    %v1953 = vsel %vm146, %v1064, -inf
    %1954 = vmax.xlane.f32.xlu0 %v1953
    %v1955 = vpop.xlane.xlu0 %1954
    %v1956 = vsel %vm146, %v1065, -inf
    %1957 = vmax.xlane.f32.xlu0 %v1956
    %v1958 = vpop.xlane.xlu0 %1957
    %v1959 = vsel %vm146, %v1066, -inf
    %1960 = vmax.xlane.f32.xlu0 %v1959
    %v1961 = vpop.xlane.xlu0 %1960
    %v1962 = vsel %vm146, %v1067, -inf
    %1963 = vmax.xlane.f32.xlu0 %v1962
    %v1964 = vpop.xlane.xlu0 %1963
    %1965 = vst.msk [vmem:[#allocation2] sm:$0xff] %vm146, 0.0
    %1966 = vst.msk [vmem:[#allocation2 + $0x8] sm:$0xff] %vm146, 0.0
    %vm1967 = vcmask 259072
    %1968 = vst.msk [vmem:[#allocation2 + $0x10] sm:$0x3f] %vm1967, 0.0
    %1969 = vst.msk [vmem:[#allocation2 + $0x18] sm:$0xff] %vm146, 0.0
    %1970 = vst.msk [vmem:[#allocation2 + $0x20] sm:$0xff] %vm146, 0.0
    %1971 = vst.msk [vmem:[#allocation2 + $0x28] sm:$0x3f] %vm1967, 0.0
    %1972 = vst.msk [vmem:[#allocation2 + $0x30] sm:$0xff] %vm146, 0.0
    %1973 = vst.msk [vmem:[#allocation2 + $0x38] sm:$0xff] %vm146, 0.0
    %1974 = vst.msk [vmem:[#allocation2 + $0x40] sm:$0x3f] %vm1967, 0.0
    %1975 = vst.msk [vmem:[#allocation2 + $0x48] sm:$0xff] %vm146, 0.0
    %1976 = vst.msk [vmem:[#allocation2 + $0x50] sm:$0xff] %vm146, 0.0
    %1977 = vst.msk [vmem:[#allocation2 + $0x58] sm:$0x3f] %vm1967, 0.0
    %v2106 = vlaneseq
    %v2107 = vand.u32 %v2106, 127
    %v2108 = vlaneseq
    %v2109 = vshrl.u32 %v2108, 7
    %v2110 = vsub.s32 %v2107, %v2109
    %v2111 = vrot.slane %v1453, %v2110
    %v2112 = vadd.s32 %v2107, 4294967288
    %v2113 = vlaneseq
    %v2114 = vshrl.u32 %v2113, 7
    %v2115 = vsub.s32 %v2112, %v2114
    %v2116 = vrot.slane %v1454, %v2115
    %vm2117 = vcmask 130112
    %v2118 = vsel %vm2117, %v2116, %v2111
    %v2119 = vlaneseq
    %v2120 = vshrl.u32 %v2119, 7
    %v2121 = vsub.s32 %v2107, %v2120
    %v2122 = vrot.slane %v1455, %v2121
    %v2123 = vlaneseq
    %v2124 = vshrl.u32 %v2123, 7
    %v2125 = vsub.s32 %v2112, %v2124
    %v2126 = vrot.slane %v1456, %v2125
    %v2127 = vsel %vm2117, %v2126, %v2122
    %v2128 = vlaneseq
    %v2129 = vshrl.u32 %v2128, 7
    %v2130 = vsub.s32 %v2107, %v2129
    %v2131 = vrot.slane %v1457, %v2130
    %v2132 = vlaneseq
    %v2133 = vshrl.u32 %v2132, 7
    %v2134 = vsub.s32 %v2112, %v2133
    %v2135 = vrot.slane %v1458, %v2134
    %v2136 = vsel %vm2117, %v2135, %v2131
    %v2137 = vlaneseq
    %v2138 = vshrl.u32 %v2137, 7
    %v2139 = vsub.s32 %v2107, %v2138
    %v2140 = vrot.slane %v1459, %v2139
    %v2141 = vlaneseq
    %v2142 = vshrl.u32 %v2141, 7
    %v2143 = vsub.s32 %v2112, %v2142
    %v2144 = vrot.slane %v1460, %v2143
    %v2145 = vsel %vm2117, %v2144, %v2140
    %v2146 = vlaneseq
    %v2147 = vshrl.u32 %v2146, 7
    %v2148 = vsub.s32 %v2107, %v2147
    %v2149 = vrot.slane %v1461, %v2148
    %v2150 = vlaneseq
    %v2151 = vshrl.u32 %v2150, 7
    %v2152 = vsub.s32 %v2112, %v2151
    %v2153 = vrot.slane %v1462, %v2152
    %v2154 = vsel %vm2117, %v2153, %v2149
    %v2155 = vlaneseq
    %v2156 = vshrl.u32 %v2155, 7
    %v2157 = vsub.s32 %v2107, %v2156
    %v2158 = vrot.slane %v1463, %v2157
    %v2159 = vlaneseq
    %v2160 = vshrl.u32 %v2159, 7
    %v2161 = vsub.s32 %v2112, %v2160
    %v2162 = vrot.slane %v1464, %v2161
    %v2163 = vsel %vm2117, %v2162, %v2158
    %v2164 = vlaneseq
    %v2165 = vshrl.u32 %v2164, 7
    %v2166 = vsub.s32 %v2107, %v2165
    %v2167 = vrot.slane %v1465, %v2166
    %v2168 = vlaneseq
    %v2169 = vshrl.u32 %v2168, 7
    %v2170 = vsub.s32 %v2112, %v2169
    %v2171 = vrot.slane %v1466, %v2170
    %v2172 = vsel %vm2117, %v2171, %v2167
    %v2173 = vlaneseq
    %v2174 = vshrl.u32 %v2173, 7
    %v2175 = vsub.s32 %v2107, %v2174
    %v2176 = vrot.slane %v1467, %v2175
    %v2177 = vlaneseq
    %v2178 = vshrl.u32 %v2177, 7
    %v2179 = vsub.s32 %v2112, %v2178
    %v2180 = vrot.slane %v1468, %v2179
    %v2181 = vsel %vm2117, %v2180, %v2176
    %v2182 = vlaneseq
    %v2183 = vshrl.u32 %v2182, 7
    %v2184 = vsub.s32 %v2107, %v2183
    %v2185 = vrot.slane %v1469, %v2184
    %v2186 = vlaneseq
    %v2187 = vshrl.u32 %v2186, 7
    %v2188 = vsub.s32 %v2112, %v2187
    %v2189 = vrot.slane %v1470, %v2188
    %v2190 = vsel %vm2117, %v2189, %v2185
    %v2191 = vlaneseq
    %v2192 = vshrl.u32 %v2191, 7
    %v2193 = vsub.s32 %v2107, %v2192
    %v2194 = vrot.slane %v1471, %v2193
    %v2195 = vlaneseq
    %v2196 = vshrl.u32 %v2195, 7
    %v2197 = vsub.s32 %v2112, %v2196
    %v2198 = vrot.slane %v1472, %v2197
    %v2199 = vsel %vm2117, %v2198, %v2194
    %v2200 = vlaneseq
    %v2201 = vshrl.u32 %v2200, 7
    %v2202 = vsub.s32 %v2107, %v2201
    %v2203 = vrot.slane %v1473, %v2202
    %v2204 = vlaneseq
    %v2205 = vshrl.u32 %v2204, 7
    %v2206 = vsub.s32 %v2112, %v2205
    %v2207 = vrot.slane %v1474, %v2206
    %v2208 = vsel %vm2117, %v2207, %v2203
    %v2209 = vlaneseq
    %v2210 = vshrl.u32 %v2209, 7
    %v2211 = vsub.s32 %v2107, %v2210
    %v2212 = vrot.slane %v1475, %v2211
    %v2213 = vlaneseq
    %v2214 = vshrl.u32 %v2213, 7
    %v2215 = vsub.s32 %v2112, %v2214
    %v2216 = vrot.slane %v1476, %v2215
    %v2217 = vsel %vm2117, %v2216, %v2212
    %v2218 = vlaneseq
    %v2219 = vshrl.u32 %v2218, 7
    %v2220 = vsub.s32 %v2107, %v2219
    %v2221 = vrot.slane %v1477, %v2220
    %v2222 = vlaneseq
    %v2223 = vshrl.u32 %v2222, 7
    %v2224 = vsub.s32 %v2112, %v2223
    %v2225 = vrot.slane %v1478, %v2224
    %v2226 = vsel %vm2117, %v2225, %v2221
    %v2227 = vlaneseq
    %v2228 = vshrl.u32 %v2227, 7
    %v2229 = vsub.s32 %v2107, %v2228
    %v2230 = vrot.slane %v1479, %v2229
    %v2231 = vlaneseq
    %v2232 = vshrl.u32 %v2231, 7
    %v2233 = vsub.s32 %v2112, %v2232
    %v2234 = vrot.slane %v1480, %v2233
    %v2235 = vsel %vm2117, %v2234, %v2230
    %v2236 = vlaneseq
    %v2237 = vshrl.u32 %v2236, 7
    %v2238 = vsub.s32 %v2107, %v2237
    %v2239 = vrot.slane %v1481, %v2238
    %v2240 = vlaneseq
    %v2241 = vshrl.u32 %v2240, 7
    %v2242 = vsub.s32 %v2112, %v2241
    %v2243 = vrot.slane %v1482, %v2242
    %v2244 = vsel %vm2117, %v2243, %v2239
    %v2245 = vlaneseq
    %v2246 = vshrl.u32 %v2245, 7
    %v2247 = vsub.s32 %v2107, %v2246
    %v2248 = vrot.slane %v1483, %v2247
    %v2249 = vlaneseq
    %v2250 = vshrl.u32 %v2249, 7
    %v2251 = vsub.s32 %v2112, %v2250
    %v2252 = vrot.slane %v1484, %v2251
    %v2253 = vsel %vm2117, %v2252, %v2248
    %v2254 = vlaneseq
    %v2255 = vshrl.u32 %v2254, 7
    %v2256 = vsub.s32 %v2107, %v2255
    %v2257 = vrot.slane %v1485, %v2256
    %v2258 = vlaneseq
    %v2259 = vshrl.u32 %v2258, 7
    %v2260 = vsub.s32 %v2112, %v2259
    %v2261 = vrot.slane %v1486, %v2260
    %v2262 = vsel %vm2117, %v2261, %v2257
    %v2263 = vlaneseq
    %v2264 = vshrl.u32 %v2263, 7
    %v2265 = vsub.s32 %v2107, %v2264
    %v2266 = vrot.slane %v1487, %v2265
    %v2267 = vlaneseq
    %v2268 = vshrl.u32 %v2267, 7
    %v2269 = vsub.s32 %v2112, %v2268
    %v2270 = vrot.slane %v1488, %v2269
    %v2271 = vsel %vm2117, %v2270, %v2266
    %v2272 = vlaneseq
    %v2273 = vshrl.u32 %v2272, 7
    %v2274 = vsub.s32 %v2107, %v2273
    %v2275 = vrot.slane %v1489, %v2274
    %v2276 = vlaneseq
    %v2277 = vshrl.u32 %v2276, 7
    %v2278 = vsub.s32 %v2112, %v2277
    %v2279 = vrot.slane %v1490, %v2278
    %v2280 = vsel %vm2117, %v2279, %v2275
    %v2281 = vlaneseq
    %v2282 = vshrl.u32 %v2281, 7
    %v2283 = vsub.s32 %v2107, %v2282
    %v2284 = vrot.slane %v1491, %v2283
    %v2285 = vlaneseq
    %v2286 = vshrl.u32 %v2285, 7
    %v2287 = vsub.s32 %v2112, %v2286
    %v2288 = vrot.slane %v1492, %v2287
    %v2289 = vsel %vm2117, %v2288, %v2284
    %v2290 = vlaneseq
    %v2291 = vshrl.u32 %v2290, 7
    %v2292 = vsub.s32 %v2107, %v2291
    %v2293 = vrot.slane %v1493, %v2292
    %v2294 = vlaneseq
    %v2295 = vshrl.u32 %v2294, 7
    %v2296 = vsub.s32 %v2112, %v2295
    %v2297 = vrot.slane %v1494, %v2296
    %v2298 = vsel %vm2117, %v2297, %v2293
    %v2299 = vlaneseq
    %v2300 = vshrl.u32 %v2299, 7
    %v2301 = vsub.s32 %v2107, %v2300
    %v2302 = vrot.slane %v1495, %v2301
    %v2303 = vlaneseq
    %v2304 = vshrl.u32 %v2303, 7
    %v2305 = vsub.s32 %v2112, %v2304
    %v2306 = vrot.slane %v1496, %v2305
    %v2307 = vsel %vm2117, %v2306, %v2302
    %v2308 = vlaneseq
    %v2309 = vshrl.u32 %v2308, 7
    %v2310 = vsub.s32 %v2107, %v2309
    %v2311 = vrot.slane %v1497, %v2310
    %v2312 = vlaneseq
    %v2313 = vshrl.u32 %v2312, 7
    %v2314 = vsub.s32 %v2112, %v2313
    %v2315 = vrot.slane %v1498, %v2314
    %v2316 = vsel %vm2117, %v2315, %v2311
    %v2317 = vlaneseq
    %v2318 = vshrl.u32 %v2317, 7
    %v2319 = vsub.s32 %v2107, %v2318
    %v2320 = vrot.slane %v1499, %v2319
    %v2321 = vlaneseq
    %v2322 = vshrl.u32 %v2321, 7
    %v2323 = vsub.s32 %v2112, %v2322
    %v2324 = vrot.slane %v1500, %v2323
    %v2325 = vsel %vm2117, %v2324, %v2320
    %v2326 = vlaneseq
    %v2327 = vshrl.u32 %v2326, 7
    %v2328 = vsub.s32 %v2107, %v2327
    %v2329 = vrot.slane %v1501, %v2328
    %v2330 = vlaneseq
    %v2331 = vshrl.u32 %v2330, 7
    %v2332 = vsub.s32 %v2112, %v2331
    %v2333 = vrot.slane %v1502, %v2332
    %v2334 = vsel %vm2117, %v2333, %v2329
    %v2335 = vlaneseq
    %v2336 = vshrl.u32 %v2335, 7
    %v2337 = vsub.s32 %v2107, %v2336
    %v2338 = vrot.slane %v1503, %v2337
    %v2339 = vlaneseq
    %v2340 = vshrl.u32 %v2339, 7
    %v2341 = vsub.s32 %v2112, %v2340
    %v2342 = vrot.slane %v1504, %v2341
    %v2343 = vsel %vm2117, %v2342, %v2338
    %v2344 = vlaneseq
    %v2345 = vshrl.u32 %v2344, 7
    %v2346 = vsub.s32 %v2107, %v2345
    %v2347 = vrot.slane %v1505, %v2346
    %v2348 = vlaneseq
    %v2349 = vshrl.u32 %v2348, 7
    %v2350 = vsub.s32 %v2112, %v2349
    %v2351 = vrot.slane %v1506, %v2350
    %v2352 = vsel %vm2117, %v2351, %v2347
    %v2353 = vlaneseq
    %v2354 = vshrl.u32 %v2353, 7
    %v2355 = vsub.s32 %v2107, %v2354
    %v2356 = vrot.slane %v1507, %v2355
    %v2357 = vlaneseq
    %v2358 = vshrl.u32 %v2357, 7
    %v2359 = vsub.s32 %v2112, %v2358
    %v2360 = vrot.slane %v1508, %v2359
    %v2361 = vsel %vm2117, %v2360, %v2356
    %v2362 = vlaneseq
    %v2363 = vshrl.u32 %v2362, 7
    %v2364 = vsub.s32 %v2107, %v2363
    %v2365 = vrot.slane %v1509, %v2364
    %v2366 = vlaneseq
    %v2367 = vshrl.u32 %v2366, 7
    %v2368 = vsub.s32 %v2112, %v2367
    %v2369 = vrot.slane %v1510, %v2368
    %v2370 = vsel %vm2117, %v2369, %v2365
    %v2371 = vlaneseq
    %v2372 = vshrl.u32 %v2371, 7
    %v2373 = vsub.s32 %v2107, %v2372
    %v2374 = vrot.slane %v1511, %v2373
    %v2375 = vlaneseq
    %v2376 = vshrl.u32 %v2375, 7
    %v2377 = vsub.s32 %v2112, %v2376
    %v2378 = vrot.slane %v1512, %v2377
    %v2379 = vsel %vm2117, %v2378, %v2374
    %v2380 = vlaneseq
    %v2381 = vshrl.u32 %v2380, 7
    %v2382 = vsub.s32 %v2107, %v2381
    %v2383 = vrot.slane %v1513, %v2382
    %v2384 = vlaneseq
    %v2385 = vshrl.u32 %v2384, 7
    %v2386 = vsub.s32 %v2112, %v2385
    %v2387 = vrot.slane %v1514, %v2386
    %v2388 = vsel %vm2117, %v2387, %v2383
    %v2389 = vlaneseq
    %v2390 = vshrl.u32 %v2389, 7
    %v2391 = vsub.s32 %v2107, %v2390
    %v2392 = vrot.slane %v1515, %v2391
    %v2393 = vlaneseq
    %v2394 = vshrl.u32 %v2393, 7
    %v2395 = vsub.s32 %v2112, %v2394
    %v2396 = vrot.slane %v1516, %v2395
    %v2397 = vsel %vm2117, %v2396, %v2392
    %v2398 = vlaneseq
    %v2399 = vshrl.u32 %v2398, 7
    %v2400 = vsub.s32 %v2107, %v2399
    %v2401 = vrot.slane %v1517, %v2400
    %v2402 = vlaneseq
    %v2403 = vshrl.u32 %v2402, 7
    %v2404 = vsub.s32 %v2112, %v2403
    %v2405 = vrot.slane %v1518, %v2404
    %v2406 = vsel %vm2117, %v2405, %v2401
    %v2407 = vlaneseq
    %v2408 = vshrl.u32 %v2407, 7
    %v2409 = vsub.s32 %v2107, %v2408
    %v2410 = vrot.slane %v1519, %v2409
    %v2411 = vlaneseq
    %v2412 = vshrl.u32 %v2411, 7
    %v2413 = vsub.s32 %v2112, %v2412
    %v2414 = vrot.slane %v1520, %v2413
    %v2415 = vsel %vm2117, %v2414, %v2410
    %v2416 = vlaneseq
    %v2417 = vshrl.u32 %v2416, 7
    %v2418 = vsub.s32 %v2107, %v2417
    %v2419 = vrot.slane %v1521, %v2418
    %v2420 = vlaneseq
    %v2421 = vshrl.u32 %v2420, 7
    %v2422 = vsub.s32 %v2112, %v2421
    %v2423 = vrot.slane %v1522, %v2422
    %v2424 = vsel %vm2117, %v2423, %v2419
    %v2425 = vlaneseq
    %v2426 = vshrl.u32 %v2425, 7
    %v2427 = vsub.s32 %v2107, %v2426
    %v2428 = vrot.slane %v1523, %v2427
    %v2429 = vlaneseq
    %v2430 = vshrl.u32 %v2429, 7
    %v2431 = vsub.s32 %v2112, %v2430
    %v2432 = vrot.slane %v1524, %v2431
    %v2433 = vsel %vm2117, %v2432, %v2428
    %v2434 = vlaneseq
    %v2435 = vshrl.u32 %v2434, 7
    %v2436 = vsub.s32 %v2107, %v2435
    %v2437 = vrot.slane %v1525, %v2436
    %v2438 = vlaneseq
    %v2439 = vshrl.u32 %v2438, 7
    %v2440 = vsub.s32 %v2112, %v2439
    %v2441 = vrot.slane %v1526, %v2440
    %v2442 = vsel %vm2117, %v2441, %v2437
    %v2443 = vlaneseq
    %v2444 = vshrl.u32 %v2443, 7
    %v2445 = vsub.s32 %v2107, %v2444
    %v2446 = vrot.slane %v1527, %v2445
    %v2447 = vlaneseq
    %v2448 = vshrl.u32 %v2447, 7
    %v2449 = vsub.s32 %v2112, %v2448
    %v2450 = vrot.slane %v1528, %v2449
    %v2451 = vsel %vm2117, %v2450, %v2446
    %v2452 = vlaneseq
    %v2453 = vshrl.u32 %v2452, 7
    %v2454 = vsub.s32 %v2107, %v2453
    %v2455 = vrot.slane %v1529, %v2454
    %v2456 = vlaneseq
    %v2457 = vshrl.u32 %v2456, 7
    %v2458 = vsub.s32 %v2112, %v2457
    %v2459 = vrot.slane %v1530, %v2458
    %v2460 = vsel %vm2117, %v2459, %v2455
    %v2461 = vlaneseq
    %v2462 = vshrl.u32 %v2461, 7
    %v2463 = vsub.s32 %v2107, %v2462
    %v2464 = vrot.slane %v1531, %v2463
    %v2465 = vlaneseq
    %v2466 = vshrl.u32 %v2465, 7
    %v2467 = vsub.s32 %v2112, %v2466
    %v2468 = vrot.slane %v1532, %v2467
    %v2469 = vsel %vm2117, %v2468, %v2464
    %v2470 = vlaneseq
    %v2471 = vshrl.u32 %v2470, 7
    %v2472 = vsub.s32 %v2107, %v2471
    %v2473 = vrot.slane %v1533, %v2472
    %v2474 = vlaneseq
    %v2475 = vshrl.u32 %v2474, 7
    %v2476 = vsub.s32 %v2112, %v2475
    %v2477 = vrot.slane %v1534, %v2476
    %v2478 = vsel %vm2117, %v2477, %v2473
    %v2479 = vlaneseq
    %v2480 = vshrl.u32 %v2479, 7
    %v2481 = vsub.s32 %v2107, %v2480
    %v2482 = vrot.slane %v1535, %v2481
    %v2483 = vlaneseq
    %v2484 = vshrl.u32 %v2483, 7
    %v2485 = vsub.s32 %v2112, %v2484
    %v2486 = vrot.slane %v1536, %v2485
    %v2487 = vsel %vm2117, %v2486, %v2482
    %v2488 = vlaneseq
    %v2489 = vshrl.u32 %v2488, 7
    %v2490 = vsub.s32 %v2107, %v2489
    %v2491 = vrot.slane %v1537, %v2490
    %v2492 = vlaneseq
    %v2493 = vshrl.u32 %v2492, 7
    %v2494 = vsub.s32 %v2112, %v2493
    %v2495 = vrot.slane %v1538, %v2494
    %v2496 = vsel %vm2117, %v2495, %v2491
    %v2497 = vlaneseq
    %v2498 = vshrl.u32 %v2497, 7
    %v2499 = vsub.s32 %v2107, %v2498
    %v2500 = vrot.slane %v1539, %v2499
    %v2501 = vlaneseq
    %v2502 = vshrl.u32 %v2501, 7
    %v2503 = vsub.s32 %v2112, %v2502
    %v2504 = vrot.slane %v1540, %v2503
    %v2505 = vsel %vm2117, %v2504, %v2500
    %v2506 = vlaneseq
    %v2507 = vshrl.u32 %v2506, 7
    %v2508 = vsub.s32 %v2107, %v2507
    %v2509 = vrot.slane %v1541, %v2508
    %v2510 = vlaneseq
    %v2511 = vshrl.u32 %v2510, 7
    %v2512 = vsub.s32 %v2112, %v2511
    %v2513 = vrot.slane %v1542, %v2512
    %v2514 = vsel %vm2117, %v2513, %v2509
    %v2515 = vlaneseq
    %v2516 = vshrl.u32 %v2515, 7
    %v2517 = vsub.s32 %v2107, %v2516
    %v2518 = vrot.slane %v1543, %v2517
    %v2519 = vlaneseq
    %v2520 = vshrl.u32 %v2519, 7
    %v2521 = vsub.s32 %v2112, %v2520
    %v2522 = vrot.slane %v1544, %v2521
    %v2523 = vsel %vm2117, %v2522, %v2518
    %v2524 = vlaneseq
    %v2525 = vshrl.u32 %v2524, 7
    %v2526 = vsub.s32 %v2107, %v2525
    %v2527 = vrot.slane %v1545, %v2526
    %v2528 = vlaneseq
    %v2529 = vshrl.u32 %v2528, 7
    %v2530 = vsub.s32 %v2112, %v2529
    %v2531 = vrot.slane %v1546, %v2530
    %v2532 = vsel %vm2117, %v2531, %v2527
    %v2533 = vlaneseq
    %v2534 = vshrl.u32 %v2533, 7
    %v2535 = vsub.s32 %v2107, %v2534
    %v2536 = vrot.slane %v1547, %v2535
    %v2537 = vlaneseq
    %v2538 = vshrl.u32 %v2537, 7
    %v2539 = vsub.s32 %v2112, %v2538
    %v2540 = vrot.slane %v1548, %v2539
    %v2541 = vsel %vm2117, %v2540, %v2536
    %v2542 = vlaneseq
    %v2543 = vshrl.u32 %v2542, 7
    %v2544 = vsub.s32 %v2107, %v2543
    %v2545 = vrot.slane %v1549, %v2544
    %v2546 = vlaneseq
    %v2547 = vshrl.u32 %v2546, 7
    %v2548 = vsub.s32 %v2112, %v2547
    %v2549 = vrot.slane %v1550, %v2548
    %v2550 = vsel %vm2117, %v2549, %v2545
    %v2551 = vlaneseq
    %v2552 = vshrl.u32 %v2551, 7
    %v2553 = vsub.s32 %v2107, %v2552
    %v2554 = vrot.slane %v1551, %v2553
    %v2555 = vlaneseq
    %v2556 = vshrl.u32 %v2555, 7
    %v2557 = vsub.s32 %v2112, %v2556
    %v2558 = vrot.slane %v1552, %v2557
    %v2559 = vsel %vm2117, %v2558, %v2554
    %v2560 = vlaneseq
    %v2561 = vshrl.u32 %v2560, 7
    %v2562 = vsub.s32 %v2107, %v2561
    %v2563 = vrot.slane %v1553, %v2562
    %v2564 = vlaneseq
    %v2565 = vshrl.u32 %v2564, 7
    %v2566 = vsub.s32 %v2112, %v2565
    %v2567 = vrot.slane %v1554, %v2566
    %v2568 = vsel %vm2117, %v2567, %v2563
    %v2569 = vlaneseq
    %v2570 = vshrl.u32 %v2569, 7
    %v2571 = vsub.s32 %v2107, %v2570
    %v2572 = vrot.slane %v1555, %v2571
    %v2573 = vlaneseq
    %v2574 = vshrl.u32 %v2573, 7
    %v2575 = vsub.s32 %v2112, %v2574
    %v2576 = vrot.slane %v1556, %v2575
    %v2577 = vsel %vm2117, %v2576, %v2572
    %v2578 = vlaneseq
    %v2579 = vshrl.u32 %v2578, 7
    %v2580 = vsub.s32 %v2107, %v2579
    %v2581 = vrot.slane %v1557, %v2580
    %v2582 = vlaneseq
    %v2583 = vshrl.u32 %v2582, 7
    %v2584 = vsub.s32 %v2112, %v2583
    %v2585 = vrot.slane %v1558, %v2584
    %v2586 = vsel %vm2117, %v2585, %v2581
    %v2587 = vlaneseq
    %v2588 = vshrl.u32 %v2587, 7
    %v2589 = vsub.s32 %v2107, %v2588
    %v2590 = vrot.slane %v1559, %v2589
    %v2591 = vlaneseq
    %v2592 = vshrl.u32 %v2591, 7
    %v2593 = vsub.s32 %v2112, %v2592
    %v2594 = vrot.slane %v1560, %v2593
    %v2595 = vsel %vm2117, %v2594, %v2590
    %v2596 = vlaneseq
    %v2597 = vshrl.u32 %v2596, 7
    %v2598 = vsub.s32 %v2107, %v2597
    %v2599 = vrot.slane %v1561, %v2598
    %v2600 = vlaneseq
    %v2601 = vshrl.u32 %v2600, 7
    %v2602 = vsub.s32 %v2112, %v2601
    %v2603 = vrot.slane %v1562, %v2602
    %v2604 = vsel %vm2117, %v2603, %v2599
    %v2605 = vlaneseq
    %v2606 = vshrl.u32 %v2605, 7
    %v2607 = vsub.s32 %v2107, %v2606
    %v2608 = vrot.slane %v1563, %v2607
    %v2609 = vlaneseq
    %v2610 = vshrl.u32 %v2609, 7
    %v2611 = vsub.s32 %v2112, %v2610
    %v2612 = vrot.slane %v1564, %v2611
    %v2613 = vsel %vm2117, %v2612, %v2608
    %v2614 = vlaneseq
    %v2615 = vshrl.u32 %v2614, 7
    %v2616 = vsub.s32 %v2107, %v2615
    %v2617 = vrot.slane %v1565, %v2616
    %v2618 = vlaneseq
    %v2619 = vshrl.u32 %v2618, 7
    %v2620 = vsub.s32 %v2112, %v2619
    %v2621 = vrot.slane %v1566, %v2620
    %v2622 = vsel %vm2117, %v2621, %v2617
    %v2623 = vlaneseq
    %v2624 = vshrl.u32 %v2623, 7
    %v2625 = vsub.s32 %v2107, %v2624
    %v2626 = vrot.slane %v1567, %v2625
    %v2627 = vlaneseq
    %v2628 = vshrl.u32 %v2627, 7
    %v2629 = vsub.s32 %v2112, %v2628
    %v2630 = vrot.slane %v1568, %v2629
    %v2631 = vsel %vm2117, %v2630, %v2626
    %v2632 = vlaneseq
    %v2633 = vshrl.u32 %v2632, 7
    %v2634 = vsub.s32 %v2107, %v2633
    %v2635 = vrot.slane %v1569, %v2634
    %v2636 = vlaneseq
    %v2637 = vshrl.u32 %v2636, 7
    %v2638 = vsub.s32 %v2112, %v2637
    %v2639 = vrot.slane %v1570, %v2638
    %v2640 = vsel %vm2117, %v2639, %v2635
    %v2641 = vlaneseq
    %v2642 = vshrl.u32 %v2641, 7
    %v2643 = vsub.s32 %v2107, %v2642
    %v2644 = vrot.slane %v1571, %v2643
    %v2645 = vlaneseq
    %v2646 = vshrl.u32 %v2645, 7
    %v2647 = vsub.s32 %v2112, %v2646
    %v2648 = vrot.slane %v1572, %v2647
    %v2649 = vsel %vm2117, %v2648, %v2644
    %v2650 = vlaneseq
    %v2651 = vshrl.u32 %v2650, 7
    %v2652 = vsub.s32 %v2107, %v2651
    %v2653 = vrot.slane %v1573, %v2652
    %v2654 = vlaneseq
    %v2655 = vshrl.u32 %v2654, 7
    %v2656 = vsub.s32 %v2112, %v2655
    %v2657 = vrot.slane %v1574, %v2656
    %v2658 = vsel %vm2117, %v2657, %v2653
    %v2659 = vlaneseq
    %v2660 = vshrl.u32 %v2659, 7
    %v2661 = vsub.s32 %v2107, %v2660
    %v2662 = vrot.slane %v1575, %v2661
    %v2663 = vlaneseq
    %v2664 = vshrl.u32 %v2663, 7
    %v2665 = vsub.s32 %v2112, %v2664
    %v2666 = vrot.slane %v1576, %v2665
    %v2667 = vsel %vm2117, %v2666, %v2662
    %v2668 = vlaneseq
    %v2669 = vshrl.u32 %v2668, 7
    %v2670 = vsub.s32 %v2107, %v2669
    %v2671 = vrot.slane %v1577, %v2670
    %v2672 = vlaneseq
    %v2673 = vshrl.u32 %v2672, 7
    %v2674 = vsub.s32 %v2112, %v2673
    %v2675 = vrot.slane %v1578, %v2674
    %v2676 = vsel %vm2117, %v2675, %v2671
    %v2677 = vlaneseq
    %v2678 = vshrl.u32 %v2677, 7
    %v2679 = vsub.s32 %v2107, %v2678
    %v2680 = vrot.slane %v1579, %v2679
    %v2681 = vlaneseq
    %v2682 = vshrl.u32 %v2681, 7
    %v2683 = vsub.s32 %v2112, %v2682
    %v2684 = vrot.slane %v1580, %v2683
    %v2685 = vsel %vm2117, %v2684, %v2680
    %v2686 = vsel %vm708, %v2127, %v2118
    %v2687 = vsel %vm710, %v2136, %v2686
    %v2688 = vsel %vm712, %v2145, %v2687
    %vm2689 = vcmask 1044484
    %v2690 = vsel %vm2689, %v2154, %v2688
    %v2691 = vsel %vm719, %v2163, %v2690
    %v2692 = vsel %vm721, %v2172, %v2691
    %v2693 = vsel %vm723, %v2181, %v2692
    %v2694 = vsel %vm708, %v2199, %v2190
    %v2695 = vsel %vm710, %v2208, %v2694
    %v2696 = vsel %vm712, %v2217, %v2695
    %v2697 = vsel %vm2689, %v2226, %v2696
    %v2698 = vsel %vm719, %v2235, %v2697
    %v2699 = vsel %vm721, %v2244, %v2698
    %v2700 = vsel %vm723, %v2253, %v2699
    %v2701 = vsel %vm708, %v2271, %v2262
    %v2702 = vsel %vm710, %v2280, %v2701
    %v2703 = vsel %vm712, %v2289, %v2702
    %v2704 = vsel %vm2689, %v2298, %v2703
    %v2705 = vsel %vm719, %v2307, %v2704
    %v2706 = vsel %vm721, %v2316, %v2705
    %v2707 = vsel %vm723, %v2325, %v2706
    %v2708 = vsel %vm708, %v2343, %v2334
    %v2709 = vsel %vm710, %v2352, %v2708
    %v2710 = vsel %vm712, %v2361, %v2709
    %v2711 = vsel %vm2689, %v2370, %v2710
    %v2712 = vsel %vm719, %v2379, %v2711
    %v2713 = vsel %vm721, %v2388, %v2712
    %v2714 = vsel %vm723, %v2397, %v2713
    %v2715 = vsel %vm708, %v2415, %v2406
    %v2716 = vsel %vm710, %v2424, %v2715
    %v2717 = vsel %vm712, %v2433, %v2716
    %v2718 = vsel %vm2689, %v2442, %v2717
    %v2719 = vsel %vm719, %v2451, %v2718
    %v2720 = vsel %vm721, %v2460, %v2719
    %v2721 = vsel %vm723, %v2469, %v2720
    %v2722 = vsel %vm708, %v2487, %v2478
    %v2723 = vsel %vm710, %v2496, %v2722
    %v2724 = vsel %vm712, %v2505, %v2723
    %v2725 = vsel %vm2689, %v2514, %v2724
    %v2726 = vsel %vm719, %v2523, %v2725
    %v2727 = vsel %vm721, %v2532, %v2726
    %v2728 = vsel %vm723, %v2541, %v2727
    %v2729 = vsel %vm708, %v2559, %v2550
    %v2730 = vsel %vm710, %v2568, %v2729
    %v2731 = vsel %vm712, %v2577, %v2730
    %v2732 = vsel %vm2689, %v2586, %v2731
    %v2733 = vsel %vm719, %v2595, %v2732
    %v2734 = vsel %vm721, %v2604, %v2733
    %v2735 = vsel %vm723, %v2613, %v2734
    %v2736 = vsel %vm708, %v2631, %v2622
    %v2737 = vsel %vm710, %v2640, %v2736
    %v2738 = vsel %vm712, %v2649, %v2737
    %v2739 = vsel %vm2689, %v2658, %v2738
    %v2740 = vsel %vm719, %v2667, %v2739
    %v2741 = vsel %vm721, %v2676, %v2740
    %v2742 = vsel %vm723, %v2685, %v2741
    %v2879 = vadd.s32 %v2107, 4294967280
    %v2880 = vlaneseq
    %v2881 = vshrl.u32 %v2880, 7
    %v2882 = vsub.s32 %v2879, %v2881
    %v2883 = vrot.slane %v1583, %v2882
    %v2884 = vadd.s32 %v2107, 4294967272
    %v2885 = vlaneseq
    %v2886 = vshrl.u32 %v2885, 7
    %v2887 = vsub.s32 %v2884, %v2886
    %v2888 = vrot.slane %v1586, %v2887
    %vm2889 = vcmask 261312
    %v2890 = vsel %vm2889, %v2888, %v2883
    %v2891 = vlaneseq
    %v2892 = vshrl.u32 %v2891, 7
    %v2893 = vsub.s32 %v2879, %v2892
    %v2894 = vrot.slane %v1589, %v2893
    %v2895 = vlaneseq
    %v2896 = vshrl.u32 %v2895, 7
    %v2897 = vsub.s32 %v2884, %v2896
    %v2898 = vrot.slane %v1592, %v2897
    %v2899 = vsel %vm2889, %v2898, %v2894
    %v2900 = vlaneseq
    %v2901 = vshrl.u32 %v2900, 7
    %v2902 = vsub.s32 %v2879, %v2901
    %v2903 = vrot.slane %v1595, %v2902
    %v2904 = vlaneseq
    %v2905 = vshrl.u32 %v2904, 7
    %v2906 = vsub.s32 %v2884, %v2905
    %v2907 = vrot.slane %v1598, %v2906
    %v2908 = vsel %vm2889, %v2907, %v2903
    %v2909 = vlaneseq
    %v2910 = vshrl.u32 %v2909, 7
    %v2911 = vsub.s32 %v2879, %v2910
    %v2912 = vrot.slane %v1601, %v2911
    %v2913 = vlaneseq
    %v2914 = vshrl.u32 %v2913, 7
    %v2915 = vsub.s32 %v2884, %v2914
    %v2916 = vrot.slane %v1604, %v2915
    %v2917 = vsel %vm2889, %v2916, %v2912
    %v2918 = vlaneseq
    %v2919 = vshrl.u32 %v2918, 7
    %v2920 = vsub.s32 %v2879, %v2919
    %v2921 = vrot.slane %v1607, %v2920
    %v2922 = vlaneseq
    %v2923 = vshrl.u32 %v2922, 7
    %v2924 = vsub.s32 %v2884, %v2923
    %v2925 = vrot.slane %v1610, %v2924
    %v2926 = vsel %vm2889, %v2925, %v2921
    %v2927 = vlaneseq
    %v2928 = vshrl.u32 %v2927, 7
    %v2929 = vsub.s32 %v2879, %v2928
    %v2930 = vrot.slane %v1613, %v2929
    %v2931 = vlaneseq
    %v2932 = vshrl.u32 %v2931, 7
    %v2933 = vsub.s32 %v2884, %v2932
    %v2934 = vrot.slane %v1616, %v2933
    %v2935 = vsel %vm2889, %v2934, %v2930
    %v2936 = vlaneseq
    %v2937 = vshrl.u32 %v2936, 7
    %v2938 = vsub.s32 %v2879, %v2937
    %v2939 = vrot.slane %v1619, %v2938
    %v2940 = vlaneseq
    %v2941 = vshrl.u32 %v2940, 7
    %v2942 = vsub.s32 %v2884, %v2941
    %v2943 = vrot.slane %v1622, %v2942
    %v2944 = vsel %vm2889, %v2943, %v2939
    %v2945 = vlaneseq
    %v2946 = vshrl.u32 %v2945, 7
    %v2947 = vsub.s32 %v2879, %v2946
    %v2948 = vrot.slane %v1625, %v2947
    %v2949 = vlaneseq
    %v2950 = vshrl.u32 %v2949, 7
    %v2951 = vsub.s32 %v2884, %v2950
    %v2952 = vrot.slane %v1628, %v2951
    %v2953 = vsel %vm2889, %v2952, %v2948
    %v2954 = vlaneseq
    %v2955 = vshrl.u32 %v2954, 7
    %v2956 = vsub.s32 %v2879, %v2955
    %v2957 = vrot.slane %v1631, %v2956
    %v2958 = vlaneseq
    %v2959 = vshrl.u32 %v2958, 7
    %v2960 = vsub.s32 %v2884, %v2959
    %v2961 = vrot.slane %v1634, %v2960
    %v2962 = vsel %vm2889, %v2961, %v2957
    %v2963 = vlaneseq
    %v2964 = vshrl.u32 %v2963, 7
    %v2965 = vsub.s32 %v2879, %v2964
    %v2966 = vrot.slane %v1637, %v2965
    %v2967 = vlaneseq
    %v2968 = vshrl.u32 %v2967, 7
    %v2969 = vsub.s32 %v2884, %v2968
    %v2970 = vrot.slane %v1640, %v2969
    %v2971 = vsel %vm2889, %v2970, %v2966
    %v2972 = vlaneseq
    %v2973 = vshrl.u32 %v2972, 7
    %v2974 = vsub.s32 %v2879, %v2973
    %v2975 = vrot.slane %v1643, %v2974
    %v2976 = vlaneseq
    %v2977 = vshrl.u32 %v2976, 7
    %v2978 = vsub.s32 %v2884, %v2977
    %v2979 = vrot.slane %v1646, %v2978
    %v2980 = vsel %vm2889, %v2979, %v2975
    %v2981 = vlaneseq
    %v2982 = vshrl.u32 %v2981, 7
    %v2983 = vsub.s32 %v2879, %v2982
    %v2984 = vrot.slane %v1649, %v2983
    %v2985 = vlaneseq
    %v2986 = vshrl.u32 %v2985, 7
    %v2987 = vsub.s32 %v2884, %v2986
    %v2988 = vrot.slane %v1652, %v2987
    %v2989 = vsel %vm2889, %v2988, %v2984
    %v2990 = vlaneseq
    %v2991 = vshrl.u32 %v2990, 7
    %v2992 = vsub.s32 %v2879, %v2991
    %v2993 = vrot.slane %v1655, %v2992
    %v2994 = vlaneseq
    %v2995 = vshrl.u32 %v2994, 7
    %v2996 = vsub.s32 %v2884, %v2995
    %v2997 = vrot.slane %v1658, %v2996
    %v2998 = vsel %vm2889, %v2997, %v2993
    %v2999 = vlaneseq
    %v3000 = vshrl.u32 %v2999, 7
    %v3001 = vsub.s32 %v2879, %v3000
    %v3002 = vrot.slane %v1661, %v3001
    %v3003 = vlaneseq
    %v3004 = vshrl.u32 %v3003, 7
    %v3005 = vsub.s32 %v2884, %v3004
    %v3006 = vrot.slane %v1664, %v3005
    %v3007 = vsel %vm2889, %v3006, %v3002
    %v3008 = vlaneseq
    %v3009 = vshrl.u32 %v3008, 7
    %v3010 = vsub.s32 %v2879, %v3009
    %v3011 = vrot.slane %v1667, %v3010
    %v3012 = vlaneseq
    %v3013 = vshrl.u32 %v3012, 7
    %v3014 = vsub.s32 %v2884, %v3013
    %v3015 = vrot.slane %v1670, %v3014
    %v3016 = vsel %vm2889, %v3015, %v3011
    %v3017 = vlaneseq
    %v3018 = vshrl.u32 %v3017, 7
    %v3019 = vsub.s32 %v2879, %v3018
    %v3020 = vrot.slane %v1673, %v3019
    %v3021 = vlaneseq
    %v3022 = vshrl.u32 %v3021, 7
    %v3023 = vsub.s32 %v2884, %v3022
    %v3024 = vrot.slane %v1676, %v3023
    %v3025 = vsel %vm2889, %v3024, %v3020
    %v3026 = vlaneseq
    %v3027 = vshrl.u32 %v3026, 7
    %v3028 = vsub.s32 %v2879, %v3027
    %v3029 = vrot.slane %v1679, %v3028
    %v3030 = vlaneseq
    %v3031 = vshrl.u32 %v3030, 7
    %v3032 = vsub.s32 %v2884, %v3031
    %v3033 = vrot.slane %v1682, %v3032
    %v3034 = vsel %vm2889, %v3033, %v3029
    %v3035 = vlaneseq
    %v3036 = vshrl.u32 %v3035, 7
    %v3037 = vsub.s32 %v2879, %v3036
    %v3038 = vrot.slane %v1685, %v3037
    %v3039 = vlaneseq
    %v3040 = vshrl.u32 %v3039, 7
    %v3041 = vsub.s32 %v2884, %v3040
    %v3042 = vrot.slane %v1688, %v3041
    %v3043 = vsel %vm2889, %v3042, %v3038
    %v3044 = vlaneseq
    %v3045 = vshrl.u32 %v3044, 7
    %v3046 = vsub.s32 %v2879, %v3045
    %v3047 = vrot.slane %v1691, %v3046
    %v3048 = vlaneseq
    %v3049 = vshrl.u32 %v3048, 7
    %v3050 = vsub.s32 %v2884, %v3049
    %v3051 = vrot.slane %v1694, %v3050
    %v3052 = vsel %vm2889, %v3051, %v3047
    %v3053 = vlaneseq
    %v3054 = vshrl.u32 %v3053, 7
    %v3055 = vsub.s32 %v2879, %v3054
    %v3056 = vrot.slane %v1697, %v3055
    %v3057 = vlaneseq
    %v3058 = vshrl.u32 %v3057, 7
    %v3059 = vsub.s32 %v2884, %v3058
    %v3060 = vrot.slane %v1700, %v3059
    %v3061 = vsel %vm2889, %v3060, %v3056
    %v3062 = vlaneseq
    %v3063 = vshrl.u32 %v3062, 7
    %v3064 = vsub.s32 %v2879, %v3063
    %v3065 = vrot.slane %v1703, %v3064
    %v3066 = vlaneseq
    %v3067 = vshrl.u32 %v3066, 7
    %v3068 = vsub.s32 %v2884, %v3067
    %v3069 = vrot.slane %v1706, %v3068
    %v3070 = vsel %vm2889, %v3069, %v3065
    %v3071 = vlaneseq
    %v3072 = vshrl.u32 %v3071, 7
    %v3073 = vsub.s32 %v2879, %v3072
    %v3074 = vrot.slane %v1709, %v3073
    %v3075 = vlaneseq
    %v3076 = vshrl.u32 %v3075, 7
    %v3077 = vsub.s32 %v2884, %v3076
    %v3078 = vrot.slane %v1712, %v3077
    %v3079 = vsel %vm2889, %v3078, %v3074
    %v3080 = vlaneseq
    %v3081 = vshrl.u32 %v3080, 7
    %v3082 = vsub.s32 %v2879, %v3081
    %v3083 = vrot.slane %v1715, %v3082
    %v3084 = vlaneseq
    %v3085 = vshrl.u32 %v3084, 7
    %v3086 = vsub.s32 %v2884, %v3085
    %v3087 = vrot.slane %v1718, %v3086
    %v3088 = vsel %vm2889, %v3087, %v3083
    %v3089 = vlaneseq
    %v3090 = vshrl.u32 %v3089, 7
    %v3091 = vsub.s32 %v2879, %v3090
    %v3092 = vrot.slane %v1721, %v3091
    %v3093 = vlaneseq
    %v3094 = vshrl.u32 %v3093, 7
    %v3095 = vsub.s32 %v2884, %v3094
    %v3096 = vrot.slane %v1724, %v3095
    %v3097 = vsel %vm2889, %v3096, %v3092
    %v3098 = vlaneseq
    %v3099 = vshrl.u32 %v3098, 7
    %v3100 = vsub.s32 %v2879, %v3099
    %v3101 = vrot.slane %v1727, %v3100
    %v3102 = vlaneseq
    %v3103 = vshrl.u32 %v3102, 7
    %v3104 = vsub.s32 %v2884, %v3103
    %v3105 = vrot.slane %v1730, %v3104
    %v3106 = vsel %vm2889, %v3105, %v3101
    %v3107 = vlaneseq
    %v3108 = vshrl.u32 %v3107, 7
    %v3109 = vsub.s32 %v2879, %v3108
    %v3110 = vrot.slane %v1733, %v3109
    %v3111 = vlaneseq
    %v3112 = vshrl.u32 %v3111, 7
    %v3113 = vsub.s32 %v2884, %v3112
    %v3114 = vrot.slane %v1736, %v3113
    %v3115 = vsel %vm2889, %v3114, %v3110
    %v3116 = vlaneseq
    %v3117 = vshrl.u32 %v3116, 7
    %v3118 = vsub.s32 %v2879, %v3117
    %v3119 = vrot.slane %v1739, %v3118
    %v3120 = vlaneseq
    %v3121 = vshrl.u32 %v3120, 7
    %v3122 = vsub.s32 %v2884, %v3121
    %v3123 = vrot.slane %v1742, %v3122
    %v3124 = vsel %vm2889, %v3123, %v3119
    %v3125 = vlaneseq
    %v3126 = vshrl.u32 %v3125, 7
    %v3127 = vsub.s32 %v2879, %v3126
    %v3128 = vrot.slane %v1745, %v3127
    %v3129 = vlaneseq
    %v3130 = vshrl.u32 %v3129, 7
    %v3131 = vsub.s32 %v2884, %v3130
    %v3132 = vrot.slane %v1748, %v3131
    %v3133 = vsel %vm2889, %v3132, %v3128
    %v3134 = vlaneseq
    %v3135 = vshrl.u32 %v3134, 7
    %v3136 = vsub.s32 %v2879, %v3135
    %v3137 = vrot.slane %v1751, %v3136
    %v3138 = vlaneseq
    %v3139 = vshrl.u32 %v3138, 7
    %v3140 = vsub.s32 %v2884, %v3139
    %v3141 = vrot.slane %v1754, %v3140
    %v3142 = vsel %vm2889, %v3141, %v3137
    %v3143 = vlaneseq
    %v3144 = vshrl.u32 %v3143, 7
    %v3145 = vsub.s32 %v2879, %v3144
    %v3146 = vrot.slane %v1757, %v3145
    %v3147 = vlaneseq
    %v3148 = vshrl.u32 %v3147, 7
    %v3149 = vsub.s32 %v2884, %v3148
    %v3150 = vrot.slane %v1760, %v3149
    %v3151 = vsel %vm2889, %v3150, %v3146
    %v3152 = vlaneseq
    %v3153 = vshrl.u32 %v3152, 7
    %v3154 = vsub.s32 %v2879, %v3153
    %v3155 = vrot.slane %v1763, %v3154
    %v3156 = vlaneseq
    %v3157 = vshrl.u32 %v3156, 7
    %v3158 = vsub.s32 %v2884, %v3157
    %v3159 = vrot.slane %v1766, %v3158
    %v3160 = vsel %vm2889, %v3159, %v3155
    %v3161 = vlaneseq
    %v3162 = vshrl.u32 %v3161, 7
    %v3163 = vsub.s32 %v2879, %v3162
    %v3164 = vrot.slane %v1769, %v3163
    %v3165 = vlaneseq
    %v3166 = vshrl.u32 %v3165, 7
    %v3167 = vsub.s32 %v2884, %v3166
    %v3168 = vrot.slane %v1772, %v3167
    %v3169 = vsel %vm2889, %v3168, %v3164
    %v3170 = vlaneseq
    %v3171 = vshrl.u32 %v3170, 7
    %v3172 = vsub.s32 %v2879, %v3171
    %v3173 = vrot.slane %v1775, %v3172
    %v3174 = vlaneseq
    %v3175 = vshrl.u32 %v3174, 7
    %v3176 = vsub.s32 %v2884, %v3175
    %v3177 = vrot.slane %v1778, %v3176
    %v3178 = vsel %vm2889, %v3177, %v3173
    %v3179 = vlaneseq
    %v3180 = vshrl.u32 %v3179, 7
    %v3181 = vsub.s32 %v2879, %v3180
    %v3182 = vrot.slane %v1781, %v3181
    %v3183 = vlaneseq
    %v3184 = vshrl.u32 %v3183, 7
    %v3185 = vsub.s32 %v2884, %v3184
    %v3186 = vrot.slane %v1784, %v3185
    %v3187 = vsel %vm2889, %v3186, %v3182
    %v3188 = vlaneseq
    %v3189 = vshrl.u32 %v3188, 7
    %v3190 = vsub.s32 %v2879, %v3189
    %v3191 = vrot.slane %v1787, %v3190
    %v3192 = vlaneseq
    %v3193 = vshrl.u32 %v3192, 7
    %v3194 = vsub.s32 %v2884, %v3193
    %v3195 = vrot.slane %v1790, %v3194
    %v3196 = vsel %vm2889, %v3195, %v3191
    %v3197 = vlaneseq
    %v3198 = vshrl.u32 %v3197, 7
    %v3199 = vsub.s32 %v2879, %v3198
    %v3200 = vrot.slane %v1793, %v3199
    %v3201 = vlaneseq
    %v3202 = vshrl.u32 %v3201, 7
    %v3203 = vsub.s32 %v2884, %v3202
    %v3204 = vrot.slane %v1796, %v3203
    %v3205 = vsel %vm2889, %v3204, %v3200
    %v3206 = vlaneseq
    %v3207 = vshrl.u32 %v3206, 7
    %v3208 = vsub.s32 %v2879, %v3207
    %v3209 = vrot.slane %v1799, %v3208
    %v3210 = vlaneseq
    %v3211 = vshrl.u32 %v3210, 7
    %v3212 = vsub.s32 %v2884, %v3211
    %v3213 = vrot.slane %v1802, %v3212
    %v3214 = vsel %vm2889, %v3213, %v3209
    %v3215 = vlaneseq
    %v3216 = vshrl.u32 %v3215, 7
    %v3217 = vsub.s32 %v2879, %v3216
    %v3218 = vrot.slane %v1805, %v3217
    %v3219 = vlaneseq
    %v3220 = vshrl.u32 %v3219, 7
    %v3221 = vsub.s32 %v2884, %v3220
    %v3222 = vrot.slane %v1808, %v3221
    %v3223 = vsel %vm2889, %v3222, %v3218
    %v3224 = vlaneseq
    %v3225 = vshrl.u32 %v3224, 7
    %v3226 = vsub.s32 %v2879, %v3225
    %v3227 = vrot.slane %v1811, %v3226
    %v3228 = vlaneseq
    %v3229 = vshrl.u32 %v3228, 7
    %v3230 = vsub.s32 %v2884, %v3229
    %v3231 = vrot.slane %v1814, %v3230
    %v3232 = vsel %vm2889, %v3231, %v3227
    %v3233 = vlaneseq
    %v3234 = vshrl.u32 %v3233, 7
    %v3235 = vsub.s32 %v2879, %v3234
    %v3236 = vrot.slane %v1817, %v3235
    %v3237 = vlaneseq
    %v3238 = vshrl.u32 %v3237, 7
    %v3239 = vsub.s32 %v2884, %v3238
    %v3240 = vrot.slane %v1820, %v3239
    %v3241 = vsel %vm2889, %v3240, %v3236
    %v3242 = vlaneseq
    %v3243 = vshrl.u32 %v3242, 7
    %v3244 = vsub.s32 %v2879, %v3243
    %v3245 = vrot.slane %v1823, %v3244
    %v3246 = vlaneseq
    %v3247 = vshrl.u32 %v3246, 7
    %v3248 = vsub.s32 %v2884, %v3247
    %v3249 = vrot.slane %v1826, %v3248
    %v3250 = vsel %vm2889, %v3249, %v3245
    %v3251 = vlaneseq
    %v3252 = vshrl.u32 %v3251, 7
    %v3253 = vsub.s32 %v2879, %v3252
    %v3254 = vrot.slane %v1829, %v3253
    %v3255 = vlaneseq
    %v3256 = vshrl.u32 %v3255, 7
    %v3257 = vsub.s32 %v2884, %v3256
    %v3258 = vrot.slane %v1832, %v3257
    %v3259 = vsel %vm2889, %v3258, %v3254
    %v3260 = vlaneseq
    %v3261 = vshrl.u32 %v3260, 7
    %v3262 = vsub.s32 %v2879, %v3261
    %v3263 = vrot.slane %v1835, %v3262
    %v3264 = vlaneseq
    %v3265 = vshrl.u32 %v3264, 7
    %v3266 = vsub.s32 %v2884, %v3265
    %v3267 = vrot.slane %v1838, %v3266
    %v3268 = vsel %vm2889, %v3267, %v3263
    %v3269 = vlaneseq
    %v3270 = vshrl.u32 %v3269, 7
    %v3271 = vsub.s32 %v2879, %v3270
    %v3272 = vrot.slane %v1841, %v3271
    %v3273 = vlaneseq
    %v3274 = vshrl.u32 %v3273, 7
    %v3275 = vsub.s32 %v2884, %v3274
    %v3276 = vrot.slane %v1844, %v3275
    %v3277 = vsel %vm2889, %v3276, %v3272
    %v3278 = vlaneseq
    %v3279 = vshrl.u32 %v3278, 7
    %v3280 = vsub.s32 %v2879, %v3279
    %v3281 = vrot.slane %v1847, %v3280
    %v3282 = vlaneseq
    %v3283 = vshrl.u32 %v3282, 7
    %v3284 = vsub.s32 %v2884, %v3283
    %v3285 = vrot.slane %v1850, %v3284
    %v3286 = vsel %vm2889, %v3285, %v3281
    %v3287 = vlaneseq
    %v3288 = vshrl.u32 %v3287, 7
    %v3289 = vsub.s32 %v2879, %v3288
    %v3290 = vrot.slane %v1853, %v3289
    %v3291 = vlaneseq
    %v3292 = vshrl.u32 %v3291, 7
    %v3293 = vsub.s32 %v2884, %v3292
    %v3294 = vrot.slane %v1856, %v3293
    %v3295 = vsel %vm2889, %v3294, %v3290
    %v3296 = vlaneseq
    %v3297 = vshrl.u32 %v3296, 7
    %v3298 = vsub.s32 %v2879, %v3297
    %v3299 = vrot.slane %v1859, %v3298
    %v3300 = vlaneseq
    %v3301 = vshrl.u32 %v3300, 7
    %v3302 = vsub.s32 %v2884, %v3301
    %v3303 = vrot.slane %v1862, %v3302
    %v3304 = vsel %vm2889, %v3303, %v3299
    %v3305 = vlaneseq
    %v3306 = vshrl.u32 %v3305, 7
    %v3307 = vsub.s32 %v2879, %v3306
    %v3308 = vrot.slane %v1865, %v3307
    %v3309 = vlaneseq
    %v3310 = vshrl.u32 %v3309, 7
    %v3311 = vsub.s32 %v2884, %v3310
    %v3312 = vrot.slane %v1868, %v3311
    %v3313 = vsel %vm2889, %v3312, %v3308
    %v3314 = vlaneseq
    %v3315 = vshrl.u32 %v3314, 7
    %v3316 = vsub.s32 %v2879, %v3315
    %v3317 = vrot.slane %v1871, %v3316
    %v3318 = vlaneseq
    %v3319 = vshrl.u32 %v3318, 7
    %v3320 = vsub.s32 %v2884, %v3319
    %v3321 = vrot.slane %v1874, %v3320
    %v3322 = vsel %vm2889, %v3321, %v3317
    %v3323 = vlaneseq
    %v3324 = vshrl.u32 %v3323, 7
    %v3325 = vsub.s32 %v2879, %v3324
    %v3326 = vrot.slane %v1877, %v3325
    %v3327 = vlaneseq
    %v3328 = vshrl.u32 %v3327, 7
    %v3329 = vsub.s32 %v2884, %v3328
    %v3330 = vrot.slane %v1880, %v3329
    %v3331 = vsel %vm2889, %v3330, %v3326
    %v3332 = vlaneseq
    %v3333 = vshrl.u32 %v3332, 7
    %v3334 = vsub.s32 %v2879, %v3333
    %v3335 = vrot.slane %v1883, %v3334
    %v3336 = vlaneseq
    %v3337 = vshrl.u32 %v3336, 7
    %v3338 = vsub.s32 %v2884, %v3337
    %v3339 = vrot.slane %v1886, %v3338
    %v3340 = vsel %vm2889, %v3339, %v3335
    %v3341 = vlaneseq
    %v3342 = vshrl.u32 %v3341, 7
    %v3343 = vsub.s32 %v2879, %v3342
    %v3344 = vrot.slane %v1889, %v3343
    %v3345 = vlaneseq
    %v3346 = vshrl.u32 %v3345, 7
    %v3347 = vsub.s32 %v2884, %v3346
    %v3348 = vrot.slane %v1892, %v3347
    %v3349 = vsel %vm2889, %v3348, %v3344
    %v3350 = vlaneseq
    %v3351 = vshrl.u32 %v3350, 7
    %v3352 = vsub.s32 %v2879, %v3351
    %v3353 = vrot.slane %v1895, %v3352
    %v3354 = vlaneseq
    %v3355 = vshrl.u32 %v3354, 7
    %v3356 = vsub.s32 %v2884, %v3355
    %v3357 = vrot.slane %v1898, %v3356
    %v3358 = vsel %vm2889, %v3357, %v3353
    %v3359 = vlaneseq
    %v3360 = vshrl.u32 %v3359, 7
    %v3361 = vsub.s32 %v2879, %v3360
    %v3362 = vrot.slane %v1901, %v3361
    %v3363 = vlaneseq
    %v3364 = vshrl.u32 %v3363, 7
    %v3365 = vsub.s32 %v2884, %v3364
    %v3366 = vrot.slane %v1904, %v3365
    %v3367 = vsel %vm2889, %v3366, %v3362
    %v3368 = vlaneseq
    %v3369 = vshrl.u32 %v3368, 7
    %v3370 = vsub.s32 %v2879, %v3369
    %v3371 = vrot.slane %v1907, %v3370
    %v3372 = vlaneseq
    %v3373 = vshrl.u32 %v3372, 7
    %v3374 = vsub.s32 %v2884, %v3373
    %v3375 = vrot.slane %v1910, %v3374
    %v3376 = vsel %vm2889, %v3375, %v3371
    %v3377 = vlaneseq
    %v3378 = vshrl.u32 %v3377, 7
    %v3379 = vsub.s32 %v2879, %v3378
    %v3380 = vrot.slane %v1913, %v3379
    %v3381 = vlaneseq
    %v3382 = vshrl.u32 %v3381, 7
    %v3383 = vsub.s32 %v2884, %v3382
    %v3384 = vrot.slane %v1916, %v3383
    %v3385 = vsel %vm2889, %v3384, %v3380
    %v3386 = vlaneseq
    %v3387 = vshrl.u32 %v3386, 7
    %v3388 = vsub.s32 %v2879, %v3387
    %v3389 = vrot.slane %v1919, %v3388
    %v3390 = vlaneseq
    %v3391 = vshrl.u32 %v3390, 7
    %v3392 = vsub.s32 %v2884, %v3391
    %v3393 = vrot.slane %v1922, %v3392
    %v3394 = vsel %vm2889, %v3393, %v3389
    %v3395 = vlaneseq
    %v3396 = vshrl.u32 %v3395, 7
    %v3397 = vsub.s32 %v2879, %v3396
    %v3398 = vrot.slane %v1925, %v3397
    %v3399 = vlaneseq
    %v3400 = vshrl.u32 %v3399, 7
    %v3401 = vsub.s32 %v2884, %v3400
    %v3402 = vrot.slane %v1928, %v3401
    %v3403 = vsel %vm2889, %v3402, %v3398
    %v3404 = vlaneseq
    %v3405 = vshrl.u32 %v3404, 7
    %v3406 = vsub.s32 %v2879, %v3405
    %v3407 = vrot.slane %v1931, %v3406
    %v3408 = vlaneseq
    %v3409 = vshrl.u32 %v3408, 7
    %v3410 = vsub.s32 %v2884, %v3409
    %v3411 = vrot.slane %v1934, %v3410
    %v3412 = vsel %vm2889, %v3411, %v3407
    %v3413 = vlaneseq
    %v3414 = vshrl.u32 %v3413, 7
    %v3415 = vsub.s32 %v2879, %v3414
    %v3416 = vrot.slane %v1937, %v3415
    %v3417 = vlaneseq
    %v3418 = vshrl.u32 %v3417, 7
    %v3419 = vsub.s32 %v2884, %v3418
    %v3420 = vrot.slane %v1940, %v3419
    %v3421 = vsel %vm2889, %v3420, %v3416
    %v3422 = vlaneseq
    %v3423 = vshrl.u32 %v3422, 7
    %v3424 = vsub.s32 %v2879, %v3423
    %v3425 = vrot.slane %v1943, %v3424
    %v3426 = vlaneseq
    %v3427 = vshrl.u32 %v3426, 7
    %v3428 = vsub.s32 %v2884, %v3427
    %v3429 = vrot.slane %v1946, %v3428
    %v3430 = vsel %vm2889, %v3429, %v3425
    %v3431 = vlaneseq
    %v3432 = vshrl.u32 %v3431, 7
    %v3433 = vsub.s32 %v2879, %v3432
    %v3434 = vrot.slane %v1949, %v3433
    %v3435 = vlaneseq
    %v3436 = vshrl.u32 %v3435, 7
    %v3437 = vsub.s32 %v2884, %v3436
    %v3438 = vrot.slane %v1952, %v3437
    %v3439 = vsel %vm2889, %v3438, %v3434
    %v3440 = vlaneseq
    %v3441 = vshrl.u32 %v3440, 7
    %v3442 = vsub.s32 %v2879, %v3441
    %v3443 = vrot.slane %v1955, %v3442
    %v3444 = vlaneseq
    %v3445 = vshrl.u32 %v3444, 7
    %v3446 = vsub.s32 %v2884, %v3445
    %v3447 = vrot.slane %v1958, %v3446
    %v3448 = vsel %vm2889, %v3447, %v3443
    %v3449 = vlaneseq
    %v3450 = vshrl.u32 %v3449, 7
    %v3451 = vsub.s32 %v2879, %v3450
    %v3452 = vrot.slane %v1961, %v3451
    %v3453 = vlaneseq
    %v3454 = vshrl.u32 %v3453, 7
    %v3455 = vsub.s32 %v2884, %v3454
    %v3456 = vrot.slane %v1964, %v3455
    %v3457 = vsel %vm2889, %v3456, %v3452
    %v3458 = vsel %vm708, %v2899, %v2890
    %v3459 = vsel %vm710, %v2908, %v3458
    %v3460 = vsel %vm712, %v2917, %v3459
    %v3461 = vsel %vm2689, %v2926, %v3460
    %v3462 = vsel %vm719, %v2935, %v3461
    %v3463 = vsel %vm721, %v2944, %v3462
    %v3464 = vsel %vm723, %v2953, %v3463
    %v3465 = vsel %vm708, %v2971, %v2962
    %v3466 = vsel %vm710, %v2980, %v3465
    %v3467 = vsel %vm712, %v2989, %v3466
    %v3468 = vsel %vm2689, %v2998, %v3467
    %v3469 = vsel %vm719, %v3007, %v3468
    %v3470 = vsel %vm721, %v3016, %v3469
    %v3471 = vsel %vm723, %v3025, %v3470
    %v3472 = vsel %vm708, %v3043, %v3034
    %v3473 = vsel %vm710, %v3052, %v3472
    %v3474 = vsel %vm712, %v3061, %v3473
    %v3475 = vsel %vm2689, %v3070, %v3474
    %v3476 = vsel %vm719, %v3079, %v3475
    %v3477 = vsel %vm721, %v3088, %v3476
    %v3478 = vsel %vm723, %v3097, %v3477
    %v3479 = vsel %vm708, %v3115, %v3106
    %v3480 = vsel %vm710, %v3124, %v3479
    %v3481 = vsel %vm712, %v3133, %v3480
    %v3482 = vsel %vm2689, %v3142, %v3481
    %v3483 = vsel %vm719, %v3151, %v3482
    %v3484 = vsel %vm721, %v3160, %v3483
    %v3485 = vsel %vm723, %v3169, %v3484
    %v3486 = vsel %vm708, %v3187, %v3178
    %v3487 = vsel %vm710, %v3196, %v3486
    %v3488 = vsel %vm712, %v3205, %v3487
    %v3489 = vsel %vm2689, %v3214, %v3488
    %v3490 = vsel %vm719, %v3223, %v3489
    %v3491 = vsel %vm721, %v3232, %v3490
    %v3492 = vsel %vm723, %v3241, %v3491
    %v3493 = vsel %vm708, %v3259, %v3250
    %v3494 = vsel %vm710, %v3268, %v3493
    %v3495 = vsel %vm712, %v3277, %v3494
    %v3496 = vsel %vm2689, %v3286, %v3495
    %v3497 = vsel %vm719, %v3295, %v3496
    %v3498 = vsel %vm721, %v3304, %v3497
    %v3499 = vsel %vm723, %v3313, %v3498
    %v3500 = vsel %vm708, %v3331, %v3322
    %v3501 = vsel %vm710, %v3340, %v3500
    %v3502 = vsel %vm712, %v3349, %v3501
    %v3503 = vsel %vm2689, %v3358, %v3502
    %v3504 = vsel %vm719, %v3367, %v3503
    %v3505 = vsel %vm721, %v3376, %v3504
    %v3506 = vsel %vm723, %v3385, %v3505
    %v3507 = vsel %vm708, %v3403, %v3394
    %v3508 = vsel %vm710, %v3412, %v3507
    %v3509 = vsel %vm712, %v3421, %v3508
    %v3510 = vsel %vm2689, %v3430, %v3509
    %v3511 = vsel %vm719, %v3439, %v3510
    %v3512 = vsel %vm721, %v3448, %v3511
    %v3513 = vsel %vm723, %v3457, %v3512
    %vm3522 = vcmask 130048
    %v3523 = vsel %vm3522, %v2693, %v3464
    %v3524 = vsel %vm3522, %v2700, %v3471
    %v3525 = vsel %vm3522, %v2707, %v3478
    %v3526 = vsel %vm3522, %v2714, %v3485
    %v3527 = vsel %vm3522, %v2721, %v3492
    %v3528 = vsel %vm3522, %v2728, %v3499
    %v3529 = vsel %vm3522, %v2735, %v3506
    %v3530 = vsel %vm3522, %v2742, %v3513
    %3531 = vst.msk [vmem:[#allocation2 + $0x3] sm:$0xff] %vm146, %v3523
    %3532 = vst.msk [vmem:[#allocation2 + $0xb] sm:$0xff] %vm146, %v3524
    %3533 = vst.msk [vmem:[#allocation2 + $0x1b] sm:$0xff] %vm146, %v3525
    %3534 = vst.msk [vmem:[#allocation2 + $0x23] sm:$0xff] %vm146, %v3526
    %3535 = vst.msk [vmem:[#allocation2 + $0x33] sm:$0xff] %vm146, %v3527
    %3536 = vst.msk [vmem:[#allocation2 + $0x3b] sm:$0xff] %vm146, %v3528
    %3537 = vst.msk [vmem:[#allocation2 + $0x4b] sm:$0xff] %vm146, %v3529
    %3538 = vst.msk [vmem:[#allocation2 + $0x53] sm:$0xff] %vm146, %v3530
    %v3539 = vld [vmem:[#allocation2] sm:$0xff]
    %v3540 = vld [vmem:[#allocation2 + $0x8] sm:$0xff]
    %v3541 = vld [vmem:[#allocation2 + $0x18] sm:$0xff]
    %v3542 = vld [vmem:[#allocation2 + $0x20] sm:$0xff]
    %v3543 = vld [vmem:[#allocation2 + $0x30] sm:$0xff]
    %v3544 = vld [vmem:[#allocation2 + $0x38] sm:$0xff]
    %v3545 = vld [vmem:[#allocation2 + $0x48] sm:$0xff]
    %v3546 = vld [vmem:[#allocation2 + $0x50] sm:$0xff]
    %v3547 = vld [vmem:[#allocation2 + $0x1] sm:$0xff]
    %v3548 = vld [vmem:[#allocation2 + $0x9] sm:$0xff]
    %v3549 = vld [vmem:[#allocation2 + $0x19] sm:$0xff]
    %v3550 = vld [vmem:[#allocation2 + $0x21] sm:$0xff]
    %v3551 = vld [vmem:[#allocation2 + $0x31] sm:$0xff]
    %v3552 = vld [vmem:[#allocation2 + $0x39] sm:$0xff]
    %v3553 = vld [vmem:[#allocation2 + $0x49] sm:$0xff]
    %v3554 = vld [vmem:[#allocation2 + $0x51] sm:$0xff]
    %v3555 = vld [vmem:[#allocation2 + $0x2] sm:$0xff]
    %v3556 = vld [vmem:[#allocation2 + $0xa] sm:$0xff]
    %v3557 = vld [vmem:[#allocation2 + $0x1a] sm:$0xff]
    %v3558 = vld [vmem:[#allocation2 + $0x22] sm:$0xff]
    %v3559 = vld [vmem:[#allocation2 + $0x32] sm:$0xff]
    %v3560 = vld [vmem:[#allocation2 + $0x3a] sm:$0xff]
    %v3561 = vld [vmem:[#allocation2 + $0x4a] sm:$0xff]
    %v3562 = vld [vmem:[#allocation2 + $0x52] sm:$0xff]
    %v3563 = vld [vmem:[#allocation2 + $0x3] sm:$0xff]
    %v3564 = vld [vmem:[#allocation2 + $0xb] sm:$0xff]
    %v3565 = vld [vmem:[#allocation2 + $0x1b] sm:$0xff]
    %v3566 = vld [vmem:[#allocation2 + $0x23] sm:$0xff]
    %v3567 = vld [vmem:[#allocation2 + $0x33] sm:$0xff]
    %v3568 = vld [vmem:[#allocation2 + $0x3b] sm:$0xff]
    %v3569 = vld [vmem:[#allocation2 + $0x4b] sm:$0xff]
    %v3570 = vld [vmem:[#allocation2 + $0x53] sm:$0xff]
    %v3571 = vld [vmem:[#allocation2 + $0x4] sm:$0xff]
    %v3572 = vld [vmem:[#allocation2 + $0xc] sm:$0xff]
    %v3573 = vld [vmem:[#allocation2 + $0x1c] sm:$0xff]
    %v3574 = vld [vmem:[#allocation2 + $0x24] sm:$0xff]
    %v3575 = vld [vmem:[#allocation2 + $0x34] sm:$0xff]
    %v3576 = vld [vmem:[#allocation2 + $0x3c] sm:$0xff]
    %v3577 = vld [vmem:[#allocation2 + $0x4c] sm:$0xff]
    %v3578 = vld [vmem:[#allocation2 + $0x54] sm:$0xff]
    %v3579 = vld [vmem:[#allocation2 + $0x5] sm:$0xff]
    %v3580 = vld [vmem:[#allocation2 + $0xd] sm:$0xff]
    %v3581 = vld [vmem:[#allocation2 + $0x1d] sm:$0xff]
    %v3582 = vld [vmem:[#allocation2 + $0x25] sm:$0xff]
    %v3583 = vld [vmem:[#allocation2 + $0x35] sm:$0xff]
    %v3584 = vld [vmem:[#allocation2 + $0x3d] sm:$0xff]
    %v3585 = vld [vmem:[#allocation2 + $0x4d] sm:$0xff]
    %v3586 = vld [vmem:[#allocation2 + $0x55] sm:$0xff]
    %v3587 = vld [vmem:[#allocation2 + $0x6] sm:$0xff]
    %v3588 = vld [vmem:[#allocation2 + $0xe] sm:$0xff]
    %v3589 = vld [vmem:[#allocation2 + $0x1e] sm:$0xff]
    %v3590 = vld [vmem:[#allocation2 + $0x26] sm:$0xff]
    %v3591 = vld [vmem:[#allocation2 + $0x36] sm:$0xff]
    %v3592 = vld [vmem:[#allocation2 + $0x3e] sm:$0xff]
    %v3593 = vld [vmem:[#allocation2 + $0x4e] sm:$0xff]
    %v3594 = vld [vmem:[#allocation2 + $0x56] sm:$0xff]
    %3603 = vrot.lane.b32.xlu0 %v3547, 32
    %v3604 = vpop.permute.xlu0 %3603
    %3605 = vrot.lane.b32.xlu0 %v3548, 32
    %v3606 = vpop.permute.xlu0 %3605
    %3607 = vrot.lane.b32.xlu0 %v3549, 32
    %v3608 = vpop.permute.xlu0 %3607
    %3609 = vrot.lane.b32.xlu0 %v3550, 32
    %v3610 = vpop.permute.xlu0 %3609
    %3611 = vrot.lane.b32.xlu0 %v3551, 32
    %v3612 = vpop.permute.xlu0 %3611
    %3613 = vrot.lane.b32.xlu0 %v3552, 32
    %v3614 = vpop.permute.xlu0 %3613
    %3615 = vrot.lane.b32.xlu0 %v3553, 32
    %v3616 = vpop.permute.xlu0 %3615
    %3617 = vrot.lane.b32.xlu0 %v3554, 32
    %v3618 = vpop.permute.xlu0 %3617
    %3635 = vrot.lane.b32.xlu0 %v3555, 64
    %v3636 = vpop.permute.xlu0 %3635
    %3637 = vrot.lane.b32.xlu0 %v3556, 64
    %v3638 = vpop.permute.xlu0 %3637
    %3639 = vrot.lane.b32.xlu0 %v3557, 64
    %v3640 = vpop.permute.xlu0 %3639
    %3641 = vrot.lane.b32.xlu0 %v3558, 64
    %v3642 = vpop.permute.xlu0 %3641
    %3643 = vrot.lane.b32.xlu0 %v3559, 64
    %v3644 = vpop.permute.xlu0 %3643
    %3645 = vrot.lane.b32.xlu0 %v3560, 64
    %v3646 = vpop.permute.xlu0 %3645
    %3647 = vrot.lane.b32.xlu0 %v3561, 64
    %v3648 = vpop.permute.xlu0 %3647
    %3649 = vrot.lane.b32.xlu0 %v3562, 64
    %v3650 = vpop.permute.xlu0 %3649
    %3667 = vrot.lane.b32.xlu0 %v3563, 96
    %v3668 = vpop.permute.xlu0 %3667
    %3669 = vrot.lane.b32.xlu0 %v3564, 96
    %v3670 = vpop.permute.xlu0 %3669
    %3671 = vrot.lane.b32.xlu0 %v3565, 96
    %v3672 = vpop.permute.xlu0 %3671
    %3673 = vrot.lane.b32.xlu0 %v3566, 96
    %v3674 = vpop.permute.xlu0 %3673
    %3675 = vrot.lane.b32.xlu0 %v3567, 96
    %v3676 = vpop.permute.xlu0 %3675
    %3677 = vrot.lane.b32.xlu0 %v3568, 96
    %v3678 = vpop.permute.xlu0 %3677
    %3679 = vrot.lane.b32.xlu0 %v3569, 96
    %v3680 = vpop.permute.xlu0 %3679
    %3681 = vrot.lane.b32.xlu0 %v3570, 96
    %v3682 = vpop.permute.xlu0 %3681
    %3699 = vrot.lane.b32.xlu0 %v3579, 32
    %v3700 = vpop.permute.xlu0 %3699
    %3701 = vrot.lane.b32.xlu0 %v3580, 32
    %v3702 = vpop.permute.xlu0 %3701
    %3703 = vrot.lane.b32.xlu0 %v3581, 32
    %v3704 = vpop.permute.xlu0 %3703
    %3705 = vrot.lane.b32.xlu0 %v3582, 32
    %v3706 = vpop.permute.xlu0 %3705
    %3707 = vrot.lane.b32.xlu0 %v3583, 32
    %v3708 = vpop.permute.xlu0 %3707
    %3709 = vrot.lane.b32.xlu0 %v3584, 32
    %v3710 = vpop.permute.xlu0 %3709
    %3711 = vrot.lane.b32.xlu0 %v3585, 32
    %v3712 = vpop.permute.xlu0 %3711
    %3713 = vrot.lane.b32.xlu0 %v3586, 32
    %v3714 = vpop.permute.xlu0 %3713
    %3731 = vrot.lane.b32.xlu0 %v3587, 64
    %v3732 = vpop.permute.xlu0 %3731
    %3733 = vrot.lane.b32.xlu0 %v3588, 64
    %v3734 = vpop.permute.xlu0 %3733
    %3735 = vrot.lane.b32.xlu0 %v3589, 64
    %v3736 = vpop.permute.xlu0 %3735
    %3737 = vrot.lane.b32.xlu0 %v3590, 64
    %v3738 = vpop.permute.xlu0 %3737
    %3739 = vrot.lane.b32.xlu0 %v3591, 64
    %v3740 = vpop.permute.xlu0 %3739
    %3741 = vrot.lane.b32.xlu0 %v3592, 64
    %v3742 = vpop.permute.xlu0 %3741
    %3743 = vrot.lane.b32.xlu0 %v3593, 64
    %v3744 = vpop.permute.xlu0 %3743
    %3745 = vrot.lane.b32.xlu0 %v3594, 64
    %v3746 = vpop.permute.xlu0 %3745
    %v3755 = vsel %vm146, %v3539, %v3604
    %v3756 = vsel %vm146, %v3540, %v3606
    %v3757 = vsel %vm146, %v3541, %v3608
    %v3758 = vsel %vm146, %v3542, %v3610
    %v3759 = vsel %vm146, %v3543, %v3612
    %v3760 = vsel %vm146, %v3544, %v3614
    %v3761 = vsel %vm146, %v3545, %v3616
    %v3762 = vsel %vm146, %v3546, %v3618
    %vm3763 = vcmask 523264
    %v3764 = vsel %vm3763, %v3755, %v3636
    %v3765 = vsel %vm3763, %v3756, %v3638
    %v3766 = vsel %vm3763, %v3757, %v3640
    %v3767 = vsel %vm3763, %v3758, %v3642
    %v3768 = vsel %vm3763, %v3759, %v3644
    %v3769 = vsel %vm3763, %v3760, %v3646
    %v3770 = vsel %vm3763, %v3761, %v3648
    %v3771 = vsel %vm3763, %v3762, %v3650
    %vm3772 = vcmask 785408
    %v3773 = vsel %vm3772, %v3764, %v3668
    %v3774 = vsel %vm3772, %v3765, %v3670
    %v3775 = vsel %vm3772, %v3766, %v3672
    %v3776 = vsel %vm3772, %v3767, %v3674
    %v3777 = vsel %vm3772, %v3768, %v3676
    %v3778 = vsel %vm3772, %v3769, %v3678
    %v3779 = vsel %vm3772, %v3770, %v3680
    %v3780 = vsel %vm3772, %v3771, %v3682
    %v3781 = vsel %vm146, %v3571, %v3700
    %v3782 = vsel %vm146, %v3572, %v3702
    %v3783 = vsel %vm146, %v3573, %v3704
    %v3784 = vsel %vm146, %v3574, %v3706
    %v3785 = vsel %vm146, %v3575, %v3708
    %v3786 = vsel %vm146, %v3576, %v3710
    %v3787 = vsel %vm146, %v3577, %v3712
    %v3788 = vsel %vm146, %v3578, %v3714
    %v3789 = vsel %vm3763, %v3781, %v3732
    %v3790 = vsel %vm3763, %v3782, %v3734
    %v3791 = vsel %vm3763, %v3783, %v3736
    %v3792 = vsel %vm3763, %v3784, %v3738
    %v3793 = vsel %vm3763, %v3785, %v3740
    %v3794 = vsel %vm3763, %v3786, %v3742
    %v3795 = vsel %vm3763, %v3787, %v3744
    %v3796 = vsel %vm3763, %v3788, %v3746
    %v3797 = vld [vmem:[%s3] sm:$0xff]
    %v3798 = vld [vmem:[%s3 + $0x8] sm:$0xff]
    %v3799 = vld [vmem:[%s3 + $0x10] sm:$0xff]
    %v3800 = vld [vmem:[%s3 + $0x18] sm:$0xff]
    %v3801 = vld [vmem:[%s3 + $0x20] sm:$0xff]
    %v3802 = vld [vmem:[%s3 + $0x28] sm:$0xff]
    %v3803 = vld [vmem:[%s3 + $0x30] sm:$0xff]
    %v3804 = vld [vmem:[%s3 + $0x38] sm:$0xff]
    %v3805 = vld [vmem:[%s3 + $0x40] sm:$0xff]
    %v3806 = vld [vmem:[%s3 + $0x48] sm:$0xff]
    %v3807 = vld [vmem:[%s3 + $0x50] sm:$0xff]
    %v3808 = vld [vmem:[%s3 + $0x58] sm:$0xff]
    %v3809 = vld [vmem:[%s3 + $0x60] sm:$0xff]
    %v3810 = vld [vmem:[%s3 + $0x68] sm:$0xff]
    %v3811 = vld [vmem:[%s3 + $0x70] sm:$0xff]
    %v3812 = vld [vmem:[%s3 + $0x78] sm:$0xff]
    %v3813 = vld [vmem:[%s3 + $0x80] sm:$0xff]
    %v3814 = vld [vmem:[%s3 + $0x88] sm:$0xff]
    %v3815 = vld [vmem:[%s3 + $0x90] sm:$0xff]
    %v3816 = vld [vmem:[%s3 + $0x98] sm:$0xff]
    %v3817 = vld [vmem:[%s3 + $0xa0] sm:$0xff]
    %v3818 = vld [vmem:[%s3 + $0xa8] sm:$0xff]
    %v3819 = vld [vmem:[%s3 + $0xb0] sm:$0xff]
    %v3820 = vld [vmem:[%s3 + $0xb8] sm:$0xff]
    %v3821 = vld [vmem:[%s3 + $0xc0] sm:$0xff]
    %v3822 = vld [vmem:[%s3 + $0xc8] sm:$0xff]
    %v3823 = vld [vmem:[%s3 + $0xd0] sm:$0xff]
    %v3824 = vld [vmem:[%s3 + $0xd8] sm:$0xff]
    %v3826 = vsel %vm3772, %v3789, 0
    %v3829 = vsel %vm3772, %v3790, 0
    %v3832 = vsel %vm3772, %v3791, 0
    %v3835 = vsel %vm3772, %v3792, 0
    %v3838 = vsel %vm3772, %v3793, 0
    %v3841 = vsel %vm3772, %v3794, 0
    %v3844 = vsel %vm3772, %v3795, 0
    %v3847 = vsel %vm3772, %v3796, 0
    %3849 = vmatprep.subr.mxu0 0.0
    %3850 = vmatpush1.msra.mxu0 %v3797
    %3851 = vmatprep.subr.mxu0 0.0
    %3852 = vmatpush1.msra.mxu0 %v3798
    %3853 = vmatprep.subr.mxu0 0.0
    %3854 = vmatpush1.msra.mxu0 %v3799
    %3855 = vmatprep.subr.mxu0 0.0
    %3856 = vmatpush1.msra.mxu0 %v3800
    %3857 = vmatprep.subr.mxu0 0.0
    %3858 = vmatpush1.msra.mxu0 %v3801
    %3859 = vmatprep.subr.mxu0 0.0
    %3860 = vmatpush1.msra.mxu0 %v3802
    %3861 = vmatprep.subr.mxu0 0.0
    %3862 = vmatpush1.msra.mxu0 %v3803
    %3863 = vmatprep.subr.mxu0 0.0
    %3864 = vmatpush1.msra.mxu0 %v3804
    %3865 = vmatprep.subr.mxu0 0.0
    %3866 = vmatpush1.msra.mxu0 %v3805
    %3867 = vmatprep.subr.mxu0 0.0
    %3868 = vmatpush1.msra.mxu0 %v3806
    %3869 = vmatprep.subr.mxu0 0.0
    %3870 = vmatpush1.msra.mxu0 %v3807
    %3871 = vmatprep.subr.mxu0 0.0
    %3872 = vmatpush1.msra.mxu0 %v3808
    %3873 = vmatprep.subr.mxu0 0.0
    %3874 = vmatpush1.msra.mxu0 %v3809
    %3875 = vmatprep.subr.mxu0 0.0
    %3876 = vmatpush1.msra.mxu0 %v3810
    %3877 = vmatprep.subr.mxu0 0.0
    %3878 = vmatpush1.msra.mxu0 %v3811
    %3879 = vmatprep.subr.mxu0 0.0
    %3880 = vmatpush1.msra.mxu0 %v3812
    %3881 = vmatprep.subr.mxu0 0.0
    %3882 = vmatpush1.msra.mxu0 %v3813
    %3883 = vmatprep.subr.mxu0 0.0
    %3884 = vmatpush1.msra.mxu0 %v3814
    %3885 = vmatprep.subr.mxu0 0.0
    %3886 = vmatpush1.msra.mxu0 %v3815
    %3887 = vmatprep.subr.mxu0 0.0
    %3888 = vmatpush1.msra.mxu0 %v3816
    %3889 = vmatprep.subr.mxu0 0.0
    %3890 = vmatpush1.msra.mxu0 %v3817
    %3891 = vmatprep.subr.mxu0 0.0
    %3892 = vmatpush1.msra.mxu0 %v3818
    %3893 = vmatprep.subr.mxu0 0.0
    %3894 = vmatpush1.msra.mxu0 %v3819
    %3895 = vmatprep.subr.mxu0 0.0
    %3896 = vmatpush1.msra.mxu0 %v3820
    %3897 = vmatprep.subr.mxu0 0.0
    %3898 = vmatpush1.msra.mxu0 %v3821
    %3899 = vmatprep.subr.mxu0 0.0
    %3900 = vmatpush1.msra.mxu0 %v3822
    %3901 = vmatprep.subr.mxu0 0.0
    %3902 = vmatpush1.msra.mxu0 %v3823
    %3903 = vmatprep.subr.mxu0 0.0
    %3904 = vmatpush1.msra.mxu0 %v3824
    %3905 = vmatprep.subr.mxu0 0.0
    %3906 = vmatpush1.msra.mxu0 0.0
    %3907 = vmatprep.subr.mxu0 0.0
    %3908 = vmatpush1.msra.mxu0 0.0
    %3909 = vmatprep.subr.mxu0 0.0
    %3910 = vmatpush1.msra.mxu0 0.0
    %3911 = vmatprep.subr.mxu0 0.0
    %3912 = vmatpush1.msra.mxu0 0.0
    %3913 = vmatprep.mubr.f32.mxu0 %v3826
    %3914 = vmatmul.mubr.f32.gmra.mrb[0].mxu0 %v3773
    %v3915 = vpop.f32.mrb[0].mxu0
    %v3916 = vadd.f32 0.0, %v3915
    %v3917 = vpop.f32.mrb[0].mxu0
    %3918 = vmatprep.mubr.f32.mxu0 %v3829
    %3919 = vmatmul.mubr.f32.gmra.mrb[0].mxu0 %v3774
    %v3920 = vpop.f32.mrb[0].mxu0
    %v3921 = vadd.f32 0.0, %v3920
    %v3922 = vpop.f32.mrb[0].mxu0
    %3923 = vmatprep.mubr.f32.mxu0 %v3832
    %3924 = vmatmul.mubr.f32.gmra.mrb[0].mxu0 %v3775
    %v3925 = vpop.f32.mrb[0].mxu0
    %v3926 = vadd.f32 0.0, %v3925
    %v3927 = vpop.f32.mrb[0].mxu0
    %3928 = vmatprep.mubr.f32.mxu0 %v3835
    %3929 = vmatmul.mubr.f32.gmra.mrb[0].mxu0 %v3776
    %v3930 = vpop.f32.mrb[0].mxu0
    %v3931 = vadd.f32 0.0, %v3930
    %v3932 = vpop.f32.mrb[0].mxu0
    %3933 = vmatprep.mubr.f32.mxu0 %v3838
    %3934 = vmatmul.mubr.f32.gmra.mrb[0].mxu0 %v3777
    %v3935 = vpop.f32.mrb[0].mxu0
    %v3936 = vadd.f32 0.0, %v3935
    %v3937 = vpop.f32.mrb[0].mxu0
    %3938 = vmatprep.mubr.f32.mxu0 %v3841
    %3939 = vmatmul.mubr.f32.gmra.mrb[0].mxu0 %v3778
    %v3940 = vpop.f32.mrb[0].mxu0
    %v3941 = vadd.f32 0.0, %v3940
    %v3942 = vpop.f32.mrb[0].mxu0
    %3943 = vmatprep.mubr.f32.mxu0 %v3844
    %3944 = vmatmul.mubr.f32.gmra.mrb[0].mxu0 %v3779
    %v3945 = vpop.f32.mrb[0].mxu0
    %v3946 = vadd.f32 0.0, %v3945
    %v3947 = vpop.f32.mrb[0].mxu0
    %3948 = vmatprep.mubr.f32.mxu0 %v3847
    %3949 = vmatmul.mubr.f32.gmra.mrb[0].mxu0 %v3780
    %v3950 = vpop.f32.mrb[0].mxu0
    %v3951 = vadd.f32 0.0, %v3950
    %v3952 = vpop.f32.mrb[0].mxu0
    %3953 = vdwg.mxu0
    %v3954 = vxor.u32 %v3916, 2147483648
    %v3955 = vxor.u32 %v3921, 2147483648
    %v3956 = vxor.u32 %v3926, 2147483648
    %v3957 = vxor.u32 %v3931, 2147483648
    %v3958 = vxor.u32 %v3936, 2147483648
    %v3959 = vxor.u32 %v3941, 2147483648
    %v3960 = vxor.u32 %v3946, 2147483648
    %v3961 = vxor.u32 %v3951, 2147483648
    %v3962 = vmul.f32 %v3954, 1.442695
    %v3963 = vpow.pop %v3962
    %v3964 = vmul.f32 %v3955, 1.442695
    %v3965 = vpow.pop %v3964
    %v3966 = vmul.f32 %v3956, 1.442695
    %v3967 = vpow.pop %v3966
    %v3968 = vmul.f32 %v3957, 1.442695
    %v3969 = vpow.pop %v3968
    %v3970 = vmul.f32 %v3958, 1.442695
    %v3971 = vpow.pop %v3970
    %v3972 = vmul.f32 %v3959, 1.442695
    %v3973 = vpow.pop %v3972
    %v3974 = vmul.f32 %v3960, 1.442695
    %v3975 = vpow.pop %v3974
    %v3976 = vmul.f32 %v3961, 1.442695
    %v3977 = vpow.pop %v3976
    %v3978 = vadd.f32 %v3963, 1.0
    %v3979 = vadd.f32 %v3965, 1.0
    %v3980 = vadd.f32 %v3967, 1.0
    %v3981 = vadd.f32 %v3969, 1.0
    %v3982 = vadd.f32 %v3971, 1.0
    %v3983 = vadd.f32 %v3973, 1.0
    %v3984 = vadd.f32 %v3975, 1.0
    %v3985 = vadd.f32 %v3977, 1.0
    %v3986 = vrcp.pop %v3978
    %v3987 = vmul.f32 1.0, %v3986
    %v3988 = vrcp.pop %v3979
    %v3989 = vmul.f32 1.0, %v3988
    %v3990 = vrcp.pop %v3980
    %v3991 = vmul.f32 1.0, %v3990
    %v3992 = vrcp.pop %v3981
    %v3993 = vmul.f32 1.0, %v3992
    %v3994 = vrcp.pop %v3982
    %v3995 = vmul.f32 1.0, %v3994
    %v3996 = vrcp.pop %v3983
    %v3997 = vmul.f32 1.0, %v3996
    %v3998 = vrcp.pop %v3984
    %v3999 = vmul.f32 1.0, %v3998
    %v4000 = vrcp.pop %v3985
    %v4001 = vmul.f32 1.0, %v4000
    %v4002 = vlaneseq
    %v4003 = vshrl.u32 %v4002, 7
    %v4004 = vsub.s32 0, %v4003
    %v4005 = vrot.slane %v3987, %v4004
    %4007 = vbcast.lane.b32.xlu0 %v4005, 256
    %v4008 = vpop.permute.xlu0 %4007
    %s4010 = sor.u32 256, 8
    %4011 = vbcast.lane.b32.xlu0 %v4005, %s4010
    %v4012 = vpop.permute.xlu0 %4011
    %v4013 = vlaneseq
    %v4014 = vshrl.u32 %v4013, 7
    %v4015 = vsub.s32 1, %v4014
    %v4016 = vrot.slane %v3987, %v4015
    %4018 = vbcast.lane.b32.xlu0 %v4016, 256
    %v4019 = vpop.permute.xlu0 %4018
    %s4021 = sor.u32 256, 8
    %4022 = vbcast.lane.b32.xlu0 %v4016, %s4021
    %v4023 = vpop.permute.xlu0 %4022
    %v4024 = vlaneseq
    %v4025 = vshrl.u32 %v4024, 7
    %v4026 = vsub.s32 2, %v4025
    %v4027 = vrot.slane %v3987, %v4026
    %4029 = vbcast.lane.b32.xlu0 %v4027, 256
    %v4030 = vpop.permute.xlu0 %4029
    %s4032 = sor.u32 256, 8
    %4033 = vbcast.lane.b32.xlu0 %v4027, %s4032
    %v4034 = vpop.permute.xlu0 %4033
    %v4035 = vlaneseq
    %v4036 = vshrl.u32 %v4035, 7
    %v4037 = vsub.s32 3, %v4036
    %v4038 = vrot.slane %v3987, %v4037
    %4040 = vbcast.lane.b32.xlu0 %v4038, 256
    %v4041 = vpop.permute.xlu0 %4040
    %s4043 = sor.u32 256, 8
    %4044 = vbcast.lane.b32.xlu0 %v4038, %s4043
    %v4045 = vpop.permute.xlu0 %4044
    %v4046 = vlaneseq
    %v4047 = vshrl.u32 %v4046, 7
    %v4048 = vsub.s32 4, %v4047
    %v4049 = vrot.slane %v3987, %v4048
    %4051 = vbcast.lane.b32.xlu0 %v4049, 256
    %v4052 = vpop.permute.xlu0 %4051
    %s4054 = sor.u32 256, 8
    %4055 = vbcast.lane.b32.xlu0 %v4049, %s4054
    %v4056 = vpop.permute.xlu0 %4055
    %v4057 = vlaneseq
    %v4058 = vshrl.u32 %v4057, 7
    %v4059 = vsub.s32 5, %v4058
    %v4060 = vrot.slane %v3987, %v4059
    %4062 = vbcast.lane.b32.xlu0 %v4060, 256
    %v4063 = vpop.permute.xlu0 %4062
    %s4065 = sor.u32 256, 8
    %4066 = vbcast.lane.b32.xlu0 %v4060, %s4065
    %v4067 = vpop.permute.xlu0 %4066
    %v4068 = vlaneseq
    %v4069 = vshrl.u32 %v4068, 7
    %v4070 = vsub.s32 6, %v4069
    %v4071 = vrot.slane %v3987, %v4070
    %4073 = vbcast.lane.b32.xlu0 %v4071, 256
    %v4074 = vpop.permute.xlu0 %4073
    %s4076 = sor.u32 256, 8
    %4077 = vbcast.lane.b32.xlu0 %v4071, %s4076
    %v4078 = vpop.permute.xlu0 %4077
    %v4079 = vlaneseq
    %v4080 = vshrl.u32 %v4079, 7
    %v4081 = vsub.s32 7, %v4080
    %v4082 = vrot.slane %v3987, %v4081
    %4084 = vbcast.lane.b32.xlu0 %v4082, 256
    %v4085 = vpop.permute.xlu0 %4084
    %s4087 = sor.u32 256, 8
    %4088 = vbcast.lane.b32.xlu0 %v4082, %s4087
    %v4089 = vpop.permute.xlu0 %4088
    %v4090 = vlaneseq
    %v4091 = vshrl.u32 %v4090, 7
    %v4092 = vsub.s32 0, %v4091
    %v4093 = vrot.slane %v3989, %v4092
    %4095 = vbcast.lane.b32.xlu0 %v4093, 256
    %v4096 = vpop.permute.xlu0 %4095
    %s4098 = sor.u32 256, 8
    %4099 = vbcast.lane.b32.xlu0 %v4093, %s4098
    %v4100 = vpop.permute.xlu0 %4099
    %v4101 = vlaneseq
    %v4102 = vshrl.u32 %v4101, 7
    %v4103 = vsub.s32 1, %v4102
    %v4104 = vrot.slane %v3989, %v4103
    %4106 = vbcast.lane.b32.xlu0 %v4104, 256
    %v4107 = vpop.permute.xlu0 %4106
    %s4109 = sor.u32 256, 8
    %4110 = vbcast.lane.b32.xlu0 %v4104, %s4109
    %v4111 = vpop.permute.xlu0 %4110
    %v4112 = vlaneseq
    %v4113 = vshrl.u32 %v4112, 7
    %v4114 = vsub.s32 2, %v4113
    %v4115 = vrot.slane %v3989, %v4114
    %4117 = vbcast.lane.b32.xlu0 %v4115, 256
    %v4118 = vpop.permute.xlu0 %4117
    %s4120 = sor.u32 256, 8
    %4121 = vbcast.lane.b32.xlu0 %v4115, %s4120
    %v4122 = vpop.permute.xlu0 %4121
    %v4123 = vlaneseq
    %v4124 = vshrl.u32 %v4123, 7
    %v4125 = vsub.s32 3, %v4124
    %v4126 = vrot.slane %v3989, %v4125
    %4128 = vbcast.lane.b32.xlu0 %v4126, 256
    %v4129 = vpop.permute.xlu0 %4128
    %s4131 = sor.u32 256, 8
    %4132 = vbcast.lane.b32.xlu0 %v4126, %s4131
    %v4133 = vpop.permute.xlu0 %4132
    %v4134 = vlaneseq
    %v4135 = vshrl.u32 %v4134, 7
    %v4136 = vsub.s32 4, %v4135
    %v4137 = vrot.slane %v3989, %v4136
    %4139 = vbcast.lane.b32.xlu0 %v4137, 256
    %v4140 = vpop.permute.xlu0 %4139
    %s4142 = sor.u32 256, 8
    %4143 = vbcast.lane.b32.xlu0 %v4137, %s4142
    %v4144 = vpop.permute.xlu0 %4143
    %v4145 = vlaneseq
    %v4146 = vshrl.u32 %v4145, 7
    %v4147 = vsub.s32 5, %v4146
    %v4148 = vrot.slane %v3989, %v4147
    %4150 = vbcast.lane.b32.xlu0 %v4148, 256
    %v4151 = vpop.permute.xlu0 %4150
    %s4153 = sor.u32 256, 8
    %4154 = vbcast.lane.b32.xlu0 %v4148, %s4153
    %v4155 = vpop.permute.xlu0 %4154
    %v4156 = vlaneseq
    %v4157 = vshrl.u32 %v4156, 7
    %v4158 = vsub.s32 6, %v4157
    %v4159 = vrot.slane %v3989, %v4158
    %4161 = vbcast.lane.b32.xlu0 %v4159, 256
    %v4162 = vpop.permute.xlu0 %4161
    %s4164 = sor.u32 256, 8
    %4165 = vbcast.lane.b32.xlu0 %v4159, %s4164
    %v4166 = vpop.permute.xlu0 %4165
    %v4167 = vlaneseq
    %v4168 = vshrl.u32 %v4167, 7
    %v4169 = vsub.s32 7, %v4168
    %v4170 = vrot.slane %v3989, %v4169
    %4172 = vbcast.lane.b32.xlu0 %v4170, 256
    %v4173 = vpop.permute.xlu0 %4172
    %s4175 = sor.u32 256, 8
    %4176 = vbcast.lane.b32.xlu0 %v4170, %s4175
    %v4177 = vpop.permute.xlu0 %4176
    %v4178 = vlaneseq
    %v4179 = vshrl.u32 %v4178, 7
    %v4180 = vsub.s32 0, %v4179
    %v4181 = vrot.slane %v3991, %v4180
    %4183 = vbcast.lane.b32.xlu0 %v4181, 256
    %v4184 = vpop.permute.xlu0 %4183
    %s4186 = sor.u32 256, 8
    %4187 = vbcast.lane.b32.xlu0 %v4181, %s4186
    %v4188 = vpop.permute.xlu0 %4187
    %v4189 = vlaneseq
    %v4190 = vshrl.u32 %v4189, 7
    %v4191 = vsub.s32 1, %v4190
    %v4192 = vrot.slane %v3991, %v4191
    %4194 = vbcast.lane.b32.xlu0 %v4192, 256
    %v4195 = vpop.permute.xlu0 %4194
    %s4197 = sor.u32 256, 8
    %4198 = vbcast.lane.b32.xlu0 %v4192, %s4197
    %v4199 = vpop.permute.xlu0 %4198
    %v4200 = vlaneseq
    %v4201 = vshrl.u32 %v4200, 7
    %v4202 = vsub.s32 2, %v4201
    %v4203 = vrot.slane %v3991, %v4202
    %4205 = vbcast.lane.b32.xlu0 %v4203, 256
    %v4206 = vpop.permute.xlu0 %4205
    %s4208 = sor.u32 256, 8
    %4209 = vbcast.lane.b32.xlu0 %v4203, %s4208
    %v4210 = vpop.permute.xlu0 %4209
    %v4211 = vlaneseq
    %v4212 = vshrl.u32 %v4211, 7
    %v4213 = vsub.s32 3, %v4212
    %v4214 = vrot.slane %v3991, %v4213
    %4216 = vbcast.lane.b32.xlu0 %v4214, 256
    %v4217 = vpop.permute.xlu0 %4216
    %s4219 = sor.u32 256, 8
    %4220 = vbcast.lane.b32.xlu0 %v4214, %s4219
    %v4221 = vpop.permute.xlu0 %4220
    %v4222 = vlaneseq
    %v4223 = vshrl.u32 %v4222, 7
    %v4224 = vsub.s32 4, %v4223
    %v4225 = vrot.slane %v3991, %v4224
    %4227 = vbcast.lane.b32.xlu0 %v4225, 256
    %v4228 = vpop.permute.xlu0 %4227
    %s4230 = sor.u32 256, 8
    %4231 = vbcast.lane.b32.xlu0 %v4225, %s4230
    %v4232 = vpop.permute.xlu0 %4231
    %v4233 = vlaneseq
    %v4234 = vshrl.u32 %v4233, 7
    %v4235 = vsub.s32 5, %v4234
    %v4236 = vrot.slane %v3991, %v4235
    %4238 = vbcast.lane.b32.xlu0 %v4236, 256
    %v4239 = vpop.permute.xlu0 %4238
    %s4241 = sor.u32 256, 8
    %4242 = vbcast.lane.b32.xlu0 %v4236, %s4241
    %v4243 = vpop.permute.xlu0 %4242
    %v4244 = vlaneseq
    %v4245 = vshrl.u32 %v4244, 7
    %v4246 = vsub.s32 6, %v4245
    %v4247 = vrot.slane %v3991, %v4246
    %4249 = vbcast.lane.b32.xlu0 %v4247, 256
    %v4250 = vpop.permute.xlu0 %4249
    %s4252 = sor.u32 256, 8
    %4253 = vbcast.lane.b32.xlu0 %v4247, %s4252
    %v4254 = vpop.permute.xlu0 %4253
    %v4255 = vlaneseq
    %v4256 = vshrl.u32 %v4255, 7
    %v4257 = vsub.s32 7, %v4256
    %v4258 = vrot.slane %v3991, %v4257
    %4260 = vbcast.lane.b32.xlu0 %v4258, 256
    %v4261 = vpop.permute.xlu0 %4260
    %s4263 = sor.u32 256, 8
    %4264 = vbcast.lane.b32.xlu0 %v4258, %s4263
    %v4265 = vpop.permute.xlu0 %4264
    %v4266 = vlaneseq
    %v4267 = vshrl.u32 %v4266, 7
    %v4268 = vsub.s32 0, %v4267
    %v4269 = vrot.slane %v3993, %v4268
    %4271 = vbcast.lane.b32.xlu0 %v4269, 256
    %v4272 = vpop.permute.xlu0 %4271
    %s4274 = sor.u32 256, 8
    %4275 = vbcast.lane.b32.xlu0 %v4269, %s4274
    %v4276 = vpop.permute.xlu0 %4275
    %v4277 = vlaneseq
    %v4278 = vshrl.u32 %v4277, 7
    %v4279 = vsub.s32 1, %v4278
    %v4280 = vrot.slane %v3993, %v4279
    %4282 = vbcast.lane.b32.xlu0 %v4280, 256
    %v4283 = vpop.permute.xlu0 %4282
    %s4285 = sor.u32 256, 8
    %4286 = vbcast.lane.b32.xlu0 %v4280, %s4285
    %v4287 = vpop.permute.xlu0 %4286
    %v4288 = vlaneseq
    %v4289 = vshrl.u32 %v4288, 7
    %v4290 = vsub.s32 2, %v4289
    %v4291 = vrot.slane %v3993, %v4290
    %4293 = vbcast.lane.b32.xlu0 %v4291, 256
    %v4294 = vpop.permute.xlu0 %4293
    %s4296 = sor.u32 256, 8
    %4297 = vbcast.lane.b32.xlu0 %v4291, %s4296
    %v4298 = vpop.permute.xlu0 %4297
    %v4299 = vlaneseq
    %v4300 = vshrl.u32 %v4299, 7
    %v4301 = vsub.s32 3, %v4300
    %v4302 = vrot.slane %v3993, %v4301
    %4304 = vbcast.lane.b32.xlu0 %v4302, 256
    %v4305 = vpop.permute.xlu0 %4304
    %s4307 = sor.u32 256, 8
    %4308 = vbcast.lane.b32.xlu0 %v4302, %s4307
    %v4309 = vpop.permute.xlu0 %4308
    %v4310 = vlaneseq
    %v4311 = vshrl.u32 %v4310, 7
    %v4312 = vsub.s32 4, %v4311
    %v4313 = vrot.slane %v3993, %v4312
    %4315 = vbcast.lane.b32.xlu0 %v4313, 256
    %v4316 = vpop.permute.xlu0 %4315
    %s4318 = sor.u32 256, 8
    %4319 = vbcast.lane.b32.xlu0 %v4313, %s4318
    %v4320 = vpop.permute.xlu0 %4319
    %v4321 = vlaneseq
    %v4322 = vshrl.u32 %v4321, 7
    %v4323 = vsub.s32 5, %v4322
    %v4324 = vrot.slane %v3993, %v4323
    %4326 = vbcast.lane.b32.xlu0 %v4324, 256
    %v4327 = vpop.permute.xlu0 %4326
    %s4329 = sor.u32 256, 8
    %4330 = vbcast.lane.b32.xlu0 %v4324, %s4329
    %v4331 = vpop.permute.xlu0 %4330
    %v4332 = vlaneseq
    %v4333 = vshrl.u32 %v4332, 7
    %v4334 = vsub.s32 6, %v4333
    %v4335 = vrot.slane %v3993, %v4334
    %4337 = vbcast.lane.b32.xlu0 %v4335, 256
    %v4338 = vpop.permute.xlu0 %4337
    %s4340 = sor.u32 256, 8
    %4341 = vbcast.lane.b32.xlu0 %v4335, %s4340
    %v4342 = vpop.permute.xlu0 %4341
    %v4343 = vlaneseq
    %v4344 = vshrl.u32 %v4343, 7
    %v4345 = vsub.s32 7, %v4344
    %v4346 = vrot.slane %v3993, %v4345
    %4348 = vbcast.lane.b32.xlu0 %v4346, 256
    %v4349 = vpop.permute.xlu0 %4348
    %s4351 = sor.u32 256, 8
    %4352 = vbcast.lane.b32.xlu0 %v4346, %s4351
    %v4353 = vpop.permute.xlu0 %4352
    %v4354 = vlaneseq
    %v4355 = vshrl.u32 %v4354, 7
    %v4356 = vsub.s32 0, %v4355
    %v4357 = vrot.slane %v3995, %v4356
    %4359 = vbcast.lane.b32.xlu0 %v4357, 256
    %v4360 = vpop.permute.xlu0 %4359
    %s4362 = sor.u32 256, 8
    %4363 = vbcast.lane.b32.xlu0 %v4357, %s4362
    %v4364 = vpop.permute.xlu0 %4363
    %v4365 = vlaneseq
    %v4366 = vshrl.u32 %v4365, 7
    %v4367 = vsub.s32 1, %v4366
    %v4368 = vrot.slane %v3995, %v4367
    %4370 = vbcast.lane.b32.xlu0 %v4368, 256
    %v4371 = vpop.permute.xlu0 %4370
    %s4373 = sor.u32 256, 8
    %4374 = vbcast.lane.b32.xlu0 %v4368, %s4373
    %v4375 = vpop.permute.xlu0 %4374
    %v4376 = vlaneseq
    %v4377 = vshrl.u32 %v4376, 7
    %v4378 = vsub.s32 2, %v4377
    %v4379 = vrot.slane %v3995, %v4378
    %4381 = vbcast.lane.b32.xlu0 %v4379, 256
    %v4382 = vpop.permute.xlu0 %4381
    %s4384 = sor.u32 256, 8
    %4385 = vbcast.lane.b32.xlu0 %v4379, %s4384
    %v4386 = vpop.permute.xlu0 %4385
    %v4387 = vlaneseq
    %v4388 = vshrl.u32 %v4387, 7
    %v4389 = vsub.s32 3, %v4388
    %v4390 = vrot.slane %v3995, %v4389
    %4392 = vbcast.lane.b32.xlu0 %v4390, 256
    %v4393 = vpop.permute.xlu0 %4392
    %s4395 = sor.u32 256, 8
    %4396 = vbcast.lane.b32.xlu0 %v4390, %s4395
    %v4397 = vpop.permute.xlu0 %4396
    %v4398 = vlaneseq
    %v4399 = vshrl.u32 %v4398, 7
    %v4400 = vsub.s32 4, %v4399
    %v4401 = vrot.slane %v3995, %v4400
    %4403 = vbcast.lane.b32.xlu0 %v4401, 256
    %v4404 = vpop.permute.xlu0 %4403
    %s4406 = sor.u32 256, 8
    %4407 = vbcast.lane.b32.xlu0 %v4401, %s4406
    %v4408 = vpop.permute.xlu0 %4407
    %v4409 = vlaneseq
    %v4410 = vshrl.u32 %v4409, 7
    %v4411 = vsub.s32 5, %v4410
    %v4412 = vrot.slane %v3995, %v4411
    %4414 = vbcast.lane.b32.xlu0 %v4412, 256
    %v4415 = vpop.permute.xlu0 %4414
    %s4417 = sor.u32 256, 8
    %4418 = vbcast.lane.b32.xlu0 %v4412, %s4417
    %v4419 = vpop.permute.xlu0 %4418
    %v4420 = vlaneseq
    %v4421 = vshrl.u32 %v4420, 7
    %v4422 = vsub.s32 6, %v4421
    %v4423 = vrot.slane %v3995, %v4422
    %4425 = vbcast.lane.b32.xlu0 %v4423, 256
    %v4426 = vpop.permute.xlu0 %4425
    %s4428 = sor.u32 256, 8
    %4429 = vbcast.lane.b32.xlu0 %v4423, %s4428
    %v4430 = vpop.permute.xlu0 %4429
    %v4431 = vlaneseq
    %v4432 = vshrl.u32 %v4431, 7
    %v4433 = vsub.s32 7, %v4432
    %v4434 = vrot.slane %v3995, %v4433
    %4436 = vbcast.lane.b32.xlu0 %v4434, 256
    %v4437 = vpop.permute.xlu0 %4436
    %s4439 = sor.u32 256, 8
    %4440 = vbcast.lane.b32.xlu0 %v4434, %s4439
    %v4441 = vpop.permute.xlu0 %4440
    %v4442 = vlaneseq
    %v4443 = vshrl.u32 %v4442, 7
    %v4444 = vsub.s32 0, %v4443
    %v4445 = vrot.slane %v3997, %v4444
    %4447 = vbcast.lane.b32.xlu0 %v4445, 256
    %v4448 = vpop.permute.xlu0 %4447
    %s4450 = sor.u32 256, 8
    %4451 = vbcast.lane.b32.xlu0 %v4445, %s4450
    %v4452 = vpop.permute.xlu0 %4451
    %v4453 = vlaneseq
    %v4454 = vshrl.u32 %v4453, 7
    %v4455 = vsub.s32 1, %v4454
    %v4456 = vrot.slane %v3997, %v4455
    %4458 = vbcast.lane.b32.xlu0 %v4456, 256
    %v4459 = vpop.permute.xlu0 %4458
    %s4461 = sor.u32 256, 8
    %4462 = vbcast.lane.b32.xlu0 %v4456, %s4461
    %v4463 = vpop.permute.xlu0 %4462
    %v4464 = vlaneseq
    %v4465 = vshrl.u32 %v4464, 7
    %v4466 = vsub.s32 2, %v4465
    %v4467 = vrot.slane %v3997, %v4466
    %4469 = vbcast.lane.b32.xlu0 %v4467, 256
    %v4470 = vpop.permute.xlu0 %4469
    %s4472 = sor.u32 256, 8
    %4473 = vbcast.lane.b32.xlu0 %v4467, %s4472
    %v4474 = vpop.permute.xlu0 %4473
    %v4475 = vlaneseq
    %v4476 = vshrl.u32 %v4475, 7
    %v4477 = vsub.s32 3, %v4476
    %v4478 = vrot.slane %v3997, %v4477
    %4480 = vbcast.lane.b32.xlu0 %v4478, 256
    %v4481 = vpop.permute.xlu0 %4480
    %s4483 = sor.u32 256, 8
    %4484 = vbcast.lane.b32.xlu0 %v4478, %s4483
    %v4485 = vpop.permute.xlu0 %4484
    %v4486 = vlaneseq
    %v4487 = vshrl.u32 %v4486, 7
    %v4488 = vsub.s32 4, %v4487
    %v4489 = vrot.slane %v3997, %v4488
    %4491 = vbcast.lane.b32.xlu0 %v4489, 256
    %v4492 = vpop.permute.xlu0 %4491
    %s4494 = sor.u32 256, 8
    %4495 = vbcast.lane.b32.xlu0 %v4489, %s4494
    %v4496 = vpop.permute.xlu0 %4495
    %v4497 = vlaneseq
    %v4498 = vshrl.u32 %v4497, 7
    %v4499 = vsub.s32 5, %v4498
    %v4500 = vrot.slane %v3997, %v4499
    %4502 = vbcast.lane.b32.xlu0 %v4500, 256
    %v4503 = vpop.permute.xlu0 %4502
    %s4505 = sor.u32 256, 8
    %4506 = vbcast.lane.b32.xlu0 %v4500, %s4505
    %v4507 = vpop.permute.xlu0 %4506
    %v4508 = vlaneseq
    %v4509 = vshrl.u32 %v4508, 7
    %v4510 = vsub.s32 6, %v4509
    %v4511 = vrot.slane %v3997, %v4510
    %4513 = vbcast.lane.b32.xlu0 %v4511, 256
    %v4514 = vpop.permute.xlu0 %4513
    %s4516 = sor.u32 256, 8
    %4517 = vbcast.lane.b32.xlu0 %v4511, %s4516
    %v4518 = vpop.permute.xlu0 %4517
    %v4519 = vlaneseq
    %v4520 = vshrl.u32 %v4519, 7
    %v4521 = vsub.s32 7, %v4520
    %v4522 = vrot.slane %v3997, %v4521
    %4524 = vbcast.lane.b32.xlu0 %v4522, 256
    %v4525 = vpop.permute.xlu0 %4524
    %s4527 = sor.u32 256, 8
    %4528 = vbcast.lane.b32.xlu0 %v4522, %s4527
    %v4529 = vpop.permute.xlu0 %4528
    %v4530 = vlaneseq
    %v4531 = vshrl.u32 %v4530, 7
    %v4532 = vsub.s32 0, %v4531
    %v4533 = vrot.slane %v3999, %v4532
    %4535 = vbcast.lane.b32.xlu0 %v4533, 256
    %v4536 = vpop.permute.xlu0 %4535
    %s4538 = sor.u32 256, 8
    %4539 = vbcast.lane.b32.xlu0 %v4533, %s4538
    %v4540 = vpop.permute.xlu0 %4539
    %v4541 = vlaneseq
    %v4542 = vshrl.u32 %v4541, 7
    %v4543 = vsub.s32 1, %v4542
    %v4544 = vrot.slane %v3999, %v4543
    %4546 = vbcast.lane.b32.xlu0 %v4544, 256
    %v4547 = vpop.permute.xlu0 %4546
    %s4549 = sor.u32 256, 8
    %4550 = vbcast.lane.b32.xlu0 %v4544, %s4549
    %v4551 = vpop.permute.xlu0 %4550
    %v4552 = vlaneseq
    %v4553 = vshrl.u32 %v4552, 7
    %v4554 = vsub.s32 2, %v4553
    %v4555 = vrot.slane %v3999, %v4554
    %4557 = vbcast.lane.b32.xlu0 %v4555, 256
    %v4558 = vpop.permute.xlu0 %4557
    %s4560 = sor.u32 256, 8
    %4561 = vbcast.lane.b32.xlu0 %v4555, %s4560
    %v4562 = vpop.permute.xlu0 %4561
    %v4563 = vlaneseq
    %v4564 = vshrl.u32 %v4563, 7
    %v4565 = vsub.s32 3, %v4564
    %v4566 = vrot.slane %v3999, %v4565
    %4568 = vbcast.lane.b32.xlu0 %v4566, 256
    %v4569 = vpop.permute.xlu0 %4568
    %s4571 = sor.u32 256, 8
    %4572 = vbcast.lane.b32.xlu0 %v4566, %s4571
    %v4573 = vpop.permute.xlu0 %4572
    %v4574 = vlaneseq
    %v4575 = vshrl.u32 %v4574, 7
    %v4576 = vsub.s32 4, %v4575
    %v4577 = vrot.slane %v3999, %v4576
    %4579 = vbcast.lane.b32.xlu0 %v4577, 256
    %v4580 = vpop.permute.xlu0 %4579
    %s4582 = sor.u32 256, 8
    %4583 = vbcast.lane.b32.xlu0 %v4577, %s4582
    %v4584 = vpop.permute.xlu0 %4583
    %v4585 = vlaneseq
    %v4586 = vshrl.u32 %v4585, 7
    %v4587 = vsub.s32 5, %v4586
    %v4588 = vrot.slane %v3999, %v4587
    %4590 = vbcast.lane.b32.xlu0 %v4588, 256
    %v4591 = vpop.permute.xlu0 %4590
    %s4593 = sor.u32 256, 8
    %4594 = vbcast.lane.b32.xlu0 %v4588, %s4593
    %v4595 = vpop.permute.xlu0 %4594
    %v4596 = vlaneseq
    %v4597 = vshrl.u32 %v4596, 7
    %v4598 = vsub.s32 6, %v4597
    %v4599 = vrot.slane %v3999, %v4598
    %4601 = vbcast.lane.b32.xlu0 %v4599, 256
    %v4602 = vpop.permute.xlu0 %4601
    %s4604 = sor.u32 256, 8
    %4605 = vbcast.lane.b32.xlu0 %v4599, %s4604
    %v4606 = vpop.permute.xlu0 %4605
    %v4607 = vlaneseq
    %v4608 = vshrl.u32 %v4607, 7
    %v4609 = vsub.s32 7, %v4608
    %v4610 = vrot.slane %v3999, %v4609
    %4612 = vbcast.lane.b32.xlu0 %v4610, 256
    %v4613 = vpop.permute.xlu0 %4612
    %s4615 = sor.u32 256, 8
    %4616 = vbcast.lane.b32.xlu0 %v4610, %s4615
    %v4617 = vpop.permute.xlu0 %4616
    %v4618 = vlaneseq
    %v4619 = vshrl.u32 %v4618, 7
    %v4620 = vsub.s32 0, %v4619
    %v4621 = vrot.slane %v4001, %v4620
    %4623 = vbcast.lane.b32.xlu0 %v4621, 256
    %v4624 = vpop.permute.xlu0 %4623
    %s4626 = sor.u32 256, 8
    %4627 = vbcast.lane.b32.xlu0 %v4621, %s4626
    %v4628 = vpop.permute.xlu0 %4627
    %v4629 = vlaneseq
    %v4630 = vshrl.u32 %v4629, 7
    %v4631 = vsub.s32 1, %v4630
    %v4632 = vrot.slane %v4001, %v4631
    %4634 = vbcast.lane.b32.xlu0 %v4632, 256
    %v4635 = vpop.permute.xlu0 %4634
    %s4637 = sor.u32 256, 8
    %4638 = vbcast.lane.b32.xlu0 %v4632, %s4637
    %v4639 = vpop.permute.xlu0 %4638
    %v4640 = vlaneseq
    %v4641 = vshrl.u32 %v4640, 7
    %v4642 = vsub.s32 2, %v4641
    %v4643 = vrot.slane %v4001, %v4642
    %4645 = vbcast.lane.b32.xlu0 %v4643, 256
    %v4646 = vpop.permute.xlu0 %4645
    %s4648 = sor.u32 256, 8
    %4649 = vbcast.lane.b32.xlu0 %v4643, %s4648
    %v4650 = vpop.permute.xlu0 %4649
    %v4651 = vlaneseq
    %v4652 = vshrl.u32 %v4651, 7
    %v4653 = vsub.s32 3, %v4652
    %v4654 = vrot.slane %v4001, %v4653
    %4656 = vbcast.lane.b32.xlu0 %v4654, 256
    %v4657 = vpop.permute.xlu0 %4656
    %s4659 = sor.u32 256, 8
    %4660 = vbcast.lane.b32.xlu0 %v4654, %s4659
    %v4661 = vpop.permute.xlu0 %4660
    %v4662 = vlaneseq
    %v4663 = vshrl.u32 %v4662, 7
    %v4664 = vsub.s32 4, %v4663
    %v4665 = vrot.slane %v4001, %v4664
    %4667 = vbcast.lane.b32.xlu0 %v4665, 256
    %v4668 = vpop.permute.xlu0 %4667
    %s4670 = sor.u32 256, 8
    %4671 = vbcast.lane.b32.xlu0 %v4665, %s4670
    %v4672 = vpop.permute.xlu0 %4671
    %v4673 = vlaneseq
    %v4674 = vshrl.u32 %v4673, 7
    %v4675 = vsub.s32 5, %v4674
    %v4676 = vrot.slane %v4001, %v4675
    %4678 = vbcast.lane.b32.xlu0 %v4676, 256
    %v4679 = vpop.permute.xlu0 %4678
    %s4681 = sor.u32 256, 8
    %4682 = vbcast.lane.b32.xlu0 %v4676, %s4681
    %v4683 = vpop.permute.xlu0 %4682
    %v4684 = vlaneseq
    %v4685 = vshrl.u32 %v4684, 7
    %v4686 = vsub.s32 6, %v4685
    %v4687 = vrot.slane %v4001, %v4686
    %4689 = vbcast.lane.b32.xlu0 %v4687, 256
    %v4690 = vpop.permute.xlu0 %4689
    %s4692 = sor.u32 256, 8
    %4693 = vbcast.lane.b32.xlu0 %v4687, %s4692
    %v4694 = vpop.permute.xlu0 %4693
    %v4695 = vlaneseq
    %v4696 = vshrl.u32 %v4695, 7
    %v4697 = vsub.s32 7, %v4696
    %v4698 = vrot.slane %v4001, %v4697
    %4700 = vbcast.lane.b32.xlu0 %v4698, 256
    %v4701 = vpop.permute.xlu0 %4700
    %s4703 = sor.u32 256, 8
    %4704 = vbcast.lane.b32.xlu0 %v4698, %s4703
    %v4705 = vpop.permute.xlu0 %4704
    %v4706 = vmul.f32 %v940, %v4008
    %v4707 = vmul.f32 %v941, %v4012
    %v4708 = vmul.f32 %v942, %v4019
    %v4709 = vmul.f32 %v943, %v4023
    %v4710 = vmul.f32 %v944, %v4030
    %v4711 = vmul.f32 %v945, %v4034
    %v4712 = vmul.f32 %v946, %v4041
    %v4713 = vmul.f32 %v947, %v4045
    %v4714 = vmul.f32 %v948, %v4052
    %v4715 = vmul.f32 %v949, %v4056
    %v4716 = vmul.f32 %v950, %v4063
    %v4717 = vmul.f32 %v951, %v4067
    %v4718 = vmul.f32 %v952, %v4074
    %v4719 = vmul.f32 %v953, %v4078
    %v4720 = vmul.f32 %v954, %v4085
    %v4721 = vmul.f32 %v955, %v4089
    %v4722 = vmul.f32 %v956, %v4096
    %v4723 = vmul.f32 %v957, %v4100
    %v4724 = vmul.f32 %v958, %v4107
    %v4725 = vmul.f32 %v959, %v4111
    %v4726 = vmul.f32 %v960, %v4118
    %v4727 = vmul.f32 %v961, %v4122
    %v4728 = vmul.f32 %v962, %v4129
    %v4729 = vmul.f32 %v963, %v4133
    %v4730 = vmul.f32 %v964, %v4140
    %v4731 = vmul.f32 %v965, %v4144
    %v4732 = vmul.f32 %v966, %v4151
    %v4733 = vmul.f32 %v967, %v4155
    %v4734 = vmul.f32 %v968, %v4162
    %v4735 = vmul.f32 %v969, %v4166
    %v4736 = vmul.f32 %v970, %v4173
    %v4737 = vmul.f32 %v971, %v4177
    %v4738 = vmul.f32 %v972, %v4184
    %v4739 = vmul.f32 %v973, %v4188
    %v4740 = vmul.f32 %v974, %v4195
    %v4741 = vmul.f32 %v975, %v4199
    %v4742 = vmul.f32 %v976, %v4206
    %v4743 = vmul.f32 %v977, %v4210
    %v4744 = vmul.f32 %v978, %v4217
    %v4745 = vmul.f32 %v979, %v4221
    %v4746 = vmul.f32 %v980, %v4228
    %v4747 = vmul.f32 %v981, %v4232
    %v4748 = vmul.f32 %v982, %v4239
    %v4749 = vmul.f32 %v983, %v4243
    %v4750 = vmul.f32 %v984, %v4250
    %v4751 = vmul.f32 %v985, %v4254
    %v4752 = vmul.f32 %v986, %v4261
    %v4753 = vmul.f32 %v987, %v4265
    %v4754 = vmul.f32 %v988, %v4272
    %v4755 = vmul.f32 %v989, %v4276
    %v4756 = vmul.f32 %v990, %v4283
    %v4757 = vmul.f32 %v991, %v4287
    %v4758 = vmul.f32 %v992, %v4294
    %v4759 = vmul.f32 %v993, %v4298
    %v4760 = vmul.f32 %v994, %v4305
    %v4761 = vmul.f32 %v995, %v4309
    %v4762 = vmul.f32 %v996, %v4316
    %v4763 = vmul.f32 %v997, %v4320
    %v4764 = vmul.f32 %v998, %v4327
    %v4765 = vmul.f32 %v999, %v4331
    %v4766 = vmul.f32 %v1000, %v4338
    %v4767 = vmul.f32 %v1001, %v4342
    %v4768 = vmul.f32 %v1002, %v4349
    %v4769 = vmul.f32 %v1003, %v4353
    %v4770 = vmul.f32 %v1004, %v4360
    %v4771 = vmul.f32 %v1005, %v4364
    %v4772 = vmul.f32 %v1006, %v4371
    %v4773 = vmul.f32 %v1007, %v4375
    %v4774 = vmul.f32 %v1008, %v4382
    %v4775 = vmul.f32 %v1009, %v4386
    %v4776 = vmul.f32 %v1010, %v4393
    %v4777 = vmul.f32 %v1011, %v4397
    %v4778 = vmul.f32 %v1012, %v4404
    %v4779 = vmul.f32 %v1013, %v4408
    %v4780 = vmul.f32 %v1014, %v4415
    %v4781 = vmul.f32 %v1015, %v4419
    %v4782 = vmul.f32 %v1016, %v4426
    %v4783 = vmul.f32 %v1017, %v4430
    %v4784 = vmul.f32 %v1018, %v4437
    %v4785 = vmul.f32 %v1019, %v4441
    %v4786 = vmul.f32 %v1020, %v4448
    %v4787 = vmul.f32 %v1021, %v4452
    %v4788 = vmul.f32 %v1022, %v4459
    %v4789 = vmul.f32 %v1023, %v4463
    %v4790 = vmul.f32 %v1024, %v4470
    %v4791 = vmul.f32 %v1025, %v4474
    %v4792 = vmul.f32 %v1026, %v4481
    %v4793 = vmul.f32 %v1027, %v4485
    %v4794 = vmul.f32 %v1028, %v4492
    %v4795 = vmul.f32 %v1029, %v4496
    %v4796 = vmul.f32 %v1030, %v4503
    %v4797 = vmul.f32 %v1031, %v4507
    %v4798 = vmul.f32 %v1032, %v4514
    %v4799 = vmul.f32 %v1033, %v4518
    %v4800 = vmul.f32 %v1034, %v4525
    %v4801 = vmul.f32 %v1035, %v4529
    %v4802 = vmul.f32 %v1036, %v4536
    %v4803 = vmul.f32 %v1037, %v4540
    %v4804 = vmul.f32 %v1038, %v4547
    %v4805 = vmul.f32 %v1039, %v4551
    %v4806 = vmul.f32 %v1040, %v4558
    %v4807 = vmul.f32 %v1041, %v4562
    %v4808 = vmul.f32 %v1042, %v4569
    %v4809 = vmul.f32 %v1043, %v4573
    %v4810 = vmul.f32 %v1044, %v4580
    %v4811 = vmul.f32 %v1045, %v4584
    %v4812 = vmul.f32 %v1046, %v4591
    %v4813 = vmul.f32 %v1047, %v4595
    %v4814 = vmul.f32 %v1048, %v4602
    %v4815 = vmul.f32 %v1049, %v4606
    %v4816 = vmul.f32 %v1050, %v4613
    %v4817 = vmul.f32 %v1051, %v4617
    %v4818 = vmul.f32 %v1052, %v4624
    %v4819 = vmul.f32 %v1053, %v4628
    %v4820 = vmul.f32 %v1054, %v4635
    %v4821 = vmul.f32 %v1055, %v4639
    %v4822 = vmul.f32 %v1056, %v4646
    %v4823 = vmul.f32 %v1057, %v4650
    %v4824 = vmul.f32 %v1058, %v4657
    %v4825 = vmul.f32 %v1059, %v4661
    %v4826 = vmul.f32 %v1060, %v4668
    %v4827 = vmul.f32 %v1061, %v4672
    %v4828 = vmul.f32 %v1062, %v4679
    %v4829 = vmul.f32 %v1063, %v4683
    %v4830 = vmul.f32 %v1064, %v4690
    %v4831 = vmul.f32 %v1065, %v4694
    %v4832 = vmul.f32 %v1066, %v4701
    %v4833 = vmul.f32 %v1067, %v4705
    %4834 = vst.msk [vmem:[#allocation3] sm:$0xff] %vm146, %v4706
    %4835 = vst.msk [vmem:[#allocation3 + $0x8] sm:$0xff] %vm146, %v4707
    %4836 = vst.msk [vmem:[#allocation3 + $0x10] sm:$0xff] %vm146, %v4708
    %4837 = vst.msk [vmem:[#allocation3 + $0x18] sm:$0xff] %vm146, %v4709
    %4838 = vst.msk [vmem:[#allocation3 + $0x20] sm:$0xff] %vm146, %v4710
    %4839 = vst.msk [vmem:[#allocation3 + $0x28] sm:$0xff] %vm146, %v4711
    %4840 = vst.msk [vmem:[#allocation3 + $0x30] sm:$0xff] %vm146, %v4712
    %4841 = vst.msk [vmem:[#allocation3 + $0x38] sm:$0xff] %vm146, %v4713
    %4842 = vst.msk [vmem:[#allocation3 + $0x40] sm:$0xff] %vm146, %v4714
    %4843 = vst.msk [vmem:[#allocation3 + $0x48] sm:$0xff] %vm146, %v4715
    %4844 = vst.msk [vmem:[#allocation3 + $0x50] sm:$0xff] %vm146, %v4716
    %4845 = vst.msk [vmem:[#allocation3 + $0x58] sm:$0xff] %vm146, %v4717
    %4846 = vst.msk [vmem:[#allocation3 + $0x60] sm:$0xff] %vm146, %v4718
    %4847 = vst.msk [vmem:[#allocation3 + $0x68] sm:$0xff] %vm146, %v4719
    %4848 = vst.msk [vmem:[#allocation3 + $0x70] sm:$0xff] %vm146, %v4720
    %4849 = vst.msk [vmem:[#allocation3 + $0x78] sm:$0xff] %vm146, %v4721
    %4850 = vst.msk [vmem:[#allocation3 + $0x80] sm:$0xff] %vm146, %v4722
    %4851 = vst.msk [vmem:[#allocation3 + $0x88] sm:$0xff] %vm146, %v4723
    %4852 = vst.msk [vmem:[#allocation3 + $0x90] sm:$0xff] %vm146, %v4724
    %4853 = vst.msk [vmem:[#allocation3 + $0x98] sm:$0xff] %vm146, %v4725
    %4854 = vst.msk [vmem:[#allocation3 + $0xa0] sm:$0xff] %vm146, %v4726
    %4855 = vst.msk [vmem:[#allocation3 + $0xa8] sm:$0xff] %vm146, %v4727
    %4856 = vst.msk [vmem:[#allocation3 + $0xb0] sm:$0xff] %vm146, %v4728
    %4857 = vst.msk [vmem:[#allocation3 + $0xb8] sm:$0xff] %vm146, %v4729
    %4858 = vst.msk [vmem:[#allocation3 + $0xc0] sm:$0xff] %vm146, %v4730
    %4859 = vst.msk [vmem:[#allocation3 + $0xc8] sm:$0xff] %vm146, %v4731
    %4860 = vst.msk [vmem:[#allocation3 + $0xd0] sm:$0xff] %vm146, %v4732
    %4861 = vst.msk [vmem:[#allocation3 + $0xd8] sm:$0xff] %vm146, %v4733
    %4862 = vst.msk [vmem:[#allocation3 + $0xe0] sm:$0xff] %vm146, %v4734
    %4863 = vst.msk [vmem:[#allocation3 + $0xe8] sm:$0xff] %vm146, %v4735
    %4864 = vst.msk [vmem:[#allocation3 + $0xf0] sm:$0xff] %vm146, %v4736
    %4865 = vst.msk [vmem:[#allocation3 + $0xf8] sm:$0xff] %vm146, %v4737
    %4866 = vst.msk [vmem:[#allocation3 + $0x100] sm:$0xff] %vm146, %v4738
    %4867 = vst.msk [vmem:[#allocation3 + $0x108] sm:$0xff] %vm146, %v4739
    %4868 = vst.msk [vmem:[#allocation3 + $0x110] sm:$0xff] %vm146, %v4740
    %4869 = vst.msk [vmem:[#allocation3 + $0x118] sm:$0xff] %vm146, %v4741
    %4870 = vst.msk [vmem:[#allocation3 + $0x120] sm:$0xff] %vm146, %v4742
    %4871 = vst.msk [vmem:[#allocation3 + $0x128] sm:$0xff] %vm146, %v4743
    %4872 = vst.msk [vmem:[#allocation3 + $0x130] sm:$0xff] %vm146, %v4744
    %4873 = vst.msk [vmem:[#allocation3 + $0x138] sm:$0xff] %vm146, %v4745
    %4874 = vst.msk [vmem:[#allocation3 + $0x140] sm:$0xff] %vm146, %v4746
    %4875 = vst.msk [vmem:[#allocation3 + $0x148] sm:$0xff] %vm146, %v4747
    %4876 = vst.msk [vmem:[#allocation3 + $0x150] sm:$0xff] %vm146, %v4748
    %4877 = vst.msk [vmem:[#allocation3 + $0x158] sm:$0xff] %vm146, %v4749
    %4878 = vst.msk [vmem:[#allocation3 + $0x160] sm:$0xff] %vm146, %v4750
    %4879 = vst.msk [vmem:[#allocation3 + $0x168] sm:$0xff] %vm146, %v4751
    %4880 = vst.msk [vmem:[#allocation3 + $0x170] sm:$0xff] %vm146, %v4752
    %4881 = vst.msk [vmem:[#allocation3 + $0x178] sm:$0xff] %vm146, %v4753
    %4882 = vst.msk [vmem:[#allocation3 + $0x180] sm:$0xff] %vm146, %v4754
    %4883 = vst.msk [vmem:[#allocation3 + $0x188] sm:$0xff] %vm146, %v4755
    %4884 = vst.msk [vmem:[#allocation3 + $0x190] sm:$0xff] %vm146, %v4756
    %4885 = vst.msk [vmem:[#allocation3 + $0x198] sm:$0xff] %vm146, %v4757
    %4886 = vst.msk [vmem:[#allocation3 + $0x1a0] sm:$0xff] %vm146, %v4758
    %4887 = vst.msk [vmem:[#allocation3 + $0x1a8] sm:$0xff] %vm146, %v4759
    %4888 = vst.msk [vmem:[#allocation3 + $0x1b0] sm:$0xff] %vm146, %v4760
    %4889 = vst.msk [vmem:[#allocation3 + $0x1b8] sm:$0xff] %vm146, %v4761
    %4890 = vst.msk [vmem:[#allocation3 + $0x1c0] sm:$0xff] %vm146, %v4762
    %4891 = vst.msk [vmem:[#allocation3 + $0x1c8] sm:$0xff] %vm146, %v4763
    %4892 = vst.msk [vmem:[#allocation3 + $0x1d0] sm:$0xff] %vm146, %v4764
    %4893 = vst.msk [vmem:[#allocation3 + $0x1d8] sm:$0xff] %vm146, %v4765
    %4894 = vst.msk [vmem:[#allocation3 + $0x1e0] sm:$0xff] %vm146, %v4766
    %4895 = vst.msk [vmem:[#allocation3 + $0x1e8] sm:$0xff] %vm146, %v4767
    %4896 = vst.msk [vmem:[#allocation3 + $0x1f0] sm:$0xff] %vm146, %v4768
    %4897 = vst.msk [vmem:[#allocation3 + $0x1f8] sm:$0xff] %vm146, %v4769
    %4898 = vst.msk [vmem:[#allocation3 + $0x200] sm:$0xff] %vm146, %v4770
    %4899 = vst.msk [vmem:[#allocation3 + $0x208] sm:$0xff] %vm146, %v4771
    %4900 = vst.msk [vmem:[#allocation3 + $0x210] sm:$0xff] %vm146, %v4772
    %4901 = vst.msk [vmem:[#allocation3 + $0x218] sm:$0xff] %vm146, %v4773
    %4902 = vst.msk [vmem:[#allocation3 + $0x220] sm:$0xff] %vm146, %v4774
    %4903 = vst.msk [vmem:[#allocation3 + $0x228] sm:$0xff] %vm146, %v4775
    %4904 = vst.msk [vmem:[#allocation3 + $0x230] sm:$0xff] %vm146, %v4776
    %4905 = vst.msk [vmem:[#allocation3 + $0x238] sm:$0xff] %vm146, %v4777
    %4906 = vst.msk [vmem:[#allocation3 + $0x240] sm:$0xff] %vm146, %v4778
    %4907 = vst.msk [vmem:[#allocation3 + $0x248] sm:$0xff] %vm146, %v4779
    %4908 = vst.msk [vmem:[#allocation3 + $0x250] sm:$0xff] %vm146, %v4780
    %4909 = vst.msk [vmem:[#allocation3 + $0x258] sm:$0xff] %vm146, %v4781
    %4910 = vst.msk [vmem:[#allocation3 + $0x260] sm:$0xff] %vm146, %v4782
    %4911 = vst.msk [vmem:[#allocation3 + $0x268] sm:$0xff] %vm146, %v4783
    %4912 = vst.msk [vmem:[#allocation3 + $0x270] sm:$0xff] %vm146, %v4784
    %4913 = vst.msk [vmem:[#allocation3 + $0x278] sm:$0xff] %vm146, %v4785
    %4914 = vst.msk [vmem:[#allocation3 + $0x280] sm:$0xff] %vm146, %v4786
    %4915 = vst.msk [vmem:[#allocation3 + $0x288] sm:$0xff] %vm146, %v4787
    %4916 = vst.msk [vmem:[#allocation3 + $0x290] sm:$0xff] %vm146, %v4788
    %4917 = vst.msk [vmem:[#allocation3 + $0x298] sm:$0xff] %vm146, %v4789
    %4918 = vst.msk [vmem:[#allocation3 + $0x2a0] sm:$0xff] %vm146, %v4790
    %4919 = vst.msk [vmem:[#allocation3 + $0x2a8] sm:$0xff] %vm146, %v4791
    %4920 = vst.msk [vmem:[#allocation3 + $0x2b0] sm:$0xff] %vm146, %v4792
    %4921 = vst.msk [vmem:[#allocation3 + $0x2b8] sm:$0xff] %vm146, %v4793
    %4922 = vst.msk [vmem:[#allocation3 + $0x2c0] sm:$0xff] %vm146, %v4794
    %4923 = vst.msk [vmem:[#allocation3 + $0x2c8] sm:$0xff] %vm146, %v4795
    %4924 = vst.msk [vmem:[#allocation3 + $0x2d0] sm:$0xff] %vm146, %v4796
    %4925 = vst.msk [vmem:[#allocation3 + $0x2d8] sm:$0xff] %vm146, %v4797
    %4926 = vst.msk [vmem:[#allocation3 + $0x2e0] sm:$0xff] %vm146, %v4798
    %4927 = vst.msk [vmem:[#allocation3 + $0x2e8] sm:$0xff] %vm146, %v4799
    %4928 = vst.msk [vmem:[#allocation3 + $0x2f0] sm:$0xff] %vm146, %v4800
    %4929 = vst.msk [vmem:[#allocation3 + $0x2f8] sm:$0xff] %vm146, %v4801
    %4930 = vst.msk [vmem:[#allocation3 + $0x300] sm:$0xff] %vm146, %v4802
    %4931 = vst.msk [vmem:[#allocation3 + $0x308] sm:$0xff] %vm146, %v4803
    %4932 = vst.msk [vmem:[#allocation3 + $0x310] sm:$0xff] %vm146, %v4804
    %4933 = vst.msk [vmem:[#allocation3 + $0x318] sm:$0xff] %vm146, %v4805
    %4934 = vst.msk [vmem:[#allocation3 + $0x320] sm:$0xff] %vm146, %v4806
    %4935 = vst.msk [vmem:[#allocation3 + $0x328] sm:$0xff] %vm146, %v4807
    %4936 = vst.msk [vmem:[#allocation3 + $0x330] sm:$0xff] %vm146, %v4808
    %4937 = vst.msk [vmem:[#allocation3 + $0x338] sm:$0xff] %vm146, %v4809
    %4938 = vst.msk [vmem:[#allocation3 + $0x340] sm:$0xff] %vm146, %v4810
    %4939 = vst.msk [vmem:[#allocation3 + $0x348] sm:$0xff] %vm146, %v4811
    %4940 = vst.msk [vmem:[#allocation3 + $0x350] sm:$0xff] %vm146, %v4812
    %4941 = vst.msk [vmem:[#allocation3 + $0x358] sm:$0xff] %vm146, %v4813
    %4942 = vst.msk [vmem:[#allocation3 + $0x360] sm:$0xff] %vm146, %v4814
    %4943 = vst.msk [vmem:[#allocation3 + $0x368] sm:$0xff] %vm146, %v4815
    %4944 = vst.msk [vmem:[#allocation3 + $0x370] sm:$0xff] %vm146, %v4816
    %4945 = vst.msk [vmem:[#allocation3 + $0x378] sm:$0xff] %vm146, %v4817
    %4946 = vst.msk [vmem:[#allocation3 + $0x380] sm:$0xff] %vm146, %v4818
    %4947 = vst.msk [vmem:[#allocation3 + $0x388] sm:$0xff] %vm146, %v4819
    %4948 = vst.msk [vmem:[#allocation3 + $0x390] sm:$0xff] %vm146, %v4820
    %4949 = vst.msk [vmem:[#allocation3 + $0x398] sm:$0xff] %vm146, %v4821
    %4950 = vst.msk [vmem:[#allocation3 + $0x3a0] sm:$0xff] %vm146, %v4822
    %4951 = vst.msk [vmem:[#allocation3 + $0x3a8] sm:$0xff] %vm146, %v4823
    %4952 = vst.msk [vmem:[#allocation3 + $0x3b0] sm:$0xff] %vm146, %v4824
    %4953 = vst.msk [vmem:[#allocation3 + $0x3b8] sm:$0xff] %vm146, %v4825
    %4954 = vst.msk [vmem:[#allocation3 + $0x3c0] sm:$0xff] %vm146, %v4826
    %4955 = vst.msk [vmem:[#allocation3 + $0x3c8] sm:$0xff] %vm146, %v4827
    %4956 = vst.msk [vmem:[#allocation3 + $0x3d0] sm:$0xff] %vm146, %v4828
    %4957 = vst.msk [vmem:[#allocation3 + $0x3d8] sm:$0xff] %vm146, %v4829
    %4958 = vst.msk [vmem:[#allocation3 + $0x3e0] sm:$0xff] %vm146, %v4830
    %4959 = vst.msk [vmem:[#allocation3 + $0x3e8] sm:$0xff] %vm146, %v4831
    %4960 = vst.msk [vmem:[#allocation3 + $0x3f0] sm:$0xff] %vm146, %v4832
    %4961 = vst.msk [vmem:[#allocation3 + $0x3f8] sm:$0xff] %vm146, %v4833
    // Predicated region
    $region18: #{cbam_pallas.1} parent=1 // pred_check
      _
    $region19: #{cbam_pallas.1} parent=1 // pred_check_branch
      %4963 = sbr.rel (0) target = $region21
    $region20: #{cbam_pallas.1} parent=1 // pred_region
      %s4965 = ssub.s32 16384, 16384
      %4966 = vsyncadd [#allocation4], %s4965
      %s4967 = sshll.u32 [#allocation3], 4
      %s4968 = int_to_ptr.vmem [resolvable:$true] %s4967
      %4973 = dma.vmem_to_hbm [thread:$0]  %s4968, 16384, %s4, [#allocation4], 128, 128, 8
    $region21: #{cbam_pallas.1} parent=1 // pred_fallthru
      _
    // Predicated region
    $region22: #{cbam_pallas.1} parent=1 // pred_check
      _
    $region23: #{cbam_pallas.1} parent=1 // pred_check_branch
      %4975 = sbr.rel (0) target = $region25
    $region24: #{cbam_pallas.1} parent=1 // pred_region
      %4976 = dma.done [#allocation4], 16384
    $region25: #{cbam_pallas.1} parent=1 // pred_fallthru
      _
    %4977 = vsyncpa [#allocation4], 1

</llo_original>
